<compile_context>
chip_gen: v5e
topology: v5e:2x2
jax: 0.10.0
libtpu: 0.0.40
codegen_flags: <defaults>
</compile_context>

<pallas_src>
import functools
import math

import jax
import jax.numpy as jnp
from jax import lax
from jax.experimental import pallas as pl
from jax.experimental.pallas import tpu as pltpu


# ---------------------------------------------------------------------------
# Helpers
# ---------------------------------------------------------------------------

def _row_tile(n, cap=256):
    """Largest multiple-of-8 divisor of n that is <= cap (falls back to n itself)."""
    if n <= 8:
        return n
    for t in range(min(cap, n), 7, -1):
        if n % t == 0 and t % 8 == 0:
            return t
    return n


_VMEM_LIMIT = 32 * 1024 * 1024   # v7x has 64 MiB VMEM total; stay well under it.

_COMPILER_PARAMS_FFN = pltpu.CompilerParams(
    dimension_semantics=("parallel",), vmem_limit_bytes=_VMEM_LIMIT)
_COMPILER_PARAMS_MHA = pltpu.CompilerParams(
    dimension_semantics=("parallel", "arbitrary"), vmem_limit_bytes=_VMEM_LIMIT)


# ---------------------------------------------------------------------------
# Fused MHA (+ residual + LayerNorm) kernel
# ---------------------------------------------------------------------------

def _mha_ln_kernel(*refs, num_heads, d_k, d_v, scale, eps, mask_mode, tq):
    if mask_mode == "dense":
        (xq_ref, xkv_ref, mask_ref, wq_ref, bq_ref, wkv_ref, bkv_ref,
         wo_ref, bo_ref, g_ref, beta_ref, o_ref, kv_scr, ctx_scr) = refs
    else:
        (xq_ref, xkv_ref, wq_ref, bq_ref, wkv_ref, bkv_ref,
         wo_ref, bo_ref, g_ref, beta_ref, o_ref, kv_scr, ctx_scr) = refs
        mask_ref = None

    cdt = wq_ref.dtype                # matmul-operand dtype (f32 or bf16); stats stay f32
    hdk = num_heads * d_k
    lk = kv_scr.shape[0]

    xq = xq_ref[0]                    # (tq, D) f32 — query stream; also the residual input

    # --- K|V projection: computed once per batch (query-tile axis is "arbitrary", innermost) ---
    @pl.when(pl.program_id(1) == 0)
    def _():
        xkv = xkv_ref[0].astype(cdt)  # (Lk, D)
        kv = jnp.dot(xkv, wkv_ref[...], preferred_element_type=jnp.float32) + bkv_ref[...]
        kv_scr[...] = kv.astype(kv_scr.dtype)

    # --- Q projection with 1/sqrt(d_k) folded in ---
    q = jnp.dot(xq.astype(cdt), wq_ref[...], preferred_element_type=jnp.float32) + bq_ref[...]
    q = (q * scale).astype(cdt)       # (tq, H*dk)

    kv = kv_scr[...]
    k = kv[:, :hdk]                   # (Lk, H*dk)
    v = kv[:, hdk:]                   # (Lk, H*dv)

    # Mask is shared across heads -> build it once (or skip it entirely).
    if mask_mode == "dense":
        forbid = mask_ref[0] > 0.5                                             # (tq, Lk)
    elif mask_mode == "causal":
        rows = lax.broadcasted_iota(jnp.int32, (tq, lk), 0) + pl.program_id(1) * tq
        cols = lax.broadcasted_iota(jnp.int32, (tq, lk), 1)
        forbid = cols > rows
    else:                             # "none"
        forbid = None
    neg = jnp.float32(-10000.0)

    # Per-head attention; contexts land in contiguous lane slices of ctx_scr (tq, H*dv), then the
    # output projection runs ONCE with full contraction depth K = H*dv.
    # TODO(synk): lax.fori_loop over heads (bounded live ranges) once H gets large.
    for h in range(num_heads):
        qh = q[:, h * d_k:(h + 1) * d_k]                        # (tq, dk)
        kh = k[:, h * d_k:(h + 1) * d_k]                        # (Lk, dk)
        vh = v[:, h * d_v:(h + 1) * d_v]                        # (Lk, dv)
        s = lax.dot_general(qh, kh, (((1,), (1,)), ((), ())),
                            preferred_element_type=jnp.float32)  # (tq, Lk)
        if forbid is not None:
            s = jnp.where(forbid, neg, s)                       # masked_fill_(-10000.0)
        s = s - jnp.max(s, axis=-1, keepdims=True)              # stable softmax (f32)
        p = jnp.exp(s)
        p = p * pl.reciprocal(jnp.sum(p, axis=-1, keepdims=True), approx=True)
        ctx = jnp.dot(p.astype(cdt), vh, preferred_element_type=jnp.float32)   # (tq, dv)
        ctx_scr[:, h * d_v:(h + 1) * d_v] = ctx

    # Single full-depth output projection + residual + LayerNorm epilogue (all stats in f32).
    out = jnp.dot(ctx_scr[...].astype(cdt), wo_ref[...],
                  preferred_element_type=jnp.float32) + bo_ref[...]
    z = xq.astype(jnp.float32) + out
    mean = jnp.mean(z, axis=-1, keepdims=True)
    zc = z - mean
    var = jnp.mean(zc * zc, axis=-1, keepdims=True)
    o_ref[0] = zc * lax.rsqrt(var + eps) * g_ref[...] + beta_ref[...]


def fused_mha_ln(x_q, x_kv, mask, p, ln_g, ln_b, *, num_heads, mask_mode="dense", eps=1e-5):
    """LayerNorm(x_q + MultiHeadAttention(x_q, x_kv, x_kv, mask)) as one Pallas call."""
    B, Lq, D = x_q.shape
    Lk = x_kv.shape[1]
    hdk = p["wq"].shape[1]            # H * d_k  (static, from shapes)
    hdv = p["wo"].shape[0]            # H * d_v
    d_k = hdk // num_heads
    d_v = hdv // num_heads
    tq = _row_tile(Lq, cap=256)
    cdt = p["wq"].dtype

    kern = functools.partial(_mha_ln_kernel, num_heads=num_heads, d_k=d_k, d_v=d_v,
                             scale=1.0 / math.sqrt(d_k), eps=eps, mask_mode=mask_mode, tq=tq)

    in_specs = [
        pl.BlockSpec((1, tq, D), lambda b, i: (b, i, 0)),        # x_q (residual / query stream)
        pl.BlockSpec((1, Lk, D), lambda b, i: (b, 0, 0)),        # x_kv (copied once per batch)
    ]
    args = [x_q, x_kv]
    if mask_mode == "dense":
        in_specs.append(pl.BlockSpec((1, tq, Lk), lambda b, i: (b, i, 0)))   # explicit mask
        args.append(mask)
    in_specs += [
        pl.BlockSpec((D, hdk), lambda b, i: (0, 0)),             # W_Q   (VMEM-resident)
        pl.BlockSpec((1, hdk), lambda b, i: (0, 0)),             # b_Q
        pl.BlockSpec((D, hdk + hdv), lambda b, i: (0, 0)),       # W_K|W_V fused
        pl.BlockSpec((1, hdk + hdv), lambda b, i: (0, 0)),       # b_K|b_V fused
        pl.BlockSpec((hdv, D), lambda b, i: (0, 0)),             # W_out
        pl.BlockSpec((1, D), lambda b, i: (0, 0)),               # b_out
        pl.BlockSpec((1, D), lambda b, i: (0, 0)),               # LN gamma
        pl.BlockSpec((1, D), lambda b, i: (0, 0)),               # LN beta
    ]
    args += [p["wq"], p["bq"], p["wkv"], p["bkv"], p["wo"], p["bo"], ln_g, ln_b]

    return pl.pallas_call(
        kern,
        out_shape=jax.ShapeDtypeStruct((B, Lq, D), jnp.float32),
        grid=(B, Lq // tq),
        in_specs=in_specs,
        out_specs=pl.BlockSpec((1, tq, D), lambda b, i: (b, i, 0)),
        scratch_shapes=[
            pltpu.VMEM((Lk, hdk + hdv), cdt),     # hoisted K|V projection (reused per batch)
            pltpu.VMEM((tq, hdv), jnp.float32),   # per-head contexts -> single W_out matmul
        ],
        compiler_params=_COMPILER_PARAMS_MHA,
    )(*args)


# ---------------------------------------------------------------------------
# Fused position-wise FFN (+ residual + LayerNorm) kernel
# ---------------------------------------------------------------------------

def _ffn_ln_kernel(x_ref, w1_ref, b1_ref, w2_ref, b2_ref, g_ref, beta_ref, o_ref, *, eps):
    cdt = w1_ref.dtype
    x = x_ref[...]                                                        # (tm, D) f32
    h = jnp.dot(x.astype(cdt), w1_ref[...], preferred_element_type=jnp.float32) + b1_ref[...]
    h = jnp.maximum(h, 0.0)                                               # ReLU
    y = jnp.dot(h.astype(cdt), w2_ref[...], preferred_element_type=jnp.float32) + b2_ref[...]
    z = x.astype(jnp.float32) + y                                         # residual
    mean = jnp.mean(z, axis=-1, keepdims=True)
    zc = z - mean
    var = jnp.mean(zc * zc, axis=-1, keepdims=True)
    o_ref[...] = zc * lax.rsqrt(var + eps) * g_ref[...] + beta_ref[...]


def fused_ffn_ln(x, w1, b1, w2, b2, ln_g, ln_b, *, eps=1e-5):
    """LayerNorm(x + Conv1d_k1(ReLU(Conv1d_k1(x)))) as one Pallas call over (B*L) row tiles."""
    B, L, D = x.shape
    dff = w1.shape[1]
    M = B * L
    x2 = x.reshape(M, D)
    tm = _row_tile(M, cap=512)

    out = pl.pallas_call(
        functools.partial(_ffn_ln_kernel, eps=eps),
        out_shape=jax.ShapeDtypeStruct((M, D), jnp.float32),
        grid=(M // tm,),
        in_specs=[
            pl.BlockSpec((tm, D), lambda i: (i, 0)),                 # activations (tiled)
            pl.BlockSpec((D, dff), lambda i: (0, 0)),                # W1 (VMEM-resident)
            pl.BlockSpec((1, dff), lambda i: (0, 0)),                # b1
            pl.BlockSpec((dff, D), lambda i: (0, 0)),                # W2
            pl.BlockSpec((1, D), lambda i: (0, 0)),                  # b2
            pl.BlockSpec((1, D), lambda i: (0, 0)),                  # LN gamma
            pl.BlockSpec((1, D), lambda i: (0, 0)),                  # LN beta
        ],
        out_specs=pl.BlockSpec((tm, D), lambda i: (i, 0)),
        compiler_params=_COMPILER_PARAMS_FFN,
    )(x2, w1, b1, w2, b2, ln_g, ln_b)
    return out.reshape(B, L, D)


# ---------------------------------------------------------------------------
# DecoderLayer forward: exactly 3 Pallas calls
# ---------------------------------------------------------------------------

def decoder_layer(dec_in, enc_out, dec_mask, dec_enc_mask, params, *, num_heads,
                  self_mask_mode="dense", cross_mask_mode="dense"):
    n1 = fused_mha_ln(dec_in, dec_in, dec_mask, params["dec_attn"],
                      params["ln1_g"], params["ln1_b"],
                      num_heads=num_heads, mask_mode=self_mask_mode)
    n2 = fused_mha_ln(n1, enc_out, dec_enc_mask, params["enc_dec_attn"],
                      params["ln2_g"], params["ln2_b"],
                      num_heads=num_heads, mask_mode=cross_mask_mode)
    n3 = fused_ffn_ln(n2, params["w1"], params["b1"], params["w2"], params["b2"],
                      params["ln3_g"], params["ln3_b"])
    return n3


# ---------------------------------------------------------------------------
# Deterministic parameter init (shapes from DecoderLayer.__init__); no ints in the pytree
# ---------------------------------------------------------------------------

def init_params(key, d_model, num_heads, dff):
    hd = d_model // num_heads
    std_attn = math.sqrt(2.0 / (d_model + hd))

    def mha_params(k):
        ks = jax.random.split(k, 8)
        wq = std_attn * jax.random.normal(ks[0], (d_model, hd * num_heads), jnp.float32)
        bq = 0.01 * jax.random.normal(ks[1], (1, hd * num_heads), jnp.float32)
        wk = std_attn * jax.random.normal(ks[2], (d_model, hd * num_heads), jnp.float32)
        bk = 0.01 * jax.random.normal(ks[3], (1, hd * num_heads), jnp.float32)
        wv = std_attn * jax.random.normal(ks[4], (d_model, hd * num_heads), jnp.float32)
        bv = 0.01 * jax.random.normal(ks[5], (1, hd * num_heads), jnp.float32)
        wo = std_attn * jax.random.normal(ks[6], (d_model, d_model), jnp.float32)
        bo = 0.01 * jax.random.normal(ks[7], (1, d_model), jnp.float32)
        return {
            "wq": wq, "bq": bq,
            # K and V projections fused along the output dim -> one matmul in-kernel
            "wkv": jnp.concatenate([wk, wv], axis=1),
            "bkv": jnp.concatenate([bk, bv], axis=1),
            "wo": wo, "bo": bo,
        }

    ks = jax.random.split(key, 8)
    return {
        "dec_attn": mha_params(ks[0]),
        "enc_dec_attn": mha_params(ks[1]),
        # PoswiseFFN: Conv1d(d_model, dff, 1) and Conv1d(dff, d_model, 1) as per-position matmuls
        "w1": 0.1 * jax.random.normal(ks[2], (d_model, dff), jnp.float32),
        "b1": 0.01 * jax.random.normal(ks[3], (1, dff), jnp.float32),
        "w2": 0.1 * jax.random.normal(ks[4], (dff, d_model), jnp.float32),
        "b2": 0.01 * jax.random.normal(ks[5], (1, d_model), jnp.float32),
        # LayerNorm params (PyTorch default: gamma=1, beta=0)
        "ln1_g": jnp.ones((1, d_model), jnp.float32), "ln1_b": jnp.zeros((1, d_model), jnp.float32),
        "ln2_g": jnp.ones((1, d_model), jnp.float32), "ln2_b": jnp.zeros((1, d_model), jnp.float32),
        "ln3_g": jnp.ones((1, d_model), jnp.float32), "ln3_b": jnp.zeros((1, d_model), jnp.float32),
    }


def cast_matmul_weights(params, dtype):
    """Cast only the large matmul weights (MXU operands); biases / LN stay f32."""
    out = dict(params)
    for name in ("dec_attn", "enc_dec_attn"):
        p = dict(params[name])
        for k in ("wq", "wkv", "wo"):
            p[k] = p[k].astype(dtype)
        out[name] = p
    for k in ("w1", "w2"):
        out[k] = params[k].astype(dtype)
    return out


# ---------------------------------------------------------------------------
# Pure-JAX reference (for correctness check only)
# ---------------------------------------------------------------------------

def _ref_mha(xq, xk, xv, mask, p, num_heads):
    B, Lq, D = xq.shape
    Lk = xk.shape[1]
    hdk = p["wq"].shape[1]
    hdv = p["wo"].shape[0]
    dk, dv = hdk // num_heads, hdv // num_heads
    wk, wv = p["wkv"][:, :hdk], p["wkv"][:, hdk:]
    bk, bv = p["bkv"][:, :hdk], p["bkv"][:, hdk:]
    q = (xq.reshape(-1, D) @ p["wq"] + p["bq"]).reshape(B, Lq, num_heads, dk).transpose(0, 2, 1, 3)
    k = (xk.reshape(-1, D) @ wk + bk).reshape(B, Lk, num_heads, dk).transpose(0, 2, 1, 3)
    v = (xv.reshape(-1, D) @ wv + bv).reshape(B, Lk, num_heads, dv).transpose(0, 2, 1, 3)
    s = jnp.einsum("bhqd,bhkd->bhqk", q, k) / math.sqrt(dk)
    s = jnp.where(mask[:, None] > 0.5, -10000.0, s)
    a = jax.nn.softmax(s, axis=-1)
    o = jnp.einsum("bhqk,bhkd->bhqd", a, v).transpose(0, 2, 1, 3).reshape(B, Lq, num_heads * dv)
    return (o.reshape(-1, num_heads * dv) @ p["wo"] + p["bo"]).reshape(B, Lq, D)


def _ref_ln(z, g, b, eps=1e-5):
    m = jnp.mean(z, axis=-1, keepdims=True)
    v = jnp.mean((z - m) ** 2, axis=-1, keepdims=True)
    return (z - m) * lax.rsqrt(v + eps) * g + b


def _ref_decoder(dec_in, enc_out, dec_mask, dec_enc_mask, P, num_heads):
    a1 = _ref_mha(dec_in, dec_in, dec_in, dec_mask, P["dec_attn"], num_heads)
    n1 = _ref_ln(dec_in + a1, P["ln1_g"], P["ln1_b"])
    a2 = _ref_mha(n1, enc_out, enc_out, dec_enc_mask, P["enc_dec_attn"], num_heads)
    n2 = _ref_ln(n1 + a2, P["ln2_g"], P["ln2_b"])
    h = jnp.maximum(n2 @ P["w1"] + P["b1"], 0.0)
    ffn = h @ P["w2"] + P["b2"]
    return _ref_ln(n2 + ffn, P["ln3_g"], P["ln3_b"])


# ---------------------------------------------------------------------------

if __name__ == "__main__":
    B, L_dec, L_enc = 2, 8, 8
    d_model, num_heads, dff = 32, 4, 64

    key = jax.random.PRNGKey(0)
    k_par, k_dec, k_enc = jax.random.split(key, 3)

    params = init_params(k_par, d_model, num_heads, dff)
    dec_in = jax.random.normal(k_dec, (B, L_dec, d_model), jnp.float32)
    enc_out = jax.random.normal(k_enc, (B, L_enc, d_model), jnp.float32)

    # decoder self-attention: causal mask (1.0 where attention is forbidden)
    causal = (jnp.arange(L_dec)[None, :] > jnp.arange(L_dec)[:, None]).astype(jnp.float32)
    dec_mask = jnp.broadcast_to(causal, (B, L_dec, L_dec))
    # encoder-decoder attention: no masking
    dec_enc_mask = jnp.zeros((B, L_dec, L_enc), jnp.float32)

    ref = _ref_decoder(dec_in, enc_out, dec_mask, dec_enc_mask, params, num_heads)

    # 1) Optimized path: causal mask generated in-kernel, cross-attn mask select skipped.
    fwd = jax.jit(functools.partial(decoder_layer, num_heads=num_heads,
                                    self_mask_mode="causal", cross_mask_mode="none"))
    out = jax.block_until_ready(fwd(dec_in, enc_out, dec_mask, dec_enc_mask, params))
    assert out.shape == (B, L_dec, d_model)
    # tolerance 5e-3: softmax denominator uses the approximate EUP reciprocal
    # (pl.reciprocal(approx=False) recovers ~1e-5 agreement).
    assert jnp.allclose(out, ref, rtol=5e-3, atol=5e-3), float(jnp.max(jnp.abs(out - ref)))

    # 2) General path: explicit dense masks DMA'd to the kernel (original module semantics).
    fwd_dense = jax.jit(functools.partial(decoder_layer, num_heads=num_heads))
    out_d = jax.block_until_ready(fwd_dense(dec_in, enc_out, dec_mask, dec_enc_mask, params))
    assert jnp.allclose(out_d, ref, rtol=5e-3, atol=5e-3), float(jnp.max(jnp.abs(out_d - ref)))

    # 3) bf16 matmul weights (v6e/v7x MXU peak); softmax/LN stats stay f32 in-kernel.
    params_bf16 = cast_matmul_weights(params, jnp.bfloat16)
    out_b = jax.block_until_ready(fwd(dec_in, enc_out, dec_mask, dec_enc_mask, params_bf16))
    assert jnp.allclose(out_b, ref, rtol=1e-1, atol=1e-1), float(jnp.max(jnp.abs(out_b - ref)))

    print("KERNEL_OK")
</pallas_src>

<mosaic_0001>
module attributes {stable_mosaic.version = 11 : i64} {
  func.func @_ffn_ln_kernel(%arg0: i32, %arg1: memref<16x32xf32, #tpu.memory_space<vmem>>, %arg2: memref<32x64xf32, #tpu.memory_space<vmem>>, %arg3: memref<1x64xf32, #tpu.memory_space<vmem>>, %arg4: memref<64x32xf32, #tpu.memory_space<vmem>>, %arg5: memref<1x32xf32, #tpu.memory_space<vmem>>, %arg6: memref<1x32xf32, #tpu.memory_space<vmem>>, %arg7: memref<1x32xf32, #tpu.memory_space<vmem>>, %arg8: memref<16x32xf32, #tpu.memory_space<vmem>>) attributes {dimension_semantics = [#tpu.dimension_semantics<parallel>], iteration_bounds = array<i64: 1>, scalar_prefetch = 0 : i64, scratch_operands = 0 : i64, tpu.core_type = #tpu.core_type<tc>, window_params = [{transform_indices = @transform_0, window_bounds = array<i64: 16, 32>}, {pipeline_mode = #tpu.pipeline_mode<synchronous>, transform_indices = @transform_1, window_bounds = array<i64: 32, 64>}, {pipeline_mode = #tpu.pipeline_mode<synchronous>, transform_indices = @transform_2, window_bounds = array<i64: 1, 64>}, {pipeline_mode = #tpu.pipeline_mode<synchronous>, transform_indices = @transform_3, window_bounds = array<i64: 64, 32>}, {pipeline_mode = #tpu.pipeline_mode<synchronous>, transform_indices = @transform_4, window_bounds = array<i64: 1, 32>}, {pipeline_mode = #tpu.pipeline_mode<synchronous>, transform_indices = @transform_5, window_bounds = array<i64: 1, 32>}, {pipeline_mode = #tpu.pipeline_mode<synchronous>, transform_indices = @transform_6, window_bounds = array<i64: 1, 32>}, {transform_indices = @transform_7, window_bounds = array<i64: 16, 32>}]} {
    %c0 = arith.constant 0 : index
    %c0_0 = arith.constant 0 : index
    %0 = vector.load %arg1[%c0, %c0_0] : memref<16x32xf32, #tpu.memory_space<vmem>>, vector<16x32xf32>
    %c0_1 = arith.constant 0 : index
    %c0_2 = arith.constant 0 : index
    %1 = vector.load %arg2[%c0_1, %c0_2] : memref<32x64xf32, #tpu.memory_space<vmem>>, vector<32x64xf32>
    %cst = arith.constant dense<0.000000e+00> : vector<16x64xf32>
    %2 = tpu.matmul %0, %1, %cst {dimension_numbers = #tpu.dot_dimension_numbers<[1], [0], [0], [1], [0, 0, 1, 1], [], []>} : vector<16x32xf32>, vector<32x64xf32>, vector<16x64xf32> -> vector<16x64xf32>
    %c0_3 = arith.constant 0 : index
    %c0_4 = arith.constant 0 : index
    %3 = vector.load %arg3[%c0_3, %c0_4] : memref<1x64xf32, #tpu.memory_space<vmem>>, vector<1x64xf32>
    %4 = vector.broadcast %3 : vector<1x64xf32> to vector<16x64xf32>
    %5 = arith.addf %2, %4 : vector<16x64xf32>
    %cst_5 = arith.constant 0.000000e+00 : f32
    %6 = vector.broadcast %cst_5 : f32 to vector<16x64xf32>
    %7 = arith.maximumf %5, %6 : vector<16x64xf32>
    %c0_6 = arith.constant 0 : index
    %c0_7 = arith.constant 0 : index
    %8 = vector.load %arg4[%c0_6, %c0_7] : memref<64x32xf32, #tpu.memory_space<vmem>>, vector<64x32xf32>
    %cst_8 = arith.constant dense<0.000000e+00> : vector<16x32xf32>
    %9 = tpu.matmul %7, %8, %cst_8 {dimension_numbers = #tpu.dot_dimension_numbers<[1], [0], [0], [1], [0, 0, 1, 1], [], []>} : vector<16x64xf32>, vector<64x32xf32>, vector<16x32xf32> -> vector<16x32xf32>
    %c0_9 = arith.constant 0 : index
    %c0_10 = arith.constant 0 : index
    %10 = vector.load %arg5[%c0_9, %c0_10] : memref<1x32xf32, #tpu.memory_space<vmem>>, vector<1x32xf32>
    %11 = vector.broadcast %10 : vector<1x32xf32> to vector<16x32xf32>
    %12 = arith.addf %9, %11 : vector<16x32xf32>
    %13 = arith.addf %0, %12 : vector<16x32xf32>
    %cst_11 = arith.constant dense<0.000000e+00> : vector<16xf32>
    %14 = vector.multi_reduction <add>, %13, %cst_11 [1] : vector<16x32xf32> to vector<16xf32>
    %15 = vector.shape_cast %14 : vector<16xf32> to vector<16x1xf32>
    %cst_12 = arith.constant 3.200000e+01 : f32
    %16 = vector.broadcast %cst_12 : f32 to vector<16x1xf32>
    %17 = arith.divf %15, %16 : vector<16x1xf32>
    %18 = vector.broadcast %17 : vector<16x1xf32> to vector<16x32xf32>
    %19 = arith.subf %13, %18 : vector<16x32xf32>
    %20 = arith.mulf %19, %19 : vector<16x32xf32>
    %cst_13 = arith.constant dense<0.000000e+00> : vector<16xf32>
    %21 = vector.multi_reduction <add>, %20, %cst_13 [1] : vector<16x32xf32> to vector<16xf32>
    %22 = vector.shape_cast %21 : vector<16xf32> to vector<16x1xf32>
    %cst_14 = arith.constant 3.200000e+01 : f32
    %23 = vector.broadcast %cst_14 : f32 to vector<16x1xf32>
    %24 = arith.divf %22, %23 : vector<16x1xf32>
    %cst_15 = arith.constant 9.99999974E-6 : f32
    %25 = vector.broadcast %cst_15 : f32 to vector<16x1xf32>
    %26 = arith.addf %24, %25 : vector<16x1xf32>
    %27 = math.rsqrt %26 : vector<16x1xf32>
    %28 = vector.broadcast %27 : vector<16x1xf32> to vector<16x32xf32>
    %29 = arith.mulf %19, %28 : vector<16x32xf32>
    %c0_16 = arith.constant 0 : index
    %c0_17 = arith.constant 0 : index
    %30 = vector.load %arg6[%c0_16, %c0_17] : memref<1x32xf32, #tpu.memory_space<vmem>>, vector<1x32xf32>
    %31 = vector.broadcast %30 : vector<1x32xf32> to vector<16x32xf32>
    %32 = arith.mulf %29, %31 : vector<16x32xf32>
    %c0_18 = arith.constant 0 : index
    %c0_19 = arith.constant 0 : index
    %33 = vector.load %arg7[%c0_18, %c0_19] : memref<1x32xf32, #tpu.memory_space<vmem>>, vector<1x32xf32>
    %34 = vector.broadcast %33 : vector<1x32xf32> to vector<16x32xf32>
    %35 = arith.addf %32, %34 : vector<16x32xf32>
    %c0_20 = arith.constant 0 : index
    %c0_21 = arith.constant 0 : index
    %36 = vector.load %arg8[%c0_20, %c0_21] : memref<16x32xf32, #tpu.memory_space<vmem>>, vector<16x32xf32>
    tpu.vector_store %arg8[%c0_20, %c0_21], %35 {strides = array<i32>} : memref<16x32xf32, #tpu.memory_space<vmem>>, vector<16x32xf32>,
    return
  }
  func.func @transform_0(%arg0: i32) -> (i32, i32) {
    %c0_i32 = arith.constant 0 : i32
    %c0_i32_0 = arith.constant 0 : i32
    return %arg0, %c0_i32 : i32, i32
  }
  func.func @transform_1(%arg0: i32) -> (i32, i32) {
    %c0_i32 = arith.constant 0 : i32
    %c0_i32_0 = arith.constant 0 : i32
    %c0_i32_1 = arith.constant 0 : i32
    return %c0_i32, %c0_i32_0 : i32, i32
  }
  func.func @transform_2(%arg0: i32) -> (i32, i32) {
    %c0_i32 = arith.constant 0 : i32
    %c0_i32_0 = arith.constant 0 : i32
    %c0_i32_1 = arith.constant 0 : i32
    return %c0_i32, %c0_i32_0 : i32, i32
  }
  func.func @transform_3(%arg0: i32) -> (i32, i32) {
    %c0_i32 = arith.constant 0 : i32
    %c0_i32_0 = arith.constant 0 : i32
    %c0_i32_1 = arith.constant 0 : i32
    return %c0_i32, %c0_i32_0 : i32, i32
  }
  func.func @transform_4(%arg0: i32) -> (i32, i32) {
    %c0_i32 = arith.constant 0 : i32
    %c0_i32_0 = arith.constant 0 : i32
    %c0_i32_1 = arith.constant 0 : i32
    return %c0_i32, %c0_i32_0 : i32, i32
  }
  func.func @transform_5(%arg0: i32) -> (i32, i32) {
    %c0_i32 = arith.constant 0 : i32
    %c0_i32_0 = arith.constant 0 : i32
    %c0_i32_1 = arith.constant 0 : i32
    return %c0_i32, %c0_i32_0 : i32, i32
  }
  func.func @transform_6(%arg0: i32) -> (i32, i32) {
    %c0_i32 = arith.constant 0 : i32
    %c0_i32_0 = arith.constant 0 : i32
    %c0_i32_1 = arith.constant 0 : i32
    return %c0_i32, %c0_i32_0 : i32, i32
  }
  func.func @transform_7(%arg0: i32) -> (i32, i32) {
    %c0_i32 = arith.constant 0 : i32
    %c0_i32_0 = arith.constant 0 : i32
    return %arg0, %c0_i32 : i32, i32
  }
}

module attributes {stable_mosaic.version = 11 : i64} {
  func.func @_mha_ln_kernel(%arg0: i32, %arg1: i32, %arg2: memref<1x8x32xf32, #tpu.memory_space<vmem>>, %arg3: memref<1x8x32xf32, #tpu.memory_space<vmem>>, %arg4: memref<32x32xf32, #tpu.memory_space<vmem>>, %arg5: memref<1x32xf32, #tpu.memory_space<vmem>>, %arg6: memref<32x64xf32, #tpu.memory_space<vmem>>, %arg7: memref<1x64xf32, #tpu.memory_space<vmem>>, %arg8: memref<32x32xf32, #tpu.memory_space<vmem>>, %arg9: memref<1x32xf32, #tpu.memory_space<vmem>>, %arg10: memref<1x32xf32, #tpu.memory_space<vmem>>, %arg11: memref<1x32xf32, #tpu.memory_space<vmem>>, %arg12: memref<1x8x32xf32, #tpu.memory_space<vmem>>, %arg13: memref<8x64xf32, #tpu.memory_space<vmem>>, %arg14: memref<8x32xf32, #tpu.memory_space<vmem>>) attributes {dimension_semantics = [#tpu.dimension_semantics<parallel>, #tpu.dimension_semantics<arbitrary>], iteration_bounds = array<i64: 2, 1>, scalar_prefetch = 0 : i64, scratch_operands = 2 : i64, tpu.core_type = #tpu.core_type<tc>, window_params = [{transform_indices = @transform_0, window_bounds = array<i64: 1, 8, 32>}, {transform_indices = @transform_1, window_bounds = array<i64: 1, 8, 32>}, {pipeline_mode = #tpu.pipeline_mode<synchronous>, transform_indices = @transform_2, window_bounds = array<i64: 32, 32>}, {pipeline_mode = #tpu.pipeline_mode<synchronous>, transform_indices = @transform_3, window_bounds = array<i64: 1, 32>}, {pipeline_mode = #tpu.pipeline_mode<synchronous>, transform_indices = @transform_4, window_bounds = array<i64: 32, 64>}, {pipeline_mode = #tpu.pipeline_mode<synchronous>, transform_indices = @transform_5, window_bounds = array<i64: 1, 64>}, {pipeline_mode = #tpu.pipeline_mode<synchronous>, transform_indices = @transform_6, window_bounds = array<i64: 32, 32>}, {pipeline_mode = #tpu.pipeline_mode<synchronous>, transform_indices = @transform_7, window_bounds = array<i64: 1, 32>}, {pipeline_mode = #tpu.pipeline_mode<synchronous>, transform_indices = @transform_8, window_bounds = array<i64: 1, 32>}, {pipeline_mode = #tpu.pipeline_mode<synchronous>, transform_indices = @transform_9, window_bounds = array<i64: 1, 32>}, {transform_indices = @transform_10, window_bounds = array<i64: 1, 8, 32>}]} {
    %c0 = arith.constant 0 : index
    %c0_0 = arith.constant 0 : index
    %c0_1 = arith.constant 0 : index
    %0 = vector.load %arg2[%c0, %c0_0, %c0_1] : memref<1x8x32xf32, #tpu.memory_space<vmem>>, vector<1x8x32xf32>
    %1 = vector.shape_cast %0 : vector<1x8x32xf32> to vector<8x32xf32>
    %c0_i32 = arith.constant 0 : i32
    %2 = arith.cmpi eq, %arg1, %c0_i32 : i32
    %3 = arith.extui %2 : i1 to i32
    %c0_i32_2 = arith.constant 0 : i32
    %4 = arith.cmpi ne, %3, %c0_i32_2 : i32
    scf.if %4 {
      %c0_54 = arith.constant 0 : index
      %c0_55 = arith.constant 0 : index
      %c0_56 = arith.constant 0 : index
      %125 = vector.load %arg3[%c0_54, %c0_55, %c0_56] : memref<1x8x32xf32, #tpu.memory_space<vmem>>, vector<1x8x32xf32>
      %126 = vector.shape_cast %125 : vector<1x8x32xf32> to vector<8x32xf32>
      %c0_57 = arith.constant 0 : index
      %c0_58 = arith.constant 0 : index
      %127 = vector.load %arg6[%c0_57, %c0_58] : memref<32x64xf32, #tpu.memory_space<vmem>>, vector<32x64xf32>
      %cst_59 = arith.constant dense<0.000000e+00> : vector<8x64xf32>
      %128 = tpu.matmul %126, %127, %cst_59 {dimension_numbers = #tpu.dot_dimension_numbers<[1], [0], [0], [1], [0, 0, 1, 1], [], []>} : vector<8x32xf32>, vector<32x64xf32>, vector<8x64xf32> -> vector<8x64xf32>
      %c0_60 = arith.constant 0 : index
      %c0_61 = arith.constant 0 : index
      %129 = vector.load %arg7[%c0_60, %c0_61] : memref<1x64xf32, #tpu.memory_space<vmem>>, vector<1x64xf32>
      %130 = vector.broadcast %129 : vector<1x64xf32> to vector<8x64xf32>
      %131 = arith.addf %128, %130 : vector<8x64xf32>
      %c0_62 = arith.constant 0 : index
      %c0_63 = arith.constant 0 : index
      %132 = vector.load %arg13[%c0_62, %c0_63] : memref<8x64xf32, #tpu.memory_space<vmem>>, vector<8x64xf32>
      tpu.vector_store %arg13[%c0_62, %c0_63], %131 {strides = array<i32>} : memref<8x64xf32, #tpu.memory_space<vmem>>, vector<8x64xf32>,
    } else {
    }
    %c0_3 = arith.constant 0 : index
    %c0_4 = arith.constant 0 : index
    %5 = vector.load %arg4[%c0_3, %c0_4] : memref<32x32xf32, #tpu.memory_space<vmem>>, vector<32x32xf32>
    %cst = arith.constant dense<0.000000e+00> : vector<8x32xf32>
    %6 = tpu.matmul %1, %5, %cst {dimension_numbers = #tpu.dot_dimension_numbers<[1], [0], [0], [1], [0, 0, 1, 1], [], []>} : vector<8x32xf32>, vector<32x32xf32>, vector<8x32xf32> -> vector<8x32xf32>
    %c0_5 = arith.constant 0 : index
    %c0_6 = arith.constant 0 : index
    %7 = vector.load %arg5[%c0_5, %c0_6] : memref<1x32xf32, #tpu.memory_space<vmem>>, vector<1x32xf32>
    %8 = vector.broadcast %7 : vector<1x32xf32> to vector<8x32xf32>
    %9 = arith.addf %6, %8 : vector<8x32xf32>
    %cst_7 = arith.constant 0.353553385 : f32
    %10 = vector.broadcast %cst_7 : f32 to vector<8x32xf32>
    %11 = arith.mulf %9, %10 : vector<8x32xf32>
    %c0_8 = arith.constant 0 : index
    %c0_9 = arith.constant 0 : index
    %12 = vector.load %arg13[%c0_8, %c0_9] : memref<8x64xf32, #tpu.memory_space<vmem>>, vector<8x64xf32>
    %13 = vector.extract_strided_slice %12 {offsets = [0, 0], sizes = [8, 32], strides = [1, 1]} : vector<8x64xf32> to vector<8x32xf32>
    %14 = vector.extract_strided_slice %12 {offsets = [0, 32], sizes = [8, 32], strides = [1, 1]} : vector<8x64xf32> to vector<8x32xf32>
    %15 = tpu.iota {dimensions = array<i32: 0>} : vector<8x8xi32>
    %c8_i32 = arith.constant 8 : i32
    %16 = arith.muli %arg1, %c8_i32 : i32
    %17 = vector.broadcast %16 : i32 to vector<8x8xi32>
    %18 = arith.addi %15, %17 : vector<8x8xi32>
    %19 = tpu.iota {dimensions = array<i32: 1>} : vector<8x8xi32>
    %20 = arith.cmpi sgt, %19, %18 : vector<8x8xi32>
    %21 = vector.extract_strided_slice %11 {offsets = [0, 0], sizes = [8, 8], strides = [1, 1]} : vector<8x32xf32> to vector<8x8xf32>
    %22 = vector.extract_strided_slice %13 {offsets = [0, 0], sizes = [8, 8], strides = [1, 1]} : vector<8x32xf32> to vector<8x8xf32>
    %23 = vector.extract_strided_slice %14 {offsets = [0, 0], sizes = [8, 8], strides = [1, 1]} : vector<8x32xf32> to vector<8x8xf32>
    %cst_10 = arith.constant dense<0.000000e+00> : vector<8x8xf32>
    %24 = tpu.matmul %21, %22, %cst_10 {dimension_numbers = #tpu.dot_dimension_numbers<[1], [1], [0], [0], [0, 0, 1, 0], [], []>} : vector<8x8xf32>, vector<8x8xf32>, vector<8x8xf32> -> vector<8x8xf32>
    %cst_11 = arith.constant -1.000000e+04 : f32
    %25 = vector.broadcast %cst_11 : f32 to vector<8x8xf32>
    %26 = arith.select %20, %25, %24 : vector<8x8xi1>, vector<8x8xf32>
    %cst_12 = arith.constant dense<0xFF800000> : vector<8xf32>
    %27 = vector.multi_reduction <maximumf>, %26, %cst_12 [1] : vector<8x8xf32> to vector<8xf32>
    %28 = vector.shape_cast %27 : vector<8xf32> to vector<8x1xf32>
    %29 = vector.broadcast %28 : vector<8x1xf32> to vector<8x8xf32>
    %30 = arith.subf %26, %29 : vector<8x8xf32>
    %31 = math.exp %30 : vector<8x8xf32>
    %cst_13 = arith.constant dense<0.000000e+00> : vector<8xf32>
    %32 = vector.multi_reduction <add>, %31, %cst_13 [1] : vector<8x8xf32> to vector<8xf32>
    %33 = vector.shape_cast %32 : vector<8xf32> to vector<8x1xf32>
    %34 = tpu.reciprocal %33 {approx = true} : vector<8x1xf32> -> vector<8x1xf32>
    %35 = vector.broadcast %34 : vector<8x1xf32> to vector<8x8xf32>
    %36 = arith.mulf %31, %35 : vector<8x8xf32>
    %cst_14 = arith.constant dense<0.000000e+00> : vector<8x8xf32>
    %37 = tpu.matmul %36, %23, %cst_14 {dimension_numbers = #tpu.dot_dimension_numbers<[1], [0], [0], [1], [0, 0, 1, 1], [], []>} : vector<8x8xf32>, vector<8x8xf32>, vector<8x8xf32> -> vector<8x8xf32>
    %c0_15 = arith.constant 0 : index
    %c0_16 = arith.constant 0 : index
    %38 = vector.load %arg14[%c0_15, %c0_16] : memref<8x32xf32, #tpu.memory_space<vmem>>, vector<8x8xf32>
    tpu.vector_store %arg14[%c0_15, %c0_16], %37 {strides = array<i32>} : memref<8x32xf32, #tpu.memory_space<vmem>>, vector<8x8xf32>,
    %39 = vector.extract_strided_slice %11 {offsets = [0, 8], sizes = [8, 8], strides = [1, 1]} : vector<8x32xf32> to vector<8x8xf32>
    %40 = vector.extract_strided_slice %13 {offsets = [0, 8], sizes = [8, 8], strides = [1, 1]} : vector<8x32xf32> to vector<8x8xf32>
    %41 = vector.extract_strided_slice %14 {offsets = [0, 8], sizes = [8, 8], strides = [1, 1]} : vector<8x32xf32> to vector<8x8xf32>
    %cst_17 = arith.constant dense<0.000000e+00> : vector<8x8xf32>
    %42 = tpu.matmul %39, %40, %cst_17 {dimension_numbers = #tpu.dot_dimension_numbers<[1], [1], [0], [0], [0, 0, 1, 0], [], []>} : vector<8x8xf32>, vector<8x8xf32>, vector<8x8xf32> -> vector<8x8xf32>
    %cst_18 = arith.constant -1.000000e+04 : f32
    %43 = vector.broadcast %cst_18 : f32 to vector<8x8xf32>
    %44 = arith.select %20, %43, %42 : vector<8x8xi1>, vector<8x8xf32>
    %cst_19 = arith.constant dense<0xFF800000> : vector<8xf32>
    %45 = vector.multi_reduction <maximumf>, %44, %cst_19 [1] : vector<8x8xf32> to vector<8xf32>
    %46 = vector.shape_cast %45 : vector<8xf32> to vector<8x1xf32>
    %47 = vector.broadcast %46 : vector<8x1xf32> to vector<8x8xf32>
    %48 = arith.subf %44, %47 : vector<8x8xf32>
    %49 = math.exp %48 : vector<8x8xf32>
    %cst_20 = arith.constant dense<0.000000e+00> : vector<8xf32>
    %50 = vector.multi_reduction <add>, %49, %cst_20 [1] : vector<8x8xf32> to vector<8xf32>
    %51 = vector.shape_cast %50 : vector<8xf32> to vector<8x1xf32>
    %52 = tpu.reciprocal %51 {approx = true} : vector<8x1xf32> -> vector<8x1xf32>
    %53 = vector.broadcast %52 : vector<8x1xf32> to vector<8x8xf32>
    %54 = arith.mulf %49, %53 : vector<8x8xf32>
    %cst_21 = arith.constant dense<0.000000e+00> : vector<8x8xf32>
    %55 = tpu.matmul %54, %41, %cst_21 {dimension_numbers = #tpu.dot_dimension_numbers<[1], [0], [0], [1], [0, 0, 1, 1], [], []>} : vector<8x8xf32>, vector<8x8xf32>, vector<8x8xf32> -> vector<8x8xf32>
    %c0_22 = arith.constant 0 : index
    %c8 = arith.constant 8 : index
    %56 = vector.load %arg14[%c0_22, %c8] : memref<8x32xf32, #tpu.memory_space<vmem>>, vector<8x8xf32>
    tpu.vector_store %arg14[%c0_22, %c8], %55 {strides = array<i32>} : memref<8x32xf32, #tpu.memory_space<vmem>>, vector<8x8xf32>,
    %57 = vector.extract_strided_slice %11 {offsets = [0, 16], sizes = [8, 8], strides = [1, 1]} : vector<8x32xf32> to vector<8x8xf32>
    %58 = vector.extract_strided_slice %13 {offsets = [0, 16], sizes = [8, 8], strides = [1, 1]} : vector<8x32xf32> to vector<8x8xf32>
    %59 = vector.extract_strided_slice %14 {offsets = [0, 16], sizes = [8, 8], strides = [1, 1]} : vector<8x32xf32> to vector<8x8xf32>
    %cst_23 = arith.constant dense<0.000000e+00> : vector<8x8xf32>
    %60 = tpu.matmul %57, %58, %cst_23 {dimension_numbers = #tpu.dot_dimension_numbers<[1], [1], [0], [0], [0, 0, 1, 0], [], []>} : vector<8x8xf32>, vector<8x8xf32>, vector<8x8xf32> -> vector<8x8xf32>
    %cst_24 = arith.constant -1.000000e+04 : f32
    %61 = vector.broadcast %cst_24 : f32 to vector<8x8xf32>
    %62 = arith.select %20, %61, %60 : vector<8x8xi1>, vector<8x8xf32>
    %cst_25 = arith.constant dense<0xFF800000> : vector<8xf32>
    %63 = vector.multi_reduction <maximumf>, %62, %cst_25 [1] : vector<8x8xf32> to vector<8xf32>
    %64 = vector.shape_cast %63 : vector<8xf32> to vector<8x1xf32>
    %65 = vector.broadcast %64 : vector<8x1xf32> to vector<8x8xf32>
    %66 = arith.subf %62, %65 : vector<8x8xf32>
    %67 = math.exp %66 : vector<8x8xf32>
    %cst_26 = arith.constant dense<0.000000e+00> : vector<8xf32>
    %68 = vector.multi_reduction <add>, %67, %cst_26 [1] : vector<8x8xf32> to vector<8xf32>
    %69 = vector.shape_cast %68 : vector<8xf32> to vector<8x1xf32>
    %70 = tpu.reciprocal %69 {approx = true} : vector<8x1xf32> -> vector<8x1xf32>
    %71 = vector.broadcast %70 : vector<8x1xf32> to vector<8x8xf32>
    %72 = arith.mulf %67, %71 : vector<8x8xf32>
    %cst_27 = arith.constant dense<0.000000e+00> : vector<8x8xf32>
    %73 = tpu.matmul %72, %59, %cst_27 {dimension_numbers = #tpu.dot_dimension_numbers<[1], [0], [0], [1], [0, 0, 1, 1], [], []>} : vector<8x8xf32>, vector<8x8xf32>, vector<8x8xf32> -> vector<8x8xf32>
    %c0_28 = arith.constant 0 : index
    %c16 = arith.constant 16 : index
    %74 = vector.load %arg14[%c0_28, %c16] : memref<8x32xf32, #tpu.memory_space<vmem>>, vector<8x8xf32>
    tpu.vector_store %arg14[%c0_28, %c16], %73 {strides = array<i32>} : memref<8x32xf32, #tpu.memory_space<vmem>>, vector<8x8xf32>,
    %75 = vector.extract_strided_slice %11 {offsets = [0, 24], sizes = [8, 8], strides = [1, 1]} : vector<8x32xf32> to vector<8x8xf32>
    %76 = vector.extract_strided_slice %13 {offsets = [0, 24], sizes = [8, 8], strides = [1, 1]} : vector<8x32xf32> to vector<8x8xf32>
    %77 = vector.extract_strided_slice %14 {offsets = [0, 24], sizes = [8, 8], strides = [1, 1]} : vector<8x32xf32> to vector<8x8xf32>
    %cst_29 = arith.constant dense<0.000000e+00> : vector<8x8xf32>
    %78 = tpu.matmul %75, %76, %cst_29 {dimension_numbers = #tpu.dot_dimension_numbers<[1], [1], [0], [0], [0, 0, 1, 0], [], []>} : vector<8x8xf32>, vector<8x8xf32>, vector<8x8xf32> -> vector<8x8xf32>
    %cst_30 = arith.constant -1.000000e+04 : f32
    %79 = vector.broadcast %cst_30 : f32 to vector<8x8xf32>
    %80 = arith.select %20, %79, %78 : vector<8x8xi1>, vector<8x8xf32>
    %cst_31 = arith.constant dense<0xFF800000> : vector<8xf32>
    %81 = vector.multi_reduction <maximumf>, %80, %cst_31 [1] : vector<8x8xf32> to vector<8xf32>
    %82 = vector.shape_cast %81 : vector<8xf32> to vector<8x1xf32>
    %83 = vector.broadcast %82 : vector<8x1xf32> to vector<8x8xf32>
    %84 = arith.subf %80, %83 : vector<8x8xf32>
    %85 = math.exp %84 : vector<8x8xf32>
    %cst_32 = arith.constant dense<0.000000e+00> : vector<8xf32>
    %86 = vector.multi_reduction <add>, %85, %cst_32 [1] : vector<8x8xf32> to vector<8xf32>
    %87 = vector.shape_cast %86 : vector<8xf32> to vector<8x1xf32>
    %88 = tpu.reciprocal %87 {approx = true} : vector<8x1xf32> -> vector<8x1xf32>
    %89 = vector.broadcast %88 : vector<8x1xf32> to vector<8x8xf32>
    %90 = arith.mulf %85, %89 : vector<8x8xf32>
    %cst_33 = arith.constant dense<0.000000e+00> : vector<8x8xf32>
    %91 = tpu.matmul %90, %77, %cst_33 {dimension_numbers = #tpu.dot_dimension_numbers<[1], [0], [0], [1], [0, 0, 1, 1], [], []>} : vector<8x8xf32>, vector<8x8xf32>, vector<8x8xf32> -> vector<8x8xf32>
    %c0_34 = arith.constant 0 : index
    %c24 = arith.constant 24 : index
    %92 = vector.load %arg14[%c0_34, %c24] : memref<8x32xf32, #tpu.memory_space<vmem>>, vector<8x8xf32>
    tpu.vector_store %arg14[%c0_34, %c24], %91 {strides = array<i32>} : memref<8x32xf32, #tpu.memory_space<vmem>>, vector<8x8xf32>,
    %c0_35 = arith.constant 0 : index
    %c0_36 = arith.constant 0 : index
    %93 = vector.load %arg14[%c0_35, %c0_36] : memref<8x32xf32, #tpu.memory_space<vmem>>, vector<8x32xf32>
    %c0_37 = arith.constant 0 : index
    %c0_38 = arith.constant 0 : index
    %94 = vector.load %arg8[%c0_37, %c0_38] : memref<32x32xf32, #tpu.memory_space<vmem>>, vector<32x32xf32>
    %cst_39 = arith.constant dense<0.000000e+00> : vector<8x32xf32>
    %95 = tpu.matmul %93, %94, %cst_39 {dimension_numbers = #tpu.dot_dimension_numbers<[1], [0], [0], [1], [0, 0, 1, 1], [], []>} : vector<8x32xf32>, vector<32x32xf32>, vector<8x32xf32> -> vector<8x32xf32>
    %c0_40 = arith.constant 0 : index
    %c0_41 = arith.constant 0 : index
    %96 = vector.load %arg9[%c0_40, %c0_41] : memref<1x32xf32, #tpu.memory_space<vmem>>, vector<1x32xf32>
    %97 = vector.broadcast %96 : vector<1x32xf32> to vector<8x32xf32>
    %98 = arith.addf %95, %97 : vector<8x32xf32>
    %99 = arith.addf %1, %98 : vector<8x32xf32>
    %cst_42 = arith.constant dense<0.000000e+00> : vector<8xf32>
    %100 = vector.multi_reduction <add>, %99, %cst_42 [1] : vector<8x32xf32> to vector<8xf32>
    %101 = vector.shape_cast %100 : vector<8xf32> to vector<8x1xf32>
    %cst_43 = arith.constant 3.200000e+01 : f32
    %102 = vector.broadcast %cst_43 : f32 to vector<8x1xf32>
    %103 = arith.divf %101, %102 : vector<8x1xf32>
    %104 = vector.broadcast %103 : vector<8x1xf32> to vector<8x32xf32>
    %105 = arith.subf %99, %104 : vector<8x32xf32>
    %106 = arith.mulf %105, %105 : vector<8x32xf32>
    %cst_44 = arith.constant dense<0.000000e+00> : vector<8xf32>
    %107 = vector.multi_reduction <add>, %106, %cst_44 [1] : vector<8x32xf32> to vector<8xf32>
    %108 = vector.shape_cast %107 : vector<8xf32> to vector<8x1xf32>
    %cst_45 = arith.constant 3.200000e+01 : f32
    %109 = vector.broadcast %cst_45 : f32 to vector<8x1xf32>
    %110 = arith.divf %108, %109 : vector<8x1xf32>
    %cst_46 = arith.constant 9.99999974E-6 : f32
    %111 = vector.broadcast %cst_46 : f32 to vector<8x1xf32>
    %112 = arith.addf %110, %111 : vector<8x1xf32>
    %113 = math.rsqrt %112 : vector<8x1xf32>
    %114 = vector.broadcast %113 : vector<8x1xf32> to vector<8x32xf32>
    %115 = arith.mulf %105, %114 : vector<8x32xf32>
    %c0_47 = arith.constant 0 : index
    %c0_48 = arith.constant 0 : index
    %116 = vector.load %arg10[%c0_47, %c0_48] : memref<1x32xf32, #tpu.memory_space<vmem>>, vector<1x32xf32>
    %117 = vector.broadcast %116 : vector<1x32xf32> to vector<8x32xf32>
    %118 = arith.mulf %115, %117 : vector<8x32xf32>
    %c0_49 = arith.constant 0 : index
    %c0_50 = arith.constant 0 : index
    %119 = vector.load %arg11[%c0_49, %c0_50] : memref<1x32xf32, #tpu.memory_space<vmem>>, vector<1x32xf32>
    %120 = vector.broadcast %119 : vector<1x32xf32> to vector<8x32xf32>
    %121 = arith.addf %118, %120 : vector<8x32xf32>
    %c0_51 = arith.constant 0 : index
    %c0_52 = arith.constant 0 : index
    %c0_53 = arith.constant 0 : index
    %122 = vector.load %arg12[%c0_51, %c0_52, %c0_53] : memref<1x8x32xf32, #tpu.memory_space<vmem>>, vector<1x8x32xf32>
    %123 = vector.shape_cast %122 : vector<1x8x32xf32> to vector<8x32xf32>
    %124 = vector.shape_cast %121 : vector<8x32xf32> to vector<1x8x32xf32>
    tpu.vector_store %arg12[%c0_51, %c0_52, %c0_53], %124 {strides = array<i32>} : memref<1x8x32xf32, #tpu.memory_space<vmem>>, vector<1x8x32xf32>,
    return
  }
  func.func @transform_0(%arg0: i32, %arg1: i32) -> (i32, i32, i32) {
    %c0_i32 = arith.constant 0 : i32
    %c0_i32_0 = arith.constant 0 : i32
    return %arg0, %arg1, %c0_i32 : i32, i32, i32
  }
  func.func @transform_1(%arg0: i32, %arg1: i32) -> (i32, i32, i32) {
    %c0_i32 = arith.constant 0 : i32
    %c0_i32_0 = arith.constant 0 : i32
    %c0_i32_1 = arith.constant 0 : i32
    return %arg0, %c0_i32, %c0_i32_0 : i32, i32, i32
  }
  func.func @transform_2(%arg0: i32, %arg1: i32) -> (i32, i32) {
    %c0_i32 = arith.constant 0 : i32
    %c0_i32_0 = arith.constant 0 : i32
    %c0_i32_1 = arith.constant 0 : i32
    return %c0_i32, %c0_i32_0 : i32, i32
  }
  func.func @transform_3(%arg0: i32, %arg1: i32) -> (i32, i32) {
    %c0_i32 = arith.constant 0 : i32
    %c0_i32_0 = arith.constant 0 : i32
    %c0_i32_1 = arith.constant 0 : i32
    return %c0_i32, %c0_i32_0 : i32, i32
  }
  func.func @transform_4(%arg0: i32, %arg1: i32) -> (i32, i32) {
    %c0_i32 = arith.constant 0 : i32
    %c0_i32_0 = arith.constant 0 : i32
    %c0_i32_1 = arith.constant 0 : i32
    return %c0_i32, %c0_i32_0 : i32, i32
  }
  func.func @transform_5(%arg0: i32, %arg1: i32) -> (i32, i32) {
    %c0_i32 = arith.constant 0 : i32
    %c0_i32_0 = arith.constant 0 : i32
    %c0_i32_1 = arith.constant 0 : i32
    return %c0_i32, %c0_i32_0 : i32, i32
  }
  func.func @transform_6(%arg0: i32, %arg1: i32) -> (i32, i32) {
    %c0_i32 = arith.constant 0 : i32
    %c0_i32_0 = arith.constant 0 : i32
    %c0_i32_1 = arith.constant 0 : i32
    return %c0_i32, %c0_i32_0 : i32, i32
  }
  func.func @transform_7(%arg0: i32, %arg1: i32) -> (i32, i32) {
    %c0_i32 = arith.constant 0 : i32
    %c0_i32_0 = arith.constant 0 : i32
    %c0_i32_1 = arith.constant 0 : i32
    return %c0_i32, %c0_i32_0 : i32, i32
  }
  func.func @transform_8(%arg0: i32, %arg1: i32) -> (i32, i32) {
    %c0_i32 = arith.constant 0 : i32
    %c0_i32_0 = arith.constant 0 : i32
    %c0_i32_1 = arith.constant 0 : i32
    return %c0_i32, %c0_i32_0 : i32, i32
  }
  func.func @transform_9(%arg0: i32, %arg1: i32) -> (i32, i32) {
    %c0_i32 = arith.constant 0 : i32
    %c0_i32_0 = arith.constant 0 : i32
    %c0_i32_1 = arith.constant 0 : i32
    return %c0_i32, %c0_i32_0 : i32, i32
  }
  func.func @transform_10(%arg0: i32, %arg1: i32) -> (i32, i32, i32) {
    %c0_i32 = arith.constant 0 : i32
    %c0_i32_0 = arith.constant 0 : i32
    return %arg0, %arg1, %c0_i32 : i32, i32, i32
  }
}

module attributes {stable_mosaic.version = 11 : i64} {
  func.func @_mha_ln_kernel(%arg0: i32, %arg1: i32, %arg2: memref<1x8x32xf32, #tpu.memory_space<vmem>>, %arg3: memref<1x8x32xf32, #tpu.memory_space<vmem>>, %arg4: memref<32x32xf32, #tpu.memory_space<vmem>>, %arg5: memref<1x32xf32, #tpu.memory_space<vmem>>, %arg6: memref<32x64xf32, #tpu.memory_space<vmem>>, %arg7: memref<1x64xf32, #tpu.memory_space<vmem>>, %arg8: memref<32x32xf32, #tpu.memory_space<vmem>>, %arg9: memref<1x32xf32, #tpu.memory_space<vmem>>, %arg10: memref<1x32xf32, #tpu.memory_space<vmem>>, %arg11: memref<1x32xf32, #tpu.memory_space<vmem>>, %arg12: memref<1x8x32xf32, #tpu.memory_space<vmem>>, %arg13: memref<8x64xf32, #tpu.memory_space<vmem>>, %arg14: memref<8x32xf32, #tpu.memory_space<vmem>>) attributes {dimension_semantics = [#tpu.dimension_semantics<parallel>, #tpu.dimension_semantics<arbitrary>], iteration_bounds = array<i64: 2, 1>, scalar_prefetch = 0 : i64, scratch_operands = 2 : i64, tpu.core_type = #tpu.core_type<tc>, window_params = [{transform_indices = @transform_0, window_bounds = array<i64: 1, 8, 32>}, {transform_indices = @transform_1, window_bounds = array<i64: 1, 8, 32>}, {pipeline_mode = #tpu.pipeline_mode<synchronous>, transform_indices = @transform_2, window_bounds = array<i64: 32, 32>}, {pipeline_mode = #tpu.pipeline_mode<synchronous>, transform_indices = @transform_3, window_bounds = array<i64: 1, 32>}, {pipeline_mode = #tpu.pipeline_mode<synchronous>, transform_indices = @transform_4, window_bounds = array<i64: 32, 64>}, {pipeline_mode = #tpu.pipeline_mode<synchronous>, transform_indices = @transform_5, window_bounds = array<i64: 1, 64>}, {pipeline_mode = #tpu.pipeline_mode<synchronous>, transform_indices = @transform_6, window_bounds = array<i64: 32, 32>}, {pipeline_mode = #tpu.pipeline_mode<synchronous>, transform_indices = @transform_7, window_bounds = array<i64: 1, 32>}, {pipeline_mode = #tpu.pipeline_mode<synchronous>, transform_indices = @transform_8, window_bounds = array<i64: 1, 32>}, {pipeline_mode = #tpu.pipeline_mode<synchronous>, transform_indices = @transform_9, window_bounds = array<i64: 1, 32>}, {transform_indices = @transform_10, window_bounds = array<i64: 1, 8, 32>}]} {
    %c0 = arith.constant 0 : index
    %c0_0 = arith.constant 0 : index
    %c0_1 = arith.constant 0 : index
    %0 = vector.load %arg2[%c0, %c0_0, %c0_1] : memref<1x8x32xf32, #tpu.memory_space<vmem>>, vector<1x8x32xf32>
    %1 = vector.shape_cast %0 : vector<1x8x32xf32> to vector<8x32xf32>
    %c0_i32 = arith.constant 0 : i32
    %2 = arith.cmpi eq, %arg1, %c0_i32 : i32
    %3 = arith.extui %2 : i1 to i32
    %c0_i32_2 = arith.constant 0 : i32
    %4 = arith.cmpi ne, %3, %c0_i32_2 : i32
    scf.if %4 {
      %c0_50 = arith.constant 0 : index
      %c0_51 = arith.constant 0 : index
      %c0_52 = arith.constant 0 : index
      %111 = vector.load %arg3[%c0_50, %c0_51, %c0_52] : memref<1x8x32xf32, #tpu.memory_space<vmem>>, vector<1x8x32xf32>
      %112 = vector.shape_cast %111 : vector<1x8x32xf32> to vector<8x32xf32>
      %c0_53 = arith.constant 0 : index
      %c0_54 = arith.constant 0 : index
      %113 = vector.load %arg6[%c0_53, %c0_54] : memref<32x64xf32, #tpu.memory_space<vmem>>, vector<32x64xf32>
      %cst_55 = arith.constant dense<0.000000e+00> : vector<8x64xf32>
      %114 = tpu.matmul %112, %113, %cst_55 {dimension_numbers = #tpu.dot_dimension_numbers<[1], [0], [0], [1], [0, 0, 1, 1], [], []>} : vector<8x32xf32>, vector<32x64xf32>, vector<8x64xf32> -> vector<8x64xf32>
      %c0_56 = arith.constant 0 : index
      %c0_57 = arith.constant 0 : index
      %115 = vector.load %arg7[%c0_56, %c0_57] : memref<1x64xf32, #tpu.memory_space<vmem>>, vector<1x64xf32>
      %116 = vector.broadcast %115 : vector<1x64xf32> to vector<8x64xf32>
      %117 = arith.addf %114, %116 : vector<8x64xf32>
      %c0_58 = arith.constant 0 : index
      %c0_59 = arith.constant 0 : index
      %118 = vector.load %arg13[%c0_58, %c0_59] : memref<8x64xf32, #tpu.memory_space<vmem>>, vector<8x64xf32>
      tpu.vector_store %arg13[%c0_58, %c0_59], %117 {strides = array<i32>} : memref<8x64xf32, #tpu.memory_space<vmem>>, vector<8x64xf32>,
    } else {
    }
    %c0_3 = arith.constant 0 : index
    %c0_4 = arith.constant 0 : index
    %5 = vector.load %arg4[%c0_3, %c0_4] : memref<32x32xf32, #tpu.memory_space<vmem>>, vector<32x32xf32>
    %cst = arith.constant dense<0.000000e+00> : vector<8x32xf32>
    %6 = tpu.matmul %1, %5, %cst {dimension_numbers = #tpu.dot_dimension_numbers<[1], [0], [0], [1], [0, 0, 1, 1], [], []>} : vector<8x32xf32>, vector<32x32xf32>, vector<8x32xf32> -> vector<8x32xf32>
    %c0_5 = arith.constant 0 : index
    %c0_6 = arith.constant 0 : index
    %7 = vector.load %arg5[%c0_5, %c0_6] : memref<1x32xf32, #tpu.memory_space<vmem>>, vector<1x32xf32>
    %8 = vector.broadcast %7 : vector<1x32xf32> to vector<8x32xf32>
    %9 = arith.addf %6, %8 : vector<8x32xf32>
    %cst_7 = arith.constant 0.353553385 : f32
    %10 = vector.broadcast %cst_7 : f32 to vector<8x32xf32>
    %11 = arith.mulf %9, %10 : vector<8x32xf32>
    %c0_8 = arith.constant 0 : index
    %c0_9 = arith.constant 0 : index
    %12 = vector.load %arg13[%c0_8, %c0_9] : memref<8x64xf32, #tpu.memory_space<vmem>>, vector<8x64xf32>
    %13 = vector.extract_strided_slice %12 {offsets = [0, 0], sizes = [8, 32], strides = [1, 1]} : vector<8x64xf32> to vector<8x32xf32>
    %14 = vector.extract_strided_slice %12 {offsets = [0, 32], sizes = [8, 32], strides = [1, 1]} : vector<8x64xf32> to vector<8x32xf32>
    %15 = vector.extract_strided_slice %11 {offsets = [0, 0], sizes = [8, 8], strides = [1, 1]} : vector<8x32xf32> to vector<8x8xf32>
    %16 = vector.extract_strided_slice %13 {offsets = [0, 0], sizes = [8, 8], strides = [1, 1]} : vector<8x32xf32> to vector<8x8xf32>
    %17 = vector.extract_strided_slice %14 {offsets = [0, 0], sizes = [8, 8], strides = [1, 1]} : vector<8x32xf32> to vector<8x8xf32>
    %cst_10 = arith.constant dense<0.000000e+00> : vector<8x8xf32>
    %18 = tpu.matmul %15, %16, %cst_10 {dimension_numbers = #tpu.dot_dimension_numbers<[1], [1], [0], [0], [0, 0, 1, 0], [], []>} : vector<8x8xf32>, vector<8x8xf32>, vector<8x8xf32> -> vector<8x8xf32>
    %cst_11 = arith.constant dense<0xFF800000> : vector<8xf32>
    %19 = vector.multi_reduction <maximumf>, %18, %cst_11 [1] : vector<8x8xf32> to vector<8xf32>
    %20 = vector.shape_cast %19 : vector<8xf32> to vector<8x1xf32>
    %21 = vector.broadcast %20 : vector<8x1xf32> to vector<8x8xf32>
    %22 = arith.subf %18, %21 : vector<8x8xf32>
    %23 = math.exp %22 : vector<8x8xf32>
    %cst_12 = arith.constant dense<0.000000e+00> : vector<8xf32>
    %24 = vector.multi_reduction <add>, %23, %cst_12 [1] : vector<8x8xf32> to vector<8xf32>
    %25 = vector.shape_cast %24 : vector<8xf32> to vector<8x1xf32>
    %26 = tpu.reciprocal %25 {approx = true} : vector<8x1xf32> -> vector<8x1xf32>
    %27 = vector.broadcast %26 : vector<8x1xf32> to vector<8x8xf32>
    %28 = arith.mulf %23, %27 : vector<8x8xf32>
    %cst_13 = arith.constant dense<0.000000e+00> : vector<8x8xf32>
    %29 = tpu.matmul %28, %17, %cst_13 {dimension_numbers = #tpu.dot_dimension_numbers<[1], [0], [0], [1], [0, 0, 1, 1], [], []>} : vector<8x8xf32>, vector<8x8xf32>, vector<8x8xf32> -> vector<8x8xf32>
    %c0_14 = arith.constant 0 : index
    %c0_15 = arith.constant 0 : index
    %30 = vector.load %arg14[%c0_14, %c0_15] : memref<8x32xf32, #tpu.memory_space<vmem>>, vector<8x8xf32>
    tpu.vector_store %arg14[%c0_14, %c0_15], %29 {strides = array<i32>} : memref<8x32xf32, #tpu.memory_space<vmem>>, vector<8x8xf32>,
    %31 = vector.extract_strided_slice %11 {offsets = [0, 8], sizes = [8, 8], strides = [1, 1]} : vector<8x32xf32> to vector<8x8xf32>
    %32 = vector.extract_strided_slice %13 {offsets = [0, 8], sizes = [8, 8], strides = [1, 1]} : vector<8x32xf32> to vector<8x8xf32>
    %33 = vector.extract_strided_slice %14 {offsets = [0, 8], sizes = [8, 8], strides = [1, 1]} : vector<8x32xf32> to vector<8x8xf32>
    %cst_16 = arith.constant dense<0.000000e+00> : vector<8x8xf32>
    %34 = tpu.matmul %31, %32, %cst_16 {dimension_numbers = #tpu.dot_dimension_numbers<[1], [1], [0], [0], [0, 0, 1, 0], [], []>} : vector<8x8xf32>, vector<8x8xf32>, vector<8x8xf32> -> vector<8x8xf32>
    %cst_17 = arith.constant dense<0xFF800000> : vector<8xf32>
    %35 = vector.multi_reduction <maximumf>, %34, %cst_17 [1] : vector<8x8xf32> to vector<8xf32>
    %36 = vector.shape_cast %35 : vector<8xf32> to vector<8x1xf32>
    %37 = vector.broadcast %36 : vector<8x1xf32> to vector<8x8xf32>
    %38 = arith.subf %34, %37 : vector<8x8xf32>
    %39 = math.exp %38 : vector<8x8xf32>
    %cst_18 = arith.constant dense<0.000000e+00> : vector<8xf32>
    %40 = vector.multi_reduction <add>, %39, %cst_18 [1] : vector<8x8xf32> to vector<8xf32>
    %41 = vector.shape_cast %40 : vector<8xf32> to vector<8x1xf32>
    %42 = tpu.reciprocal %41 {approx = true} : vector<8x1xf32> -> vector<8x1xf32>
    %43 = vector.broadcast %42 : vector<8x1xf32> to vector<8x8xf32>
    %44 = arith.mulf %39, %43 : vector<8x8xf32>
    %cst_19 = arith.constant dense<0.000000e+00> : vector<8x8xf32>
    %45 = tpu.matmul %44, %33, %cst_19 {dimension_numbers = #tpu.dot_dimension_numbers<[1], [0], [0], [1], [0, 0, 1, 1], [], []>} : vector<8x8xf32>, vector<8x8xf32>, vector<8x8xf32> -> vector<8x8xf32>
    %c0_20 = arith.constant 0 : index
    %c8 = arith.constant 8 : index
    %46 = vector.load %arg14[%c0_20, %c8] : memref<8x32xf32, #tpu.memory_space<vmem>>, vector<8x8xf32>
    tpu.vector_store %arg14[%c0_20, %c8], %45 {strides = array<i32>} : memref<8x32xf32, #tpu.memory_space<vmem>>, vector<8x8xf32>,
    %47 = vector.extract_strided_slice %11 {offsets = [0, 16], sizes = [8, 8], strides = [1, 1]} : vector<8x32xf32> to vector<8x8xf32>
    %48 = vector.extract_strided_slice %13 {offsets = [0, 16], sizes = [8, 8], strides = [1, 1]} : vector<8x32xf32> to vector<8x8xf32>
    %49 = vector.extract_strided_slice %14 {offsets = [0, 16], sizes = [8, 8], strides = [1, 1]} : vector<8x32xf32> to vector<8x8xf32>
    %cst_21 = arith.constant dense<0.000000e+00> : vector<8x8xf32>
    %50 = tpu.matmul %47, %48, %cst_21 {dimension_numbers = #tpu.dot_dimension_numbers<[1], [1], [0], [0], [0, 0, 1, 0], [], []>} : vector<8x8xf32>, vector<8x8xf32>, vector<8x8xf32> -> vector<8x8xf32>
    %cst_22 = arith.constant dense<0xFF800000> : vector<8xf32>
    %51 = vector.multi_reduction <maximumf>, %50, %cst_22 [1] : vector<8x8xf32> to vector<8xf32>
    %52 = vector.shape_cast %51 : vector<8xf32> to vector<8x1xf32>
    %53 = vector.broadcast %52 : vector<8x1xf32> to vector<8x8xf32>
    %54 = arith.subf %50, %53 : vector<8x8xf32>
    %55 = math.exp %54 : vector<8x8xf32>
    %cst_23 = arith.constant dense<0.000000e+00> : vector<8xf32>
    %56 = vector.multi_reduction <add>, %55, %cst_23 [1] : vector<8x8xf32> to vector<8xf32>
    %57 = vector.shape_cast %56 : vector<8xf32> to vector<8x1xf32>
    %58 = tpu.reciprocal %57 {approx = true} : vector<8x1xf32> -> vector<8x1xf32>
    %59 = vector.broadcast %58 : vector<8x1xf32> to vector<8x8xf32>
    %60 = arith.mulf %55, %59 : vector<8x8xf32>
    %cst_24 = arith.constant dense<0.000000e+00> : vector<8x8xf32>
    %61 = tpu.matmul %60, %49, %cst_24 {dimension_numbers = #tpu.dot_dimension_numbers<[1], [0], [0], [1], [0, 0, 1, 1], [], []>} : vector<8x8xf32>, vector<8x8xf32>, vector<8x8xf32> -> vector<8x8xf32>
    %c0_25 = arith.constant 0 : index
    %c16 = arith.constant 16 : index
    %62 = vector.load %arg14[%c0_25, %c16] : memref<8x32xf32, #tpu.memory_space<vmem>>, vector<8x8xf32>
    tpu.vector_store %arg14[%c0_25, %c16], %61 {strides = array<i32>} : memref<8x32xf32, #tpu.memory_space<vmem>>, vector<8x8xf32>,
    %63 = vector.extract_strided_slice %11 {offsets = [0, 24], sizes = [8, 8], strides = [1, 1]} : vector<8x32xf32> to vector<8x8xf32>
    %64 = vector.extract_strided_slice %13 {offsets = [0, 24], sizes = [8, 8], strides = [1, 1]} : vector<8x32xf32> to vector<8x8xf32>
    %65 = vector.extract_strided_slice %14 {offsets = [0, 24], sizes = [8, 8], strides = [1, 1]} : vector<8x32xf32> to vector<8x8xf32>
    %cst_26 = arith.constant dense<0.000000e+00> : vector<8x8xf32>
    %66 = tpu.matmul %63, %64, %cst_26 {dimension_numbers = #tpu.dot_dimension_numbers<[1], [1], [0], [0], [0, 0, 1, 0], [], []>} : vector<8x8xf32>, vector<8x8xf32>, vector<8x8xf32> -> vector<8x8xf32>
    %cst_27 = arith.constant dense<0xFF800000> : vector<8xf32>
    %67 = vector.multi_reduction <maximumf>, %66, %cst_27 [1] : vector<8x8xf32> to vector<8xf32>
    %68 = vector.shape_cast %67 : vector<8xf32> to vector<8x1xf32>
    %69 = vector.broadcast %68 : vector<8x1xf32> to vector<8x8xf32>
    %70 = arith.subf %66, %69 : vector<8x8xf32>
    %71 = math.exp %70 : vector<8x8xf32>
    %cst_28 = arith.constant dense<0.000000e+00> : vector<8xf32>
    %72 = vector.multi_reduction <add>, %71, %cst_28 [1] : vector<8x8xf32> to vector<8xf32>
    %73 = vector.shape_cast %72 : vector<8xf32> to vector<8x1xf32>
    %74 = tpu.reciprocal %73 {approx = true} : vector<8x1xf32> -> vector<8x1xf32>
    %75 = vector.broadcast %74 : vector<8x1xf32> to vector<8x8xf32>
    %76 = arith.mulf %71, %75 : vector<8x8xf32>
    %cst_29 = arith.constant dense<0.000000e+00> : vector<8x8xf32>
    %77 = tpu.matmul %76, %65, %cst_29 {dimension_numbers = #tpu.dot_dimension_numbers<[1], [0], [0], [1], [0, 0, 1, 1], [], []>} : vector<8x8xf32>, vector<8x8xf32>, vector<8x8xf32> -> vector<8x8xf32>
    %c0_30 = arith.constant 0 : index
    %c24 = arith.constant 24 : index
    %78 = vector.load %arg14[%c0_30, %c24] : memref<8x32xf32, #tpu.memory_space<vmem>>, vector<8x8xf32>
    tpu.vector_store %arg14[%c0_30, %c24], %77 {strides = array<i32>} : memref<8x32xf32, #tpu.memory_space<vmem>>, vector<8x8xf32>,
    %c0_31 = arith.constant 0 : index
    %c0_32 = arith.constant 0 : index
    %79 = vector.load %arg14[%c0_31, %c0_32] : memref<8x32xf32, #tpu.memory_space<vmem>>, vector<8x32xf32>
    %c0_33 = arith.constant 0 : index
    %c0_34 = arith.constant 0 : index
    %80 = vector.load %arg8[%c0_33, %c0_34] : memref<32x32xf32, #tpu.memory_space<vmem>>, vector<32x32xf32>
    %cst_35 = arith.constant dense<0.000000e+00> : vector<8x32xf32>
    %81 = tpu.matmul %79, %80, %cst_35 {dimension_numbers = #tpu.dot_dimension_numbers<[1], [0], [0], [1], [0, 0, 1, 1], [], []>} : vector<8x32xf32>, vector<32x32xf32>, vector<8x32xf32> -> vector<8x32xf32>
    %c0_36 = arith.constant 0 : index
    %c0_37 = arith.constant 0 : index
    %82 = vector.load %arg9[%c0_36, %c0_37] : memref<1x32xf32, #tpu.memory_space<vmem>>, vector<1x32xf32>
    %83 = vector.broadcast %82 : vector<1x32xf32> to vector<8x32xf32>
    %84 = arith.addf %81, %83 : vector<8x32xf32>
    %85 = arith.addf %1, %84 : vector<8x32xf32>
    %cst_38 = arith.constant dense<0.000000e+00> : vector<8xf32>
    %86 = vector.multi_reduction <add>, %85, %cst_38 [1] : vector<8x32xf32> to vector<8xf32>
    %87 = vector.shape_cast %86 : vector<8xf32> to vector<8x1xf32>
    %cst_39 = arith.constant 3.200000e+01 : f32
    %88 = vector.broadcast %cst_39 : f32 to vector<8x1xf32>
    %89 = arith.divf %87, %88 : vector<8x1xf32>
    %90 = vector.broadcast %89 : vector<8x1xf32> to vector<8x32xf32>
    %91 = arith.subf %85, %90 : vector<8x32xf32>
    %92 = arith.mulf %91, %91 : vector<8x32xf32>
    %cst_40 = arith.constant dense<0.000000e+00> : vector<8xf32>
    %93 = vector.multi_reduction <add>, %92, %cst_40 [1] : vector<8x32xf32> to vector<8xf32>
    %94 = vector.shape_cast %93 : vector<8xf32> to vector<8x1xf32>
    %cst_41 = arith.constant 3.200000e+01 : f32
    %95 = vector.broadcast %cst_41 : f32 to vector<8x1xf32>
    %96 = arith.divf %94, %95 : vector<8x1xf32>
    %cst_42 = arith.constant 9.99999974E-6 : f32
    %97 = vector.broadcast %cst_42 : f32 to vector<8x1xf32>
    %98 = arith.addf %96, %97 : vector<8x1xf32>
    %99 = math.rsqrt %98 : vector<8x1xf32>
    %100 = vector.broadcast %99 : vector<8x1xf32> to vector<8x32xf32>
    %101 = arith.mulf %91, %100 : vector<8x32xf32>
    %c0_43 = arith.constant 0 : index
    %c0_44 = arith.constant 0 : index
    %102 = vector.load %arg10[%c0_43, %c0_44] : memref<1x32xf32, #tpu.memory_space<vmem>>, vector<1x32xf32>
    %103 = vector.broadcast %102 : vector<1x32xf32> to vector<8x32xf32>
    %104 = arith.mulf %101, %103 : vector<8x32xf32>
    %c0_45 = arith.constant 0 : index
    %c0_46 = arith.constant 0 : index
    %105 = vector.load %arg11[%c0_45, %c0_46] : memref<1x32xf32, #tpu.memory_space<vmem>>, vector<1x32xf32>
    %106 = vector.broadcast %105 : vector<1x32xf32> to vector<8x32xf32>
    %107 = arith.addf %104, %106 : vector<8x32xf32>
    %c0_47 = arith.constant 0 : index
    %c0_48 = arith.constant 0 : index
    %c0_49 = arith.constant 0 : index
    %108 = vector.load %arg12[%c0_47, %c0_48, %c0_49] : memref<1x8x32xf32, #tpu.memory_space<vmem>>, vector<1x8x32xf32>
    %109 = vector.shape_cast %108 : vector<1x8x32xf32> to vector<8x32xf32>
    %110 = vector.shape_cast %107 : vector<8x32xf32> to vector<1x8x32xf32>
    tpu.vector_store %arg12[%c0_47, %c0_48, %c0_49], %110 {strides = array<i32>} : memref<1x8x32xf32, #tpu.memory_space<vmem>>, vector<1x8x32xf32>,
    return
  }
  func.func @transform_0(%arg0: i32, %arg1: i32) -> (i32, i32, i32) {
    %c0_i32 = arith.constant 0 : i32
    %c0_i32_0 = arith.constant 0 : i32
    return %arg0, %arg1, %c0_i32 : i32, i32, i32
  }
  func.func @transform_1(%arg0: i32, %arg1: i32) -> (i32, i32, i32) {
    %c0_i32 = arith.constant 0 : i32
    %c0_i32_0 = arith.constant 0 : i32
    %c0_i32_1 = arith.constant 0 : i32
    return %arg0, %c0_i32, %c0_i32_0 : i32, i32, i32
  }
  func.func @transform_2(%arg0: i32, %arg1: i32) -> (i32, i32) {
    %c0_i32 = arith.constant 0 : i32
    %c0_i32_0 = arith.constant 0 : i32
    %c0_i32_1 = arith.constant 0 : i32
    return %c0_i32, %c0_i32_0 : i32, i32
  }
  func.func @transform_3(%arg0: i32, %arg1: i32) -> (i32, i32) {
    %c0_i32 = arith.constant 0 : i32
    %c0_i32_0 = arith.constant 0 : i32
    %c0_i32_1 = arith.constant 0 : i32
    return %c0_i32, %c0_i32_0 : i32, i32
  }
  func.func @transform_4(%arg0: i32, %arg1: i32) -> (i32, i32) {
    %c0_i32 = arith.constant 0 : i32
    %c0_i32_0 = arith.constant 0 : i32
    %c0_i32_1 = arith.constant 0 : i32
    return %c0_i32, %c0_i32_0 : i32, i32
  }
  func.func @transform_5(%arg0: i32, %arg1: i32) -> (i32, i32) {
    %c0_i32 = arith.constant 0 : i32
    %c0_i32_0 = arith.constant 0 : i32
    %c0_i32_1 = arith.constant 0 : i32
    return %c0_i32, %c0_i32_0 : i32, i32
  }
  func.func @transform_6(%arg0: i32, %arg1: i32) -> (i32, i32) {
    %c0_i32 = arith.constant 0 : i32
    %c0_i32_0 = arith.constant 0 : i32
    %c0_i32_1 = arith.constant 0 : i32
    return %c0_i32, %c0_i32_0 : i32, i32
  }
  func.func @transform_7(%arg0: i32, %arg1: i32) -> (i32, i32) {
    %c0_i32 = arith.constant 0 : i32
    %c0_i32_0 = arith.constant 0 : i32
    %c0_i32_1 = arith.constant 0 : i32
    return %c0_i32, %c0_i32_0 : i32, i32
  }
  func.func @transform_8(%arg0: i32, %arg1: i32) -> (i32, i32) {
    %c0_i32 = arith.constant 0 : i32
    %c0_i32_0 = arith.constant 0 : i32
    %c0_i32_1 = arith.constant 0 : i32
    return %c0_i32, %c0_i32_0 : i32, i32
  }
  func.func @transform_9(%arg0: i32, %arg1: i32) -> (i32, i32) {
    %c0_i32 = arith.constant 0 : i32
    %c0_i32_0 = arith.constant 0 : i32
    %c0_i32_1 = arith.constant 0 : i32
    return %c0_i32, %c0_i32_0 : i32, i32
  }
  func.func @transform_10(%arg0: i32, %arg1: i32) -> (i32, i32, i32) {
    %c0_i32 = arith.constant 0 : i32
    %c0_i32_0 = arith.constant 0 : i32
    return %arg0, %arg1, %c0_i32 : i32, i32, i32
  }
}

</mosaic_0001>

<llo_original>
// kernel: decoder_layer.5
$region0: #{decoder_layer.5}
  #allocation0 [shape = 'u32[]', space=smem, size = 0x4, offset = 0x4, fixed_abs, tag = 'smem constant byte address 0x4 - core index']
  #allocation1 [shape = 'u32[72,128]{1,0:T(1,128)}', space=vmem, size = 0x9000, scoped, tag = 'internal scratch']
  %s0 = inlined_call_operand.vmem [shape: f32[16,32], index: 0, kind: input, shape index: {}]
  %s1 = inlined_call_operand.vmem [shape: f32[32,64], index: 1, kind: input, shape index: {}]
  %s2 = inlined_call_operand.vmem [shape: f32[1,64], index: 2, kind: input, shape index: {}]
  %s3 = inlined_call_operand.vmem [shape: f32[64,32], index: 3, kind: input, shape index: {}]
  %s4 = inlined_call_operand.vmem [shape: f32[1,32], index: 4, kind: input, shape index: {}]
  %s5 = inlined_call_operand.vmem [shape: f32[1,32], index: 5, kind: input, shape index: {}]
  %s6 = inlined_call_operand.vmem [shape: f32[1,32], index: 6, kind: input, shape index: {}]
  %s7 = inlined_call_operand.hbm [shape: f32[16,32], index: 7, kind: output, shape index: {}]
  %s8 = sld [smem:[#allocation0]]
  $region38: #{decoder_layer.5} parent=0
    _
  %s10 = ssub.s32 1, %s8
  %s11 = scalar_select 0, %s10, %s8
  $region1: #{decoder_layer.5} parent=0
    #allocation2 [shape = 'u8[8192]{0}', space=vmem, size = 0x2000, scoped, tag = 'output window, operand 0, single buffered']
    #allocation3 [shape = 's32[1]{0}', space=sflag, size = 0x4, scoped, tag = 'scoped memory for decoder_layer.5']
    %12 = vsyncpa [#allocation3], 0
    // Predicated region
    $region2: #{decoder_layer.5} parent=1 // pred_check
      _
    $region3: #{decoder_layer.5} parent=1 // pred_check_branch
      %14 = sbr.rel (0) target = $region5
    $region4: #{decoder_layer.5} parent=1 // pred_region
      _
    $region5: #{decoder_layer.5} parent=1 // pred_fallthru
      _
    // Predicated region
    $region6: #{decoder_layer.5} parent=1 // pred_check
      _
    $region7: #{decoder_layer.5} parent=1 // pred_check_branch
      %16 = sbr.rel (0) target = $region9
    $region8: #{decoder_layer.5} parent=1 // pred_region
      _
    $region9: #{decoder_layer.5} parent=1 // pred_fallthru
      _
    // Predicated region
    $region10: #{decoder_layer.5} parent=1 // pred_check
      _
    $region11: #{decoder_layer.5} parent=1 // pred_check_branch
      %18 = sbr.rel (0) target = $region13
    $region12: #{decoder_layer.5} parent=1 // pred_region
      _
    $region13: #{decoder_layer.5} parent=1 // pred_fallthru
      _
    // Predicated region
    $region14: #{decoder_layer.5} parent=1 // pred_check
      _
    $region15: #{decoder_layer.5} parent=1 // pred_check_branch
      %20 = sbr.rel (0) target = $region17
    $region16: #{decoder_layer.5} parent=1 // pred_region
      _
    $region17: #{decoder_layer.5} parent=1 // pred_fallthru
      _
    // Predicated region
    $region18: #{decoder_layer.5} parent=1 // pred_check
      _
    $region19: #{decoder_layer.5} parent=1 // pred_check_branch
      %22 = sbr.rel (0) target = $region21
    $region20: #{decoder_layer.5} parent=1 // pred_region
      _
    $region21: #{decoder_layer.5} parent=1 // pred_fallthru
      _
    // Predicated region
    $region22: #{decoder_layer.5} parent=1 // pred_check
      _
    $region23: #{decoder_layer.5} parent=1 // pred_check_branch
      %24 = sbr.rel (0) target = $region25
    $region24: #{decoder_layer.5} parent=1 // pred_region
      _
    $region25: #{decoder_layer.5} parent=1 // pred_fallthru
      _
    // Predicated region
    $region26: #{decoder_layer.5} parent=1 // pred_check
      _
    $region27: #{decoder_layer.5} parent=1 // pred_check_branch
      %26 = sbr.rel (0) target = $region29
    $region28: #{decoder_layer.5} parent=1 // pred_region
      _
    $region29: #{decoder_layer.5} parent=1 // pred_fallthru
      _
    %v27 = vld [vmem:[%s0] sm:$0xff]
    %v28 = vld [vmem:[%s0 + $0x8] sm:$0xff]
    %v29 = vld [vmem:[%s1] sm:$0xff]
    %v30 = vld [vmem:[%s1 + $0x8] sm:$0xff]
    %v31 = vld [vmem:[%s1 + $0x10] sm:$0xff]
    %v32 = vld [vmem:[%s1 + $0x18] sm:$0xff]
    %v33 = vld [vmem:[%s2] sm:$0x1]
    %v35 = vperm.slane %v33, 0
    %vm37 = vcmask 261120
    %v39 = vsel %vm37, %v27, 0
    %v42 = vsel %vm37, %v28, 0
    %44 = vmatpush.msra.mxu0 0.0
    %45 = vmatpush.msra.mxu0 0.0
    %46 = vmatpush.msra.mxu0 0.0
    %47 = vmatpush.msra.mxu0 0.0
    %48 = vmatpush.msra.mxu0 0.0
    %49 = vmatpush.msra.mxu0 0.0
    %50 = vmatpush.msra.mxu0 0.0
    %51 = vmatpush.msra.mxu0 0.0
    %52 = vmatpush.msra.mxu0 0.0
    %53 = vmatpush.msra.mxu0 0.0
    %54 = vmatpush.msra.mxu0 0.0
    %55 = vmatpush.msra.mxu0 0.0
    %56 = vmatpush.msra.mxu0 %v32
    %57 = vmatpush.msra.mxu0 %v31
    %58 = vmatpush.msra.mxu0 %v30
    %59 = vmatpush.msra.mxu0 %v29
    %60 = vmatmul.f32.gmra.mxu0 %v39
    %v61 = vpop.f32.mrf.mxu0
    %v62 = vadd.f32 %v35, %v61
    %63 = vmatmul.f32.gmra.mxu0 %v42
    %v64 = vpop.f32.mrf.mxu0
    %v65 = vadd.f32 %v35, %v64
    %66 = vdwg.mxu0
    %v67 = vmax.f32 %v62, 0.0
    %v68 = vmax.f32 %v65, 0.0
    %v69 = vld [vmem:[%s3] sm:$0xff]
    %v70 = vld [vmem:[%s3 + $0x8] sm:$0xff]
    %v71 = vld [vmem:[%s3 + $0x10] sm:$0xff]
    %v72 = vld [vmem:[%s3 + $0x18] sm:$0xff]
    %v73 = vld [vmem:[%s3 + $0x20] sm:$0xff]
    %v74 = vld [vmem:[%s3 + $0x28] sm:$0xff]
    %v75 = vld [vmem:[%s3 + $0x30] sm:$0xff]
    %v76 = vld [vmem:[%s3 + $0x38] sm:$0xff]
    %v77 = vld [vmem:[%s4] sm:$0x1]
    %v79 = vperm.slane %v77, 0
    %vm81 = vcmask 523264
    %v83 = vsel %vm81, %v67, 0
    %v86 = vsel %vm81, %v68, 0
    %88 = vmatpush.msra.mxu0 0.0
    %89 = vmatpush.msra.mxu0 0.0
    %90 = vmatpush.msra.mxu0 0.0
    %91 = vmatpush.msra.mxu0 0.0
    %92 = vmatpush.msra.mxu0 0.0
    %93 = vmatpush.msra.mxu0 0.0
    %94 = vmatpush.msra.mxu0 0.0
    %95 = vmatpush.msra.mxu0 0.0
    %96 = vmatpush.msra.mxu0 %v76
    %97 = vmatpush.msra.mxu0 %v75
    %98 = vmatpush.msra.mxu0 %v74
    %99 = vmatpush.msra.mxu0 %v73
    %100 = vmatpush.msra.mxu0 %v72
    %101 = vmatpush.msra.mxu0 %v71
    %102 = vmatpush.msra.mxu0 %v70
    %103 = vmatpush.msra.mxu0 %v69
    %104 = vmatmul.f32.gmra.mxu0 %v83
    %v105 = vpop.f32.mrf.mxu0
    %v106 = vadd.f32 %v79, %v105
    %107 = vmatmul.f32.gmra.mxu0 %v86
    %v108 = vpop.f32.mrf.mxu0
    %v109 = vadd.f32 %v79, %v108
    %110 = vdwg.mxu0
    %v111 = vadd.f32 %v27, %v106
    %v112 = vadd.f32 %v28, %v109
    %v113 = vsel %vm37, %v111, 0.0
    %114 = vadd.xlane.f32.xlu0 %v113
    %v115 = vpop.xlane.xlu0 %114
    %v116 = vsel %vm37, %v112, 0.0
    %117 = vadd.xlane.f32.xlu0 %v116
    %v118 = vpop.xlane.xlu0 %117
    %v119 = vrcp.pop 32.0
    %v120 = vmul.f32 32.0, %v119
    %v121 = vsub.f32 1.0, %v120
    %v122 = vmul.f32 %v119, %v121
    %v123 = vadd.f32 %v119, %v122
    %vm124 = vweird.f32 %v119
    %v125 = vsel %vm124, %v119, %v123
    %v126 = vmul.f32 %v115, %v125
    %v127 = vmul.f32 %v118, %v125
    %v128 = vsub.f32 %v111, %v126
    %v129 = vsub.f32 %v112, %v127
    %v130 = vmul.f32 %v128, %v128
    %v131 = vmul.f32 %v129, %v129
    %v132 = vsel %vm37, %v130, 0.0
    %133 = vadd.xlane.f32.xlu0 %v132
    %v134 = vpop.xlane.xlu0 %133
    %v135 = vsel %vm37, %v131, 0.0
    %136 = vadd.xlane.f32.xlu0 %v135
    %v137 = vpop.xlane.xlu0 %136
    %v138 = vmul.f32 %v134, %v125
    %v139 = vmul.f32 %v137, %v125
    %v140 = vadd.f32 %v138, 1e-05
    %v141 = vadd.f32 %v139, 1e-05
    %v142 = vrsqrt.pop %v140
    %v143 = vmul.f32 %v142, %v140
    %v144 = vmul.f32 %v143, %v142
    %v145 = vmul.f32 0.5, %v144
    %v146 = vsub.f32 1.5, %v145
    %v147 = vmul.f32 %v142, %v146
    %vm148 = vweird.f32 %v140
    %vm149 = vweird.f32 %v142
    %vm150 = vmor %vm148, %vm149
    %v151 = vsel %vm150, %v142, %v147
    %v152 = vrsqrt.pop %v141
    %v153 = vmul.f32 %v152, %v141
    %v154 = vmul.f32 %v153, %v152
    %v155 = vmul.f32 0.5, %v154
    %v156 = vsub.f32 1.5, %v155
    %v157 = vmul.f32 %v152, %v156
    %vm158 = vweird.f32 %v141
    %vm159 = vweird.f32 %v152
    %vm160 = vmor %vm158, %vm159
    %v161 = vsel %vm160, %v152, %v157
    %v162 = vmul.f32 %v128, %v151
    %v163 = vmul.f32 %v129, %v161
    %v164 = vld [vmem:[%s5] sm:$0x1]
    %v166 = vperm.slane %v164, 0
    %v168 = vmul.f32 %v162, %v166
    %v169 = vmul.f32 %v163, %v166
    %v170 = vld [vmem:[%s6] sm:$0x1]
    %v172 = vperm.slane %v170, 0
    %v174 = vadd.f32 %v168, %v172
    %v175 = vadd.f32 %v169, %v172
    %176 = vst.msk [vmem:[#allocation2] sm:$0xff] %vm37, %v174
    %177 = vst.msk [vmem:[#allocation2 + $0x8] sm:$0xff] %vm37, %v175
    // Predicated region
    $region30: #{decoder_layer.5} parent=1 // pred_check
      _
    $region31: #{decoder_layer.5} parent=1 // pred_check_branch
      %179 = sbr.rel (0) target = $region33
    $region32: #{decoder_layer.5} parent=1 // pred_region
      %181 = vsyncadd [#allocation3], 0
      %s182 = sshll.u32 [#allocation2], 4
      %s183 = int_to_ptr.vmem [resolvable:$true] %s182
      %s184 = sshll.u32 %s7, 4
      %s185 = int_to_ptr.hbm [resolvable:$true] %s184
      %190 = dma.vmem_to_hbm [thread:$0]  %s183, 256, %s185, [#allocation3], 128, 128, 8
    $region33: #{decoder_layer.5} parent=1 // pred_fallthru
      _
    // Predicated region
    $region34: #{decoder_layer.5} parent=1 // pred_check
      _
    $region35: #{decoder_layer.5} parent=1 // pred_check_branch
      %192 = sbr.rel (0) target = $region37
    $region36: #{decoder_layer.5} parent=1 // pred_region
      %194 = dma.done [#allocation3], 256
    $region37: #{decoder_layer.5} parent=1 // pred_fallthru
      _
    %195 = vsyncpa [#allocation3], 1

// kernel: decoder_layer.3
$region0: #{decoder_layer.3}
  #allocation0 [shape = 'u32[]', space=smem, size = 0x4, offset = 0x4, fixed_abs, tag = 'smem constant byte address 0x4 - core index']
  #allocation1 [shape = 'u32[72,128]{1,0:T(1,128)}', space=vmem, size = 0x9000, scoped, tag = 'internal scratch']
  #allocation2 [shape = 'f32[8,64]{1,0:T(8,128)}', space=vmem, size = 0x1000, scoped, tag = 'scratch operand']
  #allocation3 [shape = 'f32[8,32]{1,0:T(8,128)}', space=vmem, size = 0x1000, scoped, tag = 'scratch operand']
  %s0 = inlined_call_operand.hbm [shape: f32[2,8,32], index: 0, kind: input, shape index: {}, may-alias: {0,1}]
  %s1 = inlined_call_operand.hbm [shape: f32[2,8,32], index: 1, kind: input, shape index: {}, may-alias: {0,1}]
  %s2 = inlined_call_operand.hbm [shape: f32[32,32], index: 2, kind: input, shape index: {}]
  %s3 = inlined_call_operand.vmem [shape: f32[1,32], index: 3, kind: input, shape index: {}]
  %s4 = inlined_call_operand.hbm [shape: f32[32,64], index: 4, kind: input, shape index: {}]
  %s5 = inlined_call_operand.vmem [shape: f32[1,64], index: 5, kind: input, shape index: {}]
  %s6 = inlined_call_operand.hbm [shape: f32[32,32], index: 6, kind: input, shape index: {}]
  %s7 = inlined_call_operand.vmem [shape: f32[1,32], index: 7, kind: input, shape index: {}]
  %s8 = inlined_call_operand.vmem [shape: f32[1,32], index: 8, kind: input, shape index: {}]
  %s9 = inlined_call_operand.vmem [shape: f32[1,32], index: 9, kind: input, shape index: {}]
  %s10 = inlined_call_operand.vmem [shape: f32[2,8,32], index: 10, kind: output, shape index: {}]
  %s11 = sld [smem:[#allocation0]]
  $region97: #{decoder_layer.3} parent=0
    _
  %s13 = ssub.s32 1, %s11
  %s14 = scalar_select 0, %s13, %s11
  $region1: #{decoder_layer.3} parent=0
    #allocation4 [shape = 'u8[8192]{0}', space=vmem, size = 0x2000, scoped, tag = 'input window, operand 0']
    #allocation5 [shape = 's32[2]{0}', space=sflag, size = 0x8, scoped, tag = 'scoped memory for decoder_layer.3']
    #allocation6 [shape = 'u8[8192]{0}', space=vmem, size = 0x2000, scoped, tag = 'input window, operand 1']
    #allocation7 [shape = 's32[2]{0}', space=sflag, size = 0x8, scoped, tag = 'scoped memory for decoder_layer.3']
    #allocation8 [shape = 'u8[16384]{0}', space=vmem, size = 0x4000, scoped, tag = 'input window, operand 2, single buffered']
    #allocation9 [shape = 'u8[16384]{0}', space=vmem, size = 0x4000, scoped, tag = 'input window, operand 4, single buffered']
    #allocation10 [shape = 's32[1]{0}', space=sflag, size = 0x4, scoped, tag = 'scoped memory for decoder_layer.3']
    #allocation11 [shape = 'u8[16384]{0}', space=vmem, size = 0x4000, scoped, tag = 'input window, operand 6, single buffered']
    %15 = vsyncpa [#allocation5], 0
    %s16 = scalar_lea.sflag [#allocation5], 1
    %17 = vsyncpa %s16, 0
    %18 = vsyncpa [#allocation7], 0
    %s19 = scalar_lea.sflag [#allocation7], 1
    %20 = vsyncpa %s19, 0
    %21 = vsyncpa [#allocation10], 0
    loop: start=0, step=1, limit=4
    $region2: #{decoder_layer.3} parent=1 // loop_pre_header
      _
    $region3: #{decoder_layer.3} parent=1 // loop_header
      %s23 = sphi 0, %s27
      %p24 = scmp.ge.s32.totalorder %s23, 4
      %s30 = sphi 0, %s42
      %s31 = sphi 0, %s38
      %s32 = sphi 0, %s30
      %s33 = sphi 0, %s31
      %s34 = sphi 0, %s32
      %s35 = sphi 0, %s33
      %s47 = sphi 0, %s49
      %s50 = sphi 0, %s47
      %s51 = sphi 0, %s50
      %s67 = sphi 0, %s51
      %s73 = sphi 0, %s75
      %s76 = sphi 0, %s73
      %s77 = sphi 0, %s76
      %s93 = sphi 0, %s77
      %s97 = sphi 0, %s97
      %s99 = sphi 0, %s97
      %s100 = sphi 0, %s99
      %s114 = sphi 0, %s100
      %s118 = sphi 0, %s118
      %s120 = sphi 0, %s118
      %s121 = sphi 0, %s120
      %s135 = sphi 0, %s121
      %s139 = sphi 0, %s139
      %s141 = sphi 0, %s139
      %s142 = sphi 0, %s141
      %s156 = sphi 0, %s142
      %s160 = sphi 0, %s160
      %s162 = sphi 0, %s160
      %s163 = sphi 0, %s162
      %s177 = sphi 0, %s163
      %s181 = sphi 0, %s181
      %s183 = sphi 0, %s181
      %s184 = sphi 0, %s183
      %s198 = sphi 0, %s184
      %s202 = sphi 0, %s202
      %s204 = sphi 0, %s202
      %s205 = sphi 0, %s204
      %s219 = sphi 0, %s205
      %s223 = sphi 0, %s223
      %s225 = sphi 0, %s223
      %s226 = sphi 0, %s225
      %s240 = sphi 0, %s226
      %s244 = sphi 0, %s244
      %s246 = sphi 0, %s244
      %s247 = sphi 0, %s246
      %s261 = sphi 0, %s247
      %s269 = sphi 0, %s271
      %s272 = sphi 0, %s269
      %s273 = sphi 0, %s272
      %s289 = sphi 0, %s273
    $region4: #{decoder_layer.3} parent=1 // loop_header_branch
      %26 = sbr.rel (%p24) target = $region8
    $region5: #{decoder_layer.3} parent=1 // loop_body
      %s28 = ssub.s32 %s23, 1
      %s29 = ssub.s32 %s23, 2
      %s36 = sadd.s32 1, %s31
      %p37 = scmp.ge.s32.totalorder %s36, 1
      %s38 = scalar_select %p37, 0, %s36
      %s39 = sadd.s32 1, %s30
      %s40 = scalar_select %p37, %s39, %s30
      %p41 = scmp.ge.s32.totalorder %s40, 2
      %s42 = scalar_select %p41, 0, %s40
      %s43 = ssub.s32 %s30, %s42
      %s44 = ssub.s32 %s31, %s38
      %s45 = sor.u32 %s43, %s44
      %p46 = scmp.eq.s32.totalorder %s45, 0
      %s48 = sadd.s32 %s47, 1
      %s49 = scalar_select %p46, %s47, %s48
      %p52 = pneg %p46
      %p53 = scmp.eq.s32.totalorder %s23, 1
      %p54 = por %p52, %p53
      %p55 = scmp.ne.s32.totalorder %s47, %s50
      %p56 = scmp.eq.s32.totalorder %s23, 0
      %p57 = por %p55, %p56
      %p58 = scmp.ne.s32.totalorder %s47, %s50
      %p59 = scmp.eq.s32.totalorder %s28, 1
      %p60 = por %p58, %p59
      %p61 = scmp.ne.s32.totalorder %s50, %s51
      %p62 = scmp.eq.s32.totalorder %s28, 0
      %p63 = por %p61, %p62
      %p64 = scmp.ne.s32.totalorder %s50, %s51
      %p65 = scmp.eq.s32.totalorder %s29, 1
      %p66 = por %p64, %p65
      %p68 = scmp.ne.s32.totalorder %s51, %s67
      %p69 = scmp.eq.s32.totalorder %s29, 0
      %p70 = por %p68, %p69
      %s71 = ssub.s32 %s30, %s42
      %p72 = scmp.eq.s32.totalorder %s71, 0
      %s74 = sadd.s32 %s73, 1
      %s75 = scalar_select %p72, %s73, %s74
      %p78 = pneg %p72
      %p79 = scmp.eq.s32.totalorder %s23, 1
      %p80 = por %p78, %p79
      %p81 = scmp.ne.s32.totalorder %s73, %s76
      %p82 = scmp.eq.s32.totalorder %s23, 0
      %p83 = por %p81, %p82
      %p84 = scmp.ne.s32.totalorder %s73, %s76
      %p85 = scmp.eq.s32.totalorder %s28, 1
      %p86 = por %p84, %p85
      %p87 = scmp.ne.s32.totalorder %s76, %s77
      %p88 = scmp.eq.s32.totalorder %s28, 0
      %p89 = por %p87, %p88
      %p90 = scmp.ne.s32.totalorder %s76, %s77
      %p91 = scmp.eq.s32.totalorder %s29, 1
      %p92 = por %p90, %p91
      %p94 = scmp.ne.s32.totalorder %s77, %s93
      %p95 = scmp.eq.s32.totalorder %s29, 0
      %p96 = por %p94, %p95
      %s98 = sadd.s32 %s97, 1
      %p101 = scmp.eq.s32.totalorder %s23, 1
      %p102 = scmp.ne.s32.totalorder %s97, %s99
      %p103 = scmp.eq.s32.totalorder %s23, 0
      %p104 = por %p102, %p103
      %p105 = scmp.ne.s32.totalorder %s97, %s99
      %p106 = scmp.eq.s32.totalorder %s28, 1
      %p107 = por %p105, %p106
      %p108 = scmp.ne.s32.totalorder %s99, %s100
      %p109 = scmp.eq.s32.totalorder %s28, 0
      %p110 = por %p108, %p109
      %p111 = scmp.ne.s32.totalorder %s99, %s100
      %p112 = scmp.eq.s32.totalorder %s29, 1
      %p113 = por %p111, %p112
      %p115 = scmp.ne.s32.totalorder %s100, %s114
      %p116 = scmp.eq.s32.totalorder %s29, 0
      %p117 = por %p115, %p116
      %s119 = sadd.s32 %s118, 1
      %p122 = scmp.eq.s32.totalorder %s23, 1
      %p123 = scmp.ne.s32.totalorder %s118, %s120
      %p124 = scmp.eq.s32.totalorder %s23, 0
      %p125 = por %p123, %p124
      %p126 = scmp.ne.s32.totalorder %s118, %s120
      %p127 = scmp.eq.s32.totalorder %s28, 1
      %p128 = por %p126, %p127
      %p129 = scmp.ne.s32.totalorder %s120, %s121
      %p130 = scmp.eq.s32.totalorder %s28, 0
      %p131 = por %p129, %p130
      %p132 = scmp.ne.s32.totalorder %s120, %s121
      %p133 = scmp.eq.s32.totalorder %s29, 1
      %p134 = por %p132, %p133
      %p136 = scmp.ne.s32.totalorder %s121, %s135
      %p137 = scmp.eq.s32.totalorder %s29, 0
      %p138 = por %p136, %p137
      %s140 = sadd.s32 %s139, 1
      %p143 = scmp.eq.s32.totalorder %s23, 1
      %p144 = scmp.ne.s32.totalorder %s139, %s141
      %p145 = scmp.eq.s32.totalorder %s23, 0
      %p146 = por %p144, %p145
      %p147 = scmp.ne.s32.totalorder %s139, %s141
      %p148 = scmp.eq.s32.totalorder %s28, 1
      %p149 = por %p147, %p148
      %p150 = scmp.ne.s32.totalorder %s141, %s142
      %p151 = scmp.eq.s32.totalorder %s28, 0
      %p152 = por %p150, %p151
      %p153 = scmp.ne.s32.totalorder %s141, %s142
      %p154 = scmp.eq.s32.totalorder %s29, 1
      %p155 = por %p153, %p154
      %p157 = scmp.ne.s32.totalorder %s142, %s156
      %p158 = scmp.eq.s32.totalorder %s29, 0
      %p159 = por %p157, %p158
      %s161 = sadd.s32 %s160, 1
      %p164 = scmp.eq.s32.totalorder %s23, 1
      %p165 = scmp.ne.s32.totalorder %s160, %s162
      %p166 = scmp.eq.s32.totalorder %s23, 0
      %p167 = por %p165, %p166
      %p168 = scmp.ne.s32.totalorder %s160, %s162
      %p169 = scmp.eq.s32.totalorder %s28, 1
      %p170 = por %p168, %p169
      %p171 = scmp.ne.s32.totalorder %s162, %s163
      %p172 = scmp.eq.s32.totalorder %s28, 0
      %p173 = por %p171, %p172
      %p174 = scmp.ne.s32.totalorder %s162, %s163
      %p175 = scmp.eq.s32.totalorder %s29, 1
      %p176 = por %p174, %p175
      %p178 = scmp.ne.s32.totalorder %s163, %s177
      %p179 = scmp.eq.s32.totalorder %s29, 0
      %p180 = por %p178, %p179
      %s182 = sadd.s32 %s181, 1
      %p185 = scmp.eq.s32.totalorder %s23, 1
      %p186 = scmp.ne.s32.totalorder %s181, %s183
      %p187 = scmp.eq.s32.totalorder %s23, 0
      %p188 = por %p186, %p187
      %p189 = scmp.ne.s32.totalorder %s181, %s183
      %p190 = scmp.eq.s32.totalorder %s28, 1
      %p191 = por %p189, %p190
      %p192 = scmp.ne.s32.totalorder %s183, %s184
      %p193 = scmp.eq.s32.totalorder %s28, 0
      %p194 = por %p192, %p193
      %p195 = scmp.ne.s32.totalorder %s183, %s184
      %p196 = scmp.eq.s32.totalorder %s29, 1
      %p197 = por %p195, %p196
      %p199 = scmp.ne.s32.totalorder %s184, %s198
      %p200 = scmp.eq.s32.totalorder %s29, 0
      %p201 = por %p199, %p200
      %s203 = sadd.s32 %s202, 1
      %p206 = scmp.eq.s32.totalorder %s23, 1
      %p207 = scmp.ne.s32.totalorder %s202, %s204
      %p208 = scmp.eq.s32.totalorder %s23, 0
      %p209 = por %p207, %p208
      %p210 = scmp.ne.s32.totalorder %s202, %s204
      %p211 = scmp.eq.s32.totalorder %s28, 1
      %p212 = por %p210, %p211
      %p213 = scmp.ne.s32.totalorder %s204, %s205
      %p214 = scmp.eq.s32.totalorder %s28, 0
      %p215 = por %p213, %p214
      %p216 = scmp.ne.s32.totalorder %s204, %s205
      %p217 = scmp.eq.s32.totalorder %s29, 1
      %p218 = por %p216, %p217
      %p220 = scmp.ne.s32.totalorder %s205, %s219
      %p221 = scmp.eq.s32.totalorder %s29, 0
      %p222 = por %p220, %p221
      %s224 = sadd.s32 %s223, 1
      %p227 = scmp.eq.s32.totalorder %s23, 1
      %p228 = scmp.ne.s32.totalorder %s223, %s225
      %p229 = scmp.eq.s32.totalorder %s23, 0
      %p230 = por %p228, %p229
      %p231 = scmp.ne.s32.totalorder %s223, %s225
      %p232 = scmp.eq.s32.totalorder %s28, 1
      %p233 = por %p231, %p232
      %p234 = scmp.ne.s32.totalorder %s225, %s226
      %p235 = scmp.eq.s32.totalorder %s28, 0
      %p236 = por %p234, %p235
      %p237 = scmp.ne.s32.totalorder %s225, %s226
      %p238 = scmp.eq.s32.totalorder %s29, 1
      %p239 = por %p237, %p238
      %p241 = scmp.ne.s32.totalorder %s226, %s240
      %p242 = scmp.eq.s32.totalorder %s29, 0
      %p243 = por %p241, %p242
      %s245 = sadd.s32 %s244, 1
      %p248 = scmp.eq.s32.totalorder %s23, 1
      %p249 = scmp.ne.s32.totalorder %s244, %s246
      %p250 = scmp.eq.s32.totalorder %s23, 0
      %p251 = por %p249, %p250
      %p252 = scmp.ne.s32.totalorder %s244, %s246
      %p253 = scmp.eq.s32.totalorder %s28, 1
      %p254 = por %p252, %p253
      %p255 = scmp.ne.s32.totalorder %s246, %s247
      %p256 = scmp.eq.s32.totalorder %s28, 0
      %p257 = por %p255, %p256
      %p258 = scmp.ne.s32.totalorder %s246, %s247
      %p259 = scmp.eq.s32.totalorder %s29, 1
      %p260 = por %p258, %p259
      %p262 = scmp.ne.s32.totalorder %s247, %s261
      %p263 = scmp.eq.s32.totalorder %s29, 0
      %p264 = por %p262, %p263
      %s265 = ssub.s32 %s30, %s42
      %s266 = ssub.s32 %s31, %s38
      %s267 = sor.u32 %s265, %s266
      %p268 = scmp.eq.s32.totalorder %s267, 0
      %s270 = sadd.s32 %s269, 1
      %s271 = scalar_select %p268, %s269, %s270
      %p274 = pneg %p268
      %p275 = scmp.eq.s32.totalorder %s23, 1
      %p276 = por %p274, %p275
      %p277 = scmp.ne.s32.totalorder %s269, %s272
      %p278 = scmp.eq.s32.totalorder %s23, 0
      %p279 = por %p277, %p278
      %p280 = scmp.ne.s32.totalorder %s269, %s272
      %p281 = scmp.eq.s32.totalorder %s28, 1
      %p282 = por %p280, %p281
      %p283 = scmp.ne.s32.totalorder %s272, %s273
      %p284 = scmp.eq.s32.totalorder %s28, 0
      %p285 = por %p283, %p284
      %p286 = scmp.ne.s32.totalorder %s272, %s273
      %p287 = scmp.eq.s32.totalorder %s29, 1
      %p288 = por %p286, %p287
      %p290 = scmp.ne.s32.totalorder %s273, %s289
      %p291 = scmp.eq.s32.totalorder %s29, 0
      %p292 = por %p290, %p291
      %p293 = scmp.le.s32.totalorder 1, %s23
      %p294 = scmp.lt.s32.totalorder %s23, 3
      %p295 = pnand %p293, %p294
      %p296 = pneg %p295
      // Predicated region
      $region9: #{decoder_layer.3} parent=5 // pred_check
        _
      $region10: #{decoder_layer.3} parent=5 // pred_check_branch
        %298 = sbr.rel (%p295) target = $region12
      $region11: #{decoder_layer.3} parent=5 // pred_region
        %s299 = ssub.s32 %s23, 1
        // Predicated region
        $region13: #{decoder_layer.3} parent=11 // pred_check
          %p300 = pneg %p110
        $region14: #{decoder_layer.3} parent=11 // pred_check_branch
          %302 = sbr.rel (%p300) target = $region16
        $region15: #{decoder_layer.3} parent=11 // pred_region
          %304 = vsyncadd [#allocation7], 0
          %s305 = sshll.u32 %s2, 4
          %s306 = int_to_ptr.hbm [resolvable:$true] %s305
          %s307 = sshll.u32 [#allocation8], 4
          %s308 = int_to_ptr.vmem [resolvable:$true] %s307
          %313 = dma.hbm_to_vmem [thread:$0]  %s306, 512, %s308, [#allocation7], 128, 128, 8
        $region16: #{decoder_layer.3} parent=11 // pred_fallthru
          _
        // Predicated region
        $region17: #{decoder_layer.3} parent=11 // pred_check
          %p314 = pneg %p131
        $region18: #{decoder_layer.3} parent=11 // pred_check_branch
          %316 = sbr.rel (%p314) target = $region20
        $region19: #{decoder_layer.3} parent=11 // pred_region
          _
        $region20: #{decoder_layer.3} parent=11 // pred_fallthru
          _
        // Predicated region
        $region21: #{decoder_layer.3} parent=11 // pred_check
          %p317 = pneg %p152
        $region22: #{decoder_layer.3} parent=11 // pred_check_branch
          %319 = sbr.rel (%p317) target = $region24
        $region23: #{decoder_layer.3} parent=11 // pred_region
          %321 = vsyncadd [#allocation10], 0
          %s322 = sshll.u32 %s4, 4
          %s323 = int_to_ptr.hbm [resolvable:$true] %s322
          %s324 = sshll.u32 [#allocation9], 4
          %s325 = int_to_ptr.vmem [resolvable:$true] %s324
          %330 = dma.hbm_to_vmem [thread:$0]  %s323, 512, %s325, [#allocation10], 128, 128, 8
        $region24: #{decoder_layer.3} parent=11 // pred_fallthru
          _
        // Predicated region
        $region25: #{decoder_layer.3} parent=11 // pred_check
          %p331 = pneg %p173
        $region26: #{decoder_layer.3} parent=11 // pred_check_branch
          %333 = sbr.rel (%p331) target = $region28
        $region27: #{decoder_layer.3} parent=11 // pred_region
          _
        $region28: #{decoder_layer.3} parent=11 // pred_fallthru
          _
        // Predicated region
        $region29: #{decoder_layer.3} parent=11 // pred_check
          %p334 = pneg %p194
        $region30: #{decoder_layer.3} parent=11 // pred_check_branch
          %336 = sbr.rel (%p334) target = $region32
        $region31: #{decoder_layer.3} parent=11 // pred_region
          %338 = vsyncadd [#allocation10], 0
          %s339 = sshll.u32 %s6, 4
          %s340 = int_to_ptr.hbm [resolvable:$true] %s339
          %s341 = sshll.u32 [#allocation11], 4
          %s342 = int_to_ptr.vmem [resolvable:$true] %s341
          %347 = dma.hbm_to_vmem [thread:$0]  %s340, 512, %s342, [#allocation10], 128, 128, 8
        $region32: #{decoder_layer.3} parent=11 // pred_fallthru
          _
        // Predicated region
        $region33: #{decoder_layer.3} parent=11 // pred_check
          %p348 = pneg %p215
        $region34: #{decoder_layer.3} parent=11 // pred_check_branch
          %350 = sbr.rel (%p348) target = $region36
        $region35: #{decoder_layer.3} parent=11 // pred_region
          _
        $region36: #{decoder_layer.3} parent=11 // pred_fallthru
          _
        // Predicated region
        $region37: #{decoder_layer.3} parent=11 // pred_check
          %p351 = pneg %p236
        $region38: #{decoder_layer.3} parent=11 // pred_check_branch
          %353 = sbr.rel (%p351) target = $region40
        $region39: #{decoder_layer.3} parent=11 // pred_region
          _
        $region40: #{decoder_layer.3} parent=11 // pred_fallthru
          _
        // Predicated region
        $region41: #{decoder_layer.3} parent=11 // pred_check
          %p354 = pneg %p257
        $region42: #{decoder_layer.3} parent=11 // pred_check_branch
          %356 = sbr.rel (%p354) target = $region44
        $region43: #{decoder_layer.3} parent=11 // pred_region
          _
        $region44: #{decoder_layer.3} parent=11 // pred_fallthru
          _
      $region12: #{decoder_layer.3} parent=5 // pred_fallthru
        _
      %p357 = scmp.lt.s32.totalorder %s23, 2
      // Predicated region
      $region45: #{decoder_layer.3} parent=5 // pred_check
        %p358 = pneg %p357
      $region46: #{decoder_layer.3} parent=5 // pred_check_branch
        %360 = sbr.rel (%p358) target = $region48
      $region47: #{decoder_layer.3} parent=5 // pred_region
        // Predicated region
        $region49: #{decoder_layer.3} parent=47 // pred_check
          %p361 = pneg %p57
        $region50: #{decoder_layer.3} parent=47 // pred_check_branch
          %363 = sbr.rel (%p361) target = $region52
        $region51: #{decoder_layer.3} parent=47 // pred_region
          %s364 = sand.u32 %s47, 1
          %s365 = scalar_lea.sflag [#allocation5], %s364
          %s366 = sand.u32 %s47, 1
          %s367 = smul.addr %s366, 8
          %s368 = scalar_lea.vmem [#allocation4], %s367
          %370 = vsyncadd %s365, 0
          %s371 = sadd.s32 %s31, %s30
          %s372 = smul.addr %s371, 8
          %s373 = scalar_lea.hbm %s0, %s372
          %s375 = sshll.u32 %s373, 4
          %s376 = int_to_ptr.hbm [resolvable:$true] %s375
          %s377 = sshll.u32 %s368, 4
          %s378 = int_to_ptr.vmem [resolvable:$true] %s377
          %380 = dma.hbm_to_vmem [thread:$0]  %s376, 128, %s378, %s365
        $region52: #{decoder_layer.3} parent=47 // pred_fallthru
          _
        // Predicated region
        $region53: #{decoder_layer.3} parent=47 // pred_check
          %p381 = pneg %p83
        $region54: #{decoder_layer.3} parent=47 // pred_check_branch
          %383 = sbr.rel (%p381) target = $region56
        $region55: #{decoder_layer.3} parent=47 // pred_region
          %s384 = sand.u32 %s23, 1
          %s385 = scalar_lea.sflag [#allocation7], %s384
          %s386 = sand.u32 %s73, 1
          %s387 = smul.addr %s386, 8
          %s388 = scalar_lea.vmem [#allocation6], %s387
          %390 = vsyncadd %s385, 0
          %s391 = smul.addr %s30, 8
          %s392 = scalar_lea.hbm %s1, %s391
          %s394 = sshll.u32 %s392, 4
          %s395 = int_to_ptr.hbm [resolvable:$true] %s394
          %s396 = sshll.u32 %s388, 4
          %s397 = int_to_ptr.vmem [resolvable:$true] %s396
          %399 = dma.hbm_to_vmem [thread:$0]  %s395, 128, %s397, %s385
        $region56: #{decoder_layer.3} parent=47 // pred_fallthru
          _
      $region48: #{decoder_layer.3} parent=5 // pred_fallthru
        _
      %p400 = scmp.le.s32.totalorder 1, %s23
      %p401 = scmp.lt.s32.totalorder %s23, 3
      %p402 = pnand %p400, %p401
      %p403 = pneg %p402
      // Predicated region
      $region57: #{decoder_layer.3} parent=5 // pred_check
        _
      $region58: #{decoder_layer.3} parent=5 // pred_check_branch
        %405 = sbr.rel (%p402) target = $region60
      $region59: #{decoder_layer.3} parent=5 // pred_region
        %s406 = ssub.s32 %s23, 1
        %s407 = sand.u32 %s50, 1
        %s408 = scalar_lea.sflag [#allocation5], %s407
        %s409 = sand.u32 %s50, 1
        %s410 = smul.addr %s409, 8
        %s411 = scalar_lea.vmem [#allocation4], %s410
        // Predicated region
        $region61: #{decoder_layer.3} parent=59 // pred_check
          %p412 = pneg %p63
        $region62: #{decoder_layer.3} parent=59 // pred_check_branch
          %414 = sbr.rel (%p412) target = $region64
        $region63: #{decoder_layer.3} parent=59 // pred_region
          %416 = dma.done %s408, 128
        $region64: #{decoder_layer.3} parent=59 // pred_fallthru
          _
        %s417 = sand.u32 %s28, 1
        %s418 = scalar_lea.sflag [#allocation7], %s417
        %s419 = sand.u32 %s76, 1
        %s420 = smul.addr %s419, 8
        %s421 = scalar_lea.vmem [#allocation6], %s420
        // Predicated region
        $region65: #{decoder_layer.3} parent=59 // pred_check
          %p422 = pneg %p89
        $region66: #{decoder_layer.3} parent=59 // pred_check_branch
          %424 = sbr.rel (%p422) target = $region68
        $region67: #{decoder_layer.3} parent=59 // pred_region
          %426 = dma.done %s418, 128
        $region68: #{decoder_layer.3} parent=59 // pred_fallthru
          _
        // Predicated region
        $region69: #{decoder_layer.3} parent=59 // pred_check
          %p427 = pneg %p110
        $region70: #{decoder_layer.3} parent=59 // pred_check_branch
          %429 = sbr.rel (%p427) target = $region72
        $region71: #{decoder_layer.3} parent=59 // pred_region
          %431 = dma.done [#allocation7], 512
        $region72: #{decoder_layer.3} parent=59 // pred_fallthru
          _
        // Predicated region
        $region73: #{decoder_layer.3} parent=59 // pred_check
          %p432 = pneg %p152
        $region74: #{decoder_layer.3} parent=59 // pred_check_branch
          %434 = sbr.rel (%p432) target = $region76
        $region75: #{decoder_layer.3} parent=59 // pred_region
          %436 = dma.done [#allocation10], 512
        $region76: #{decoder_layer.3} parent=59 // pred_fallthru
          _
        // Predicated region
        $region77: #{decoder_layer.3} parent=59 // pred_check
          %p437 = pneg %p194
        $region78: #{decoder_layer.3} parent=59 // pred_check_branch
          %439 = sbr.rel (%p437) target = $region80
        $region79: #{decoder_layer.3} parent=59 // pred_region
          %441 = dma.done [#allocation10], 512
        $region80: #{decoder_layer.3} parent=59 // pred_fallthru
          _
        %s442 = sand.u32 %s50, 1
        %s443 = scalar_lea.sflag [#allocation5], %s442
        %s444 = sand.u32 %s50, 1
        %s445 = smul.addr %s444, 8
        %s446 = scalar_lea.vmem [#allocation4], %s445
        %p447 = pneg %p63
        %p448 = pneg %p60
        %s449 = sand.u32 %s28, 1
        %s450 = scalar_lea.sflag [#allocation7], %s449
        %s451 = sand.u32 %s76, 1
        %s452 = smul.addr %s451, 8
        %s453 = scalar_lea.vmem [#allocation6], %s452
        %p454 = pneg %p89
        %p455 = pneg %p86
        %p456 = pneg %p110
        %p457 = pneg %p107
        %p458 = pneg %p131
        %p459 = pneg %p128
        %p460 = pneg %p152
        %p461 = pneg %p149
        %p462 = pneg %p173
        %p463 = pneg %p170
        %p464 = pneg %p194
        %p465 = pneg %p191
        %p466 = pneg %p215
        %p467 = pneg %p212
        %p468 = pneg %p236
        %p469 = pneg %p233
        %p470 = pneg %p257
        %p471 = pneg %p254
        %p472 = pneg %p285
        %p473 = pneg %p282
        %p474 = scmp.lt.s32.totalorder %s32, 1
        %s475 = scalar_select %p474, %s32, 1
        %p476 = scmp.lt.s32.totalorder %s33, 0
        %s477 = scalar_select %p476, %s33, 0
        %s478 = sadd.s32 %s477, %s475
        %s479 = smul.addr %s478, 8
        %s480 = scalar_lea.vmem %s10, %s479
        %p481 = scmp.lt.s32.totalorder %s32, 1
        %s482 = scalar_select %p481, %s32, 1
        %p483 = scmp.lt.s32.totalorder %s33, 0
        %s484 = scalar_select %p483, %s33, 0
        %s485 = sadd.s32 %s484, %s482
        %s486 = smul.addr %s485, 8
        %s487 = scalar_lea.vmem %s10, %s486
        %v488 = vld [vmem:[%s411] sm:$0xff]
        %p489 = scmp.eq.s32.totalorder %s33, 0
        // Predicated region
        $region81: #{decoder_layer.3} parent=59 // pred_check
          %p490 = pneg %p489
        $region82: #{decoder_layer.3} parent=59 // pred_check_branch
          %492 = sbr.rel (%p490) target = $region84
        $region83: #{decoder_layer.3} parent=59 // pred_region
          %v493 = vld [vmem:[%s421] sm:$0xff]
          %v494 = vld [vmem:[#allocation9] sm:$0xff]
          %v495 = vld [vmem:[#allocation9 + $0x8] sm:$0xff]
          %v496 = vld [vmem:[#allocation9 + $0x10] sm:$0xff]
          %v497 = vld [vmem:[#allocation9 + $0x18] sm:$0xff]
          %v498 = vld [vmem:[%s5] sm:$0x1]
          %v500 = vperm.slane %v498, 0
          %vm502 = vcmask 261120
          %v504 = vsel %vm502, %v493, 0
          %506 = vmatpush.msra.mxu0 0.0
          %507 = vmatpush.msra.mxu0 0.0
          %508 = vmatpush.msra.mxu0 0.0
          %509 = vmatpush.msra.mxu0 0.0
          %510 = vmatpush.msra.mxu0 0.0
          %511 = vmatpush.msra.mxu0 0.0
          %512 = vmatpush.msra.mxu0 0.0
          %513 = vmatpush.msra.mxu0 0.0
          %514 = vmatpush.msra.mxu0 0.0
          %515 = vmatpush.msra.mxu0 0.0
          %516 = vmatpush.msra.mxu0 0.0
          %517 = vmatpush.msra.mxu0 0.0
          %518 = vmatpush.msra.mxu0 %v497
          %519 = vmatpush.msra.mxu0 %v496
          %520 = vmatpush.msra.mxu0 %v495
          %521 = vmatpush.msra.mxu0 %v494
          %522 = vmatmul.f32.gmra.mxu0 %v504
          %v523 = vpop.f32.mrf.mxu0
          %v524 = vadd.f32 %v500, %v523
          %525 = vdwg.mxu0
          %vm526 = vcmask 523264
          %527 = vst.msk [vmem:[#allocation2] sm:$0xff] %vm526, %v524
        $region84: #{decoder_layer.3} parent=59 // pred_fallthru
          _
        %v528 = vld [vmem:[#allocation8] sm:$0xff]
        %v529 = vld [vmem:[#allocation8 + $0x8] sm:$0xff]
        %v530 = vld [vmem:[#allocation8 + $0x10] sm:$0xff]
        %v531 = vld [vmem:[#allocation8 + $0x18] sm:$0xff]
        %v532 = vld [vmem:[%s3] sm:$0x1]
        %v534 = vperm.slane %v532, 0
        %vm536 = vcmask 261120
        %v538 = vsel %vm536, %v488, 0
        %540 = vmatpush.msra.mxu0 0.0
        %541 = vmatpush.msra.mxu0 0.0
        %542 = vmatpush.msra.mxu0 0.0
        %543 = vmatpush.msra.mxu0 0.0
        %544 = vmatpush.msra.mxu0 0.0
        %545 = vmatpush.msra.mxu0 0.0
        %546 = vmatpush.msra.mxu0 0.0
        %547 = vmatpush.msra.mxu0 0.0
        %548 = vmatpush.msra.mxu0 0.0
        %549 = vmatpush.msra.mxu0 0.0
        %550 = vmatpush.msra.mxu0 0.0
        %551 = vmatpush.msra.mxu0 0.0
        %552 = vmatpush.msra.mxu0 %v531
        %553 = vmatpush.msra.mxu0 %v530
        %554 = vmatpush.msra.mxu0 %v529
        %555 = vmatpush.msra.mxu0 %v528
        %556 = vmatmul.f32.gmra.mxu0 %v538
        %v557 = vpop.f32.mrf.mxu0
        %v558 = vadd.f32 %v534, %v557
        %559 = vdwg.mxu0
        %v560 = vmul.f32 %v558, 0.35355338
        %v561 = vld [vmem:[#allocation2] sm:$0xff]
        %v562 = vlaneseq
        %v563 = vshrl.u32 %v562, 7
        %s564 = smul.u32 %s33, 8
        %v565 = vstv %s564
        %v566 = vadd.s32 %v563, %v565
        %v567 = vlaneseq
        %v568 = vand.u32 %v567, 127
        %vm569 = vcmp.gt.s32.totalorder %v568, %v566
        %vm570 = vcmask 64512
        %v572 = vsel %vm570, %v560, 0
        %v575 = vsel %vm570, %v561, 0
        %577 = vmatpush.xpose.msra.mxu0 0.0
        %578 = vmatpush.xpose.msra.mxu0 0.0
        %579 = vmatpush.xpose.msra.mxu0 0.0
        %580 = vmatpush.xpose.msra.mxu0 0.0
        %581 = vmatpush.xpose.msra.mxu0 0.0
        %582 = vmatpush.xpose.msra.mxu0 0.0
        %583 = vmatpush.xpose.msra.mxu0 0.0
        %584 = vmatpush.xpose.msra.mxu0 0.0
        %585 = vmatpush.xpose.msra.mxu0 0.0
        %586 = vmatpush.xpose.msra.mxu0 0.0
        %587 = vmatpush.xpose.msra.mxu0 0.0
        %588 = vmatpush.xpose.msra.mxu0 0.0
        %589 = vmatpush.xpose.msra.mxu0 0.0
        %590 = vmatpush.xpose.msra.mxu0 0.0
        %591 = vmatpush.xpose.msra.mxu0 0.0
        %592 = vmatpush.xpose.msra.mxu0 %v575
        %593 = vmatmul.f32.gmra.mxu0 %v572
        %v594 = vpop.f32.mrf.mxu0
        %v595 = vadd.f32 0.0, %v594
        %596 = vdwg.mxu0
        %v597 = vsel %vm569, -10000.0, %v595
        %v598 = vsel %vm570, %v597, -inf
        %599 = vmax.xlane.f32.xlu0 %v598
        %v600 = vpop.xlane.xlu0 %599
        %v601 = vsub.f32 %v597, %v600
        %v602 = vmul.f32 %v601, 1.442695
        %v603 = vpow.pop %v602
        %v604 = vsel %vm570, %v603, 0.0
        %605 = vadd.xlane.f32.xlu0 %v604
        %v606 = vpop.xlane.xlu0 %605
        %v607 = vrcp.pop %v606
        %v608 = vmul.f32 %v603, %v607
        %609 = vrot.lane.b32.xlu0 %v561, 96
        %v610 = vpop.permute.xlu0 %609
        %v613 = vsel %vm570, %v608, 0
        %615 = vmatpush.msra.mxu0 0.0
        %616 = vmatpush.msra.mxu0 0.0
        %617 = vmatpush.msra.mxu0 0.0
        %618 = vmatpush.msra.mxu0 0.0
        %619 = vmatpush.msra.mxu0 0.0
        %620 = vmatpush.msra.mxu0 0.0
        %621 = vmatpush.msra.mxu0 0.0
        %622 = vmatpush.msra.mxu0 0.0
        %623 = vmatpush.msra.mxu0 0.0
        %624 = vmatpush.msra.mxu0 0.0
        %625 = vmatpush.msra.mxu0 0.0
        %626 = vmatpush.msra.mxu0 0.0
        %627 = vmatpush.msra.mxu0 0.0
        %628 = vmatpush.msra.mxu0 0.0
        %629 = vmatpush.msra.mxu0 0.0
        %630 = vmatpush.msra.mxu0 %v610
        %631 = vmatmul.f32.gmra.mxu0 %v613
        %v632 = vpop.f32.mrf.mxu0
        %v633 = vadd.f32 0.0, %v632
        %634 = vdwg.mxu0
        %635 = vst.msk [vmem:[#allocation3] sm:$0xff] %vm570, %v633
        %636 = vrot.lane.b32.xlu0 %v560, 120
        %v637 = vpop.permute.xlu0 %636
        %638 = vrot.lane.b32.xlu0 %v561, 120
        %v639 = vpop.permute.xlu0 %638
        %v640 = vsel %vm570, %v637, 0
        %v642 = vsel %vm570, %v639, 0
        %644 = vmatpush.xpose.msra.mxu0 0.0
        %645 = vmatpush.xpose.msra.mxu0 0.0
        %646 = vmatpush.xpose.msra.mxu0 0.0
        %647 = vmatpush.xpose.msra.mxu0 0.0
        %648 = vmatpush.xpose.msra.mxu0 0.0
        %649 = vmatpush.xpose.msra.mxu0 0.0
        %650 = vmatpush.xpose.msra.mxu0 0.0
        %651 = vmatpush.xpose.msra.mxu0 0.0
        %652 = vmatpush.xpose.msra.mxu0 0.0
        %653 = vmatpush.xpose.msra.mxu0 0.0
        %654 = vmatpush.xpose.msra.mxu0 0.0
        %655 = vmatpush.xpose.msra.mxu0 0.0
        %656 = vmatpush.xpose.msra.mxu0 0.0
        %657 = vmatpush.xpose.msra.mxu0 0.0
        %658 = vmatpush.xpose.msra.mxu0 0.0
        %659 = vmatpush.xpose.msra.mxu0 %v642
        %660 = vmatmul.f32.gmra.mxu0 %v640
        %v661 = vpop.f32.mrf.mxu0
        %v662 = vadd.f32 0.0, %v661
        %663 = vdwg.mxu0
        %v664 = vsel %vm569, -10000.0, %v662
        %v665 = vsel %vm570, %v664, -inf
        %666 = vmax.xlane.f32.xlu0 %v665
        %v667 = vpop.xlane.xlu0 %666
        %v668 = vsub.f32 %v664, %v667
        %v669 = vmul.f32 %v668, 1.442695
        %v670 = vpow.pop %v669
        %v671 = vsel %vm570, %v670, 0.0
        %672 = vadd.xlane.f32.xlu0 %v671
        %v673 = vpop.xlane.xlu0 %672
        %v674 = vrcp.pop %v673
        %v675 = vmul.f32 %v670, %v674
        %676 = vrot.lane.b32.xlu0 %v561, 88
        %v677 = vpop.permute.xlu0 %676
        %v680 = vsel %vm570, %v675, 0
        %682 = vmatpush.msra.mxu0 0.0
        %683 = vmatpush.msra.mxu0 0.0
        %684 = vmatpush.msra.mxu0 0.0
        %685 = vmatpush.msra.mxu0 0.0
        %686 = vmatpush.msra.mxu0 0.0
        %687 = vmatpush.msra.mxu0 0.0
        %688 = vmatpush.msra.mxu0 0.0
        %689 = vmatpush.msra.mxu0 0.0
        %690 = vmatpush.msra.mxu0 0.0
        %691 = vmatpush.msra.mxu0 0.0
        %692 = vmatpush.msra.mxu0 0.0
        %693 = vmatpush.msra.mxu0 0.0
        %694 = vmatpush.msra.mxu0 0.0
        %695 = vmatpush.msra.mxu0 0.0
        %696 = vmatpush.msra.mxu0 0.0
        %697 = vmatpush.msra.mxu0 %v677
        %698 = vmatmul.f32.gmra.mxu0 %v680
        %v699 = vpop.f32.mrf.mxu0
        %v700 = vadd.f32 0.0, %v699
        %701 = vdwg.mxu0
        %703 = vrot.lane.b32.xlu0 %v700, 8
        %v704 = vpop.permute.xlu0 %703
        %vm706 = vcmask 130112
        %707 = vst.msk [vmem:[#allocation3] sm:$0xff] %vm706, %v704
        %708 = vrot.lane.b32.xlu0 %v560, 112
        %v709 = vpop.permute.xlu0 %708
        %710 = vrot.lane.b32.xlu0 %v561, 112
        %v711 = vpop.permute.xlu0 %710
        %v712 = vsel %vm570, %v709, 0
        %v714 = vsel %vm570, %v711, 0
        %716 = vmatpush.xpose.msra.mxu0 0.0
        %717 = vmatpush.xpose.msra.mxu0 0.0
        %718 = vmatpush.xpose.msra.mxu0 0.0
        %719 = vmatpush.xpose.msra.mxu0 0.0
        %720 = vmatpush.xpose.msra.mxu0 0.0
        %721 = vmatpush.xpose.msra.mxu0 0.0
        %722 = vmatpush.xpose.msra.mxu0 0.0
        %723 = vmatpush.xpose.msra.mxu0 0.0
        %724 = vmatpush.xpose.msra.mxu0 0.0
        %725 = vmatpush.xpose.msra.mxu0 0.0
        %726 = vmatpush.xpose.msra.mxu0 0.0
        %727 = vmatpush.xpose.msra.mxu0 0.0
        %728 = vmatpush.xpose.msra.mxu0 0.0
        %729 = vmatpush.xpose.msra.mxu0 0.0
        %730 = vmatpush.xpose.msra.mxu0 0.0
        %731 = vmatpush.xpose.msra.mxu0 %v714
        %732 = vmatmul.f32.gmra.mxu0 %v712
        %v733 = vpop.f32.mrf.mxu0
        %v734 = vadd.f32 0.0, %v733
        %735 = vdwg.mxu0
        %v736 = vsel %vm569, -10000.0, %v734
        %v737 = vsel %vm570, %v736, -inf
        %738 = vmax.xlane.f32.xlu0 %v737
        %v739 = vpop.xlane.xlu0 %738
        %v740 = vsub.f32 %v736, %v739
        %v741 = vmul.f32 %v740, 1.442695
        %v742 = vpow.pop %v741
        %v743 = vsel %vm570, %v742, 0.0
        %744 = vadd.xlane.f32.xlu0 %v743
        %v745 = vpop.xlane.xlu0 %744
        %v746 = vrcp.pop %v745
        %v747 = vmul.f32 %v742, %v746
        %748 = vrot.lane.b32.xlu0 %v561, 80
        %v749 = vpop.permute.xlu0 %748
        %v752 = vsel %vm570, %v747, 0
        %754 = vmatpush.msra.mxu0 0.0
        %755 = vmatpush.msra.mxu0 0.0
        %756 = vmatpush.msra.mxu0 0.0
        %757 = vmatpush.msra.mxu0 0.0
        %758 = vmatpush.msra.mxu0 0.0
        %759 = vmatpush.msra.mxu0 0.0
        %760 = vmatpush.msra.mxu0 0.0
        %761 = vmatpush.msra.mxu0 0.0
        %762 = vmatpush.msra.mxu0 0.0
        %763 = vmatpush.msra.mxu0 0.0
        %764 = vmatpush.msra.mxu0 0.0
        %765 = vmatpush.msra.mxu0 0.0
        %766 = vmatpush.msra.mxu0 0.0
        %767 = vmatpush.msra.mxu0 0.0
        %768 = vmatpush.msra.mxu0 0.0
        %769 = vmatpush.msra.mxu0 %v749
        %770 = vmatmul.f32.gmra.mxu0 %v752
        %v771 = vpop.f32.mrf.mxu0
        %v772 = vadd.f32 0.0, %v771
        %773 = vdwg.mxu0
        %775 = vrot.lane.b32.xlu0 %v772, 16
        %v776 = vpop.permute.xlu0 %775
        %vm778 = vcmask 195712
        %779 = vst.msk [vmem:[#allocation3] sm:$0xff] %vm778, %v776
        %780 = vrot.lane.b32.xlu0 %v560, 104
        %v781 = vpop.permute.xlu0 %780
        %782 = vrot.lane.b32.xlu0 %v561, 104
        %v783 = vpop.permute.xlu0 %782
        %v784 = vsel %vm570, %v781, 0
        %v786 = vsel %vm570, %v783, 0
        %788 = vmatpush.xpose.msra.mxu0 0.0
        %789 = vmatpush.xpose.msra.mxu0 0.0
        %790 = vmatpush.xpose.msra.mxu0 0.0
        %791 = vmatpush.xpose.msra.mxu0 0.0
        %792 = vmatpush.xpose.msra.mxu0 0.0
        %793 = vmatpush.xpose.msra.mxu0 0.0
        %794 = vmatpush.xpose.msra.mxu0 0.0
        %795 = vmatpush.xpose.msra.mxu0 0.0
        %796 = vmatpush.xpose.msra.mxu0 0.0
        %797 = vmatpush.xpose.msra.mxu0 0.0
        %798 = vmatpush.xpose.msra.mxu0 0.0
        %799 = vmatpush.xpose.msra.mxu0 0.0
        %800 = vmatpush.xpose.msra.mxu0 0.0
        %801 = vmatpush.xpose.msra.mxu0 0.0
        %802 = vmatpush.xpose.msra.mxu0 0.0
        %803 = vmatpush.xpose.msra.mxu0 %v786
        %804 = vmatmul.f32.gmra.mxu0 %v784
        %v805 = vpop.f32.mrf.mxu0
        %v806 = vadd.f32 0.0, %v805
        %807 = vdwg.mxu0
        %v808 = vsel %vm569, -10000.0, %v806
        %v809 = vsel %vm570, %v808, -inf
        %810 = vmax.xlane.f32.xlu0 %v809
        %v811 = vpop.xlane.xlu0 %810
        %v812 = vsub.f32 %v808, %v811
        %v813 = vmul.f32 %v812, 1.442695
        %v814 = vpow.pop %v813
        %v815 = vsel %vm570, %v814, 0.0
        %816 = vadd.xlane.f32.xlu0 %v815
        %v817 = vpop.xlane.xlu0 %816
        %v818 = vrcp.pop %v817
        %v819 = vmul.f32 %v814, %v818
        %820 = vrot.lane.b32.xlu0 %v561, 72
        %v821 = vpop.permute.xlu0 %820
        %v824 = vsel %vm570, %v819, 0
        %826 = vmatpush.msra.mxu0 0.0
        %827 = vmatpush.msra.mxu0 0.0
        %828 = vmatpush.msra.mxu0 0.0
        %829 = vmatpush.msra.mxu0 0.0
        %830 = vmatpush.msra.mxu0 0.0
        %831 = vmatpush.msra.mxu0 0.0
        %832 = vmatpush.msra.mxu0 0.0
        %833 = vmatpush.msra.mxu0 0.0
        %834 = vmatpush.msra.mxu0 0.0
        %835 = vmatpush.msra.mxu0 0.0
        %836 = vmatpush.msra.mxu0 0.0
        %837 = vmatpush.msra.mxu0 0.0
        %838 = vmatpush.msra.mxu0 0.0
        %839 = vmatpush.msra.mxu0 0.0
        %840 = vmatpush.msra.mxu0 0.0
        %841 = vmatpush.msra.mxu0 %v821
        %842 = vmatmul.f32.gmra.mxu0 %v824
        %v843 = vpop.f32.mrf.mxu0
        %v844 = vadd.f32 0.0, %v843
        %845 = vdwg.mxu0
        %847 = vrot.lane.b32.xlu0 %v844, 24
        %v848 = vpop.permute.xlu0 %847
        %vm850 = vcmask 261312
        %851 = vst.msk [vmem:[#allocation3] sm:$0xff] %vm850, %v848
        %v852 = vld [vmem:[#allocation3] sm:$0xff]
        %v853 = vld [vmem:[#allocation11] sm:$0xff]
        %v854 = vld [vmem:[#allocation11 + $0x8] sm:$0xff]
        %v855 = vld [vmem:[#allocation11 + $0x10] sm:$0xff]
        %v856 = vld [vmem:[#allocation11 + $0x18] sm:$0xff]
        %v857 = vld [vmem:[%s7] sm:$0x1]
        %v859 = vperm.slane %v857, 0
        %v862 = vsel %vm536, %v852, 0
        %864 = vmatpush.msra.mxu0 0.0
        %865 = vmatpush.msra.mxu0 0.0
        %866 = vmatpush.msra.mxu0 0.0
        %867 = vmatpush.msra.mxu0 0.0
        %868 = vmatpush.msra.mxu0 0.0
        %869 = vmatpush.msra.mxu0 0.0
        %870 = vmatpush.msra.mxu0 0.0
        %871 = vmatpush.msra.mxu0 0.0
        %872 = vmatpush.msra.mxu0 0.0
        %873 = vmatpush.msra.mxu0 0.0
        %874 = vmatpush.msra.mxu0 0.0
        %875 = vmatpush.msra.mxu0 0.0
        %876 = vmatpush.msra.mxu0 %v856
        %877 = vmatpush.msra.mxu0 %v855
        %878 = vmatpush.msra.mxu0 %v854
        %879 = vmatpush.msra.mxu0 %v853
        %880 = vmatmul.f32.gmra.mxu0 %v862
        %v881 = vpop.f32.mrf.mxu0
        %v882 = vadd.f32 %v859, %v881
        %883 = vdwg.mxu0
        %v884 = vadd.f32 %v488, %v882
        %v885 = vsel %vm536, %v884, 0.0
        %886 = vadd.xlane.f32.xlu0 %v885
        %v887 = vpop.xlane.xlu0 %886
        %v888 = vrcp.pop 32.0
        %v889 = vmul.f32 32.0, %v888
        %v890 = vsub.f32 1.0, %v889
        %v891 = vmul.f32 %v888, %v890
        %v892 = vadd.f32 %v888, %v891
        %vm893 = vweird.f32 %v888
        %v894 = vsel %vm893, %v888, %v892
        %v895 = vmul.f32 %v887, %v894
        %v896 = vsub.f32 %v884, %v895
        %v897 = vmul.f32 %v896, %v896
        %v898 = vsel %vm536, %v897, 0.0
        %899 = vadd.xlane.f32.xlu0 %v898
        %v900 = vpop.xlane.xlu0 %899
        %v901 = vmul.f32 %v900, %v894
        %v902 = vadd.f32 %v901, 1e-05
        %v903 = vrsqrt.pop %v902
        %v904 = vmul.f32 %v903, %v902
        %v905 = vmul.f32 %v904, %v903
        %v906 = vmul.f32 0.5, %v905
        %v907 = vsub.f32 1.5, %v906
        %v908 = vmul.f32 %v903, %v907
        %vm909 = vweird.f32 %v902
        %vm910 = vweird.f32 %v903
        %vm911 = vmor %vm909, %vm910
        %v912 = vsel %vm911, %v903, %v908
        %v913 = vmul.f32 %v896, %v912
        %v914 = vld [vmem:[%s8] sm:$0x1]
        %v916 = vperm.slane %v914, 0
        %v918 = vmul.f32 %v913, %v916
        %v919 = vld [vmem:[%s9] sm:$0x1]
        %v921 = vperm.slane %v919, 0
        %v923 = vadd.f32 %v918, %v921
        %924 = vst.msk [vmem:[%s487] sm:$0xff] %vm536, %v923
        %p925 = scmp.lt.s32.totalorder %s32, 1
        %s926 = scalar_select %p925, %s32, 1
        %p927 = scmp.lt.s32.totalorder %s33, 0
        %s928 = scalar_select %p927, %s33, 0
        %s929 = sadd.s32 %s928, %s926
        %s930 = smul.addr %s929, 8
        %s931 = scalar_lea.vmem %s10, %s930
        // Predicated region
        $region85: #{decoder_layer.3} parent=59 // pred_check
          %p932 = pneg %p282
        $region86: #{decoder_layer.3} parent=59 // pred_check_branch
          %934 = sbr.rel (%p932) target = $region88
        $region87: #{decoder_layer.3} parent=59 // pred_region
          _
        $region88: #{decoder_layer.3} parent=59 // pred_fallthru
          _
      $region60: #{decoder_layer.3} parent=5 // pred_fallthru
        _
      %p935 = scmp.le.s32.totalorder 2, %s23
      // Predicated region
      $region89: #{decoder_layer.3} parent=5 // pred_check
        %p936 = pneg %p935
      $region90: #{decoder_layer.3} parent=5 // pred_check_branch
        %938 = sbr.rel (%p936) target = $region92
      $region91: #{decoder_layer.3} parent=5 // pred_region
        %s939 = ssub.s32 %s23, 2
        // Predicated region
        $region93: #{decoder_layer.3} parent=91 // pred_check
          %p940 = pneg %p288
        $region94: #{decoder_layer.3} parent=91 // pred_check_branch
          %942 = sbr.rel (%p940) target = $region96
        $region95: #{decoder_layer.3} parent=91 // pred_region
          %p943 = scmp.lt.s32.totalorder %s34, 1
          %s944 = scalar_select %p943, %s34, 1
          %p945 = scmp.lt.s32.totalorder %s35, 0
          %s946 = scalar_select %p945, %s35, 0
          %s947 = sadd.s32 %s946, %s944
          %s948 = smul.addr %s947, 8
          %s949 = scalar_lea.vmem %s10, %s948
        $region96: #{decoder_layer.3} parent=91 // pred_fallthru
          _
      $region92: #{decoder_layer.3} parent=5 // pred_fallthru
        _
    $region6: #{decoder_layer.3} parent=1 // loop_footer
      %s27 = sadd.s32 1, %s23
    $region7: #{decoder_layer.3} parent=1 // loop_footer_branch
      %22 = sbr.rel target = $region3
    $region8: #{decoder_layer.3} parent=1 // loop_exit
      _
    %950 = vsyncpa [#allocation5], 1
    %s951 = scalar_lea.sflag [#allocation5], 1
    %952 = vsyncpa %s951, 1
    %953 = vsyncpa [#allocation7], 1
    %s954 = scalar_lea.sflag [#allocation7], 1
    %955 = vsyncpa %s954, 1
    %956 = vsyncpa [#allocation10], 1

// kernel: decoder_layer.4
$region0: #{decoder_layer.4}
  #allocation0 [shape = 'u32[]', space=smem, size = 0x4, offset = 0x4, fixed_abs, tag = 'smem constant byte address 0x4 - core index']
  #allocation1 [shape = 'u32[72,128]{1,0:T(1,128)}', space=vmem, size = 0x9000, scoped, tag = 'internal scratch']
  #allocation2 [shape = 'f32[8,64]{1,0:T(8,128)}', space=vmem, size = 0x1000, scoped, tag = 'scratch operand']
  #allocation3 [shape = 'f32[8,32]{1,0:T(8,128)}', space=vmem, size = 0x1000, scoped, tag = 'scratch operand']
  %s0 = inlined_call_operand.vmem [shape: f32[2,8,32], index: 0, kind: input, shape index: {}]
  %s1 = inlined_call_operand.hbm [shape: f32[2,8,32], index: 1, kind: input, shape index: {}]
  %s2 = inlined_call_operand.hbm [shape: f32[32,32], index: 2, kind: input, shape index: {}]
  %s3 = inlined_call_operand.vmem [shape: f32[1,32], index: 3, kind: input, shape index: {}]
  %s4 = inlined_call_operand.hbm [shape: f32[32,64], index: 4, kind: input, shape index: {}]
  %s5 = inlined_call_operand.vmem [shape: f32[1,64], index: 5, kind: input, shape index: {}]
  %s6 = inlined_call_operand.hbm [shape: f32[32,32], index: 6, kind: input, shape index: {}]
  %s7 = inlined_call_operand.vmem [shape: f32[1,32], index: 7, kind: input, shape index: {}]
  %s8 = inlined_call_operand.vmem [shape: f32[1,32], index: 8, kind: input, shape index: {}]
  %s9 = inlined_call_operand.vmem [shape: f32[1,32], index: 9, kind: input, shape index: {}]
  %s10 = inlined_call_operand.vmem [shape: f32[2,8,32], index: 10, kind: output, shape index: {}]
  %s11 = sld [smem:[#allocation0]]
  $region93: #{decoder_layer.4} parent=0
    _
  %s13 = ssub.s32 1, %s11
  %s14 = scalar_select 0, %s13, %s11
  $region1: #{decoder_layer.4} parent=0
    #allocation4 [shape = 'u8[8192]{0}', space=vmem, size = 0x2000, scoped, tag = 'input window, operand 1']
    #allocation5 [shape = 's32[2]{0}', space=sflag, size = 0x8, scoped, tag = 'scoped memory for decoder_layer.4']
    #allocation6 [shape = 'u8[16384]{0}', space=vmem, size = 0x4000, scoped, tag = 'input window, operand 2, single buffered']
    #allocation7 [shape = 's32[1]{0}', space=sflag, size = 0x4, scoped, tag = 'scoped memory for decoder_layer.4']
    #allocation8 [shape = 'u8[16384]{0}', space=vmem, size = 0x4000, scoped, tag = 'input window, operand 4, single buffered']
    #allocation9 [shape = 'u8[16384]{0}', space=vmem, size = 0x4000, scoped, tag = 'input window, operand 6, single buffered']
    #allocation10 [shape = 's32[1]{0}', space=sflag, size = 0x4, scoped, tag = 'scoped memory for decoder_layer.4']
    %15 = vsyncpa [#allocation5], 0
    %s16 = scalar_lea.sflag [#allocation5], 1
    %17 = vsyncpa %s16, 0
    %18 = vsyncpa [#allocation7], 0
    %19 = vsyncpa [#allocation10], 0
    loop: start=0, step=1, limit=4
    $region2: #{decoder_layer.4} parent=1 // loop_pre_header
      _
    $region3: #{decoder_layer.4} parent=1 // loop_header
      %s21 = sphi 0, %s25
      %p22 = scmp.ge.s32.totalorder %s21, 4
      %s28 = sphi 0, %s40
      %s29 = sphi 0, %s36
      %s30 = sphi 0, %s28
      %s31 = sphi 0, %s29
      %s32 = sphi 0, %s30
      %s33 = sphi 0, %s31
      %s45 = sphi 0, %s47
      %s48 = sphi 0, %s45
      %s49 = sphi 0, %s48
      %s65 = sphi 0, %s49
      %s71 = sphi 0, %s73
      %s74 = sphi 0, %s71
      %s75 = sphi 0, %s74
      %s91 = sphi 0, %s75
      %s95 = sphi 0, %s95
      %s97 = sphi 0, %s95
      %s98 = sphi 0, %s97
      %s112 = sphi 0, %s98
      %s116 = sphi 0, %s116
      %s118 = sphi 0, %s116
      %s119 = sphi 0, %s118
      %s133 = sphi 0, %s119
      %s137 = sphi 0, %s137
      %s139 = sphi 0, %s137
      %s140 = sphi 0, %s139
      %s154 = sphi 0, %s140
      %s158 = sphi 0, %s158
      %s160 = sphi 0, %s158
      %s161 = sphi 0, %s160
      %s175 = sphi 0, %s161
      %s179 = sphi 0, %s179
      %s181 = sphi 0, %s179
      %s182 = sphi 0, %s181
      %s196 = sphi 0, %s182
      %s200 = sphi 0, %s200
      %s202 = sphi 0, %s200
      %s203 = sphi 0, %s202
      %s217 = sphi 0, %s203
      %s221 = sphi 0, %s221
      %s223 = sphi 0, %s221
      %s224 = sphi 0, %s223
      %s238 = sphi 0, %s224
      %s242 = sphi 0, %s242
      %s244 = sphi 0, %s242
      %s245 = sphi 0, %s244
      %s259 = sphi 0, %s245
      %s267 = sphi 0, %s269
      %s270 = sphi 0, %s267
      %s271 = sphi 0, %s270
      %s287 = sphi 0, %s271
    $region4: #{decoder_layer.4} parent=1 // loop_header_branch
      %24 = sbr.rel (%p22) target = $region8
    $region5: #{decoder_layer.4} parent=1 // loop_body
      %s26 = ssub.s32 %s21, 1
      %s27 = ssub.s32 %s21, 2
      %s34 = sadd.s32 1, %s29
      %p35 = scmp.ge.s32.totalorder %s34, 1
      %s36 = scalar_select %p35, 0, %s34
      %s37 = sadd.s32 1, %s28
      %s38 = scalar_select %p35, %s37, %s28
      %p39 = scmp.ge.s32.totalorder %s38, 2
      %s40 = scalar_select %p39, 0, %s38
      %s41 = ssub.s32 %s28, %s40
      %s42 = ssub.s32 %s29, %s36
      %s43 = sor.u32 %s41, %s42
      %p44 = scmp.eq.s32.totalorder %s43, 0
      %s46 = sadd.s32 %s45, 1
      %s47 = scalar_select %p44, %s45, %s46
      %p50 = pneg %p44
      %p51 = scmp.eq.s32.totalorder %s21, 1
      %p52 = por %p50, %p51
      %p53 = scmp.ne.s32.totalorder %s45, %s48
      %p54 = scmp.eq.s32.totalorder %s21, 0
      %p55 = por %p53, %p54
      %p56 = scmp.ne.s32.totalorder %s45, %s48
      %p57 = scmp.eq.s32.totalorder %s26, 1
      %p58 = por %p56, %p57
      %p59 = scmp.ne.s32.totalorder %s48, %s49
      %p60 = scmp.eq.s32.totalorder %s26, 0
      %p61 = por %p59, %p60
      %p62 = scmp.ne.s32.totalorder %s48, %s49
      %p63 = scmp.eq.s32.totalorder %s27, 1
      %p64 = por %p62, %p63
      %p66 = scmp.ne.s32.totalorder %s49, %s65
      %p67 = scmp.eq.s32.totalorder %s27, 0
      %p68 = por %p66, %p67
      %s69 = ssub.s32 %s28, %s40
      %p70 = scmp.eq.s32.totalorder %s69, 0
      %s72 = sadd.s32 %s71, 1
      %s73 = scalar_select %p70, %s71, %s72
      %p76 = pneg %p70
      %p77 = scmp.eq.s32.totalorder %s21, 1
      %p78 = por %p76, %p77
      %p79 = scmp.ne.s32.totalorder %s71, %s74
      %p80 = scmp.eq.s32.totalorder %s21, 0
      %p81 = por %p79, %p80
      %p82 = scmp.ne.s32.totalorder %s71, %s74
      %p83 = scmp.eq.s32.totalorder %s26, 1
      %p84 = por %p82, %p83
      %p85 = scmp.ne.s32.totalorder %s74, %s75
      %p86 = scmp.eq.s32.totalorder %s26, 0
      %p87 = por %p85, %p86
      %p88 = scmp.ne.s32.totalorder %s74, %s75
      %p89 = scmp.eq.s32.totalorder %s27, 1
      %p90 = por %p88, %p89
      %p92 = scmp.ne.s32.totalorder %s75, %s91
      %p93 = scmp.eq.s32.totalorder %s27, 0
      %p94 = por %p92, %p93
      %s96 = sadd.s32 %s95, 1
      %p99 = scmp.eq.s32.totalorder %s21, 1
      %p100 = scmp.ne.s32.totalorder %s95, %s97
      %p101 = scmp.eq.s32.totalorder %s21, 0
      %p102 = por %p100, %p101
      %p103 = scmp.ne.s32.totalorder %s95, %s97
      %p104 = scmp.eq.s32.totalorder %s26, 1
      %p105 = por %p103, %p104
      %p106 = scmp.ne.s32.totalorder %s97, %s98
      %p107 = scmp.eq.s32.totalorder %s26, 0
      %p108 = por %p106, %p107
      %p109 = scmp.ne.s32.totalorder %s97, %s98
      %p110 = scmp.eq.s32.totalorder %s27, 1
      %p111 = por %p109, %p110
      %p113 = scmp.ne.s32.totalorder %s98, %s112
      %p114 = scmp.eq.s32.totalorder %s27, 0
      %p115 = por %p113, %p114
      %s117 = sadd.s32 %s116, 1
      %p120 = scmp.eq.s32.totalorder %s21, 1
      %p121 = scmp.ne.s32.totalorder %s116, %s118
      %p122 = scmp.eq.s32.totalorder %s21, 0
      %p123 = por %p121, %p122
      %p124 = scmp.ne.s32.totalorder %s116, %s118
      %p125 = scmp.eq.s32.totalorder %s26, 1
      %p126 = por %p124, %p125
      %p127 = scmp.ne.s32.totalorder %s118, %s119
      %p128 = scmp.eq.s32.totalorder %s26, 0
      %p129 = por %p127, %p128
      %p130 = scmp.ne.s32.totalorder %s118, %s119
      %p131 = scmp.eq.s32.totalorder %s27, 1
      %p132 = por %p130, %p131
      %p134 = scmp.ne.s32.totalorder %s119, %s133
      %p135 = scmp.eq.s32.totalorder %s27, 0
      %p136 = por %p134, %p135
      %s138 = sadd.s32 %s137, 1
      %p141 = scmp.eq.s32.totalorder %s21, 1
      %p142 = scmp.ne.s32.totalorder %s137, %s139
      %p143 = scmp.eq.s32.totalorder %s21, 0
      %p144 = por %p142, %p143
      %p145 = scmp.ne.s32.totalorder %s137, %s139
      %p146 = scmp.eq.s32.totalorder %s26, 1
      %p147 = por %p145, %p146
      %p148 = scmp.ne.s32.totalorder %s139, %s140
      %p149 = scmp.eq.s32.totalorder %s26, 0
      %p150 = por %p148, %p149
      %p151 = scmp.ne.s32.totalorder %s139, %s140
      %p152 = scmp.eq.s32.totalorder %s27, 1
      %p153 = por %p151, %p152
      %p155 = scmp.ne.s32.totalorder %s140, %s154
      %p156 = scmp.eq.s32.totalorder %s27, 0
      %p157 = por %p155, %p156
      %s159 = sadd.s32 %s158, 1
      %p162 = scmp.eq.s32.totalorder %s21, 1
      %p163 = scmp.ne.s32.totalorder %s158, %s160
      %p164 = scmp.eq.s32.totalorder %s21, 0
      %p165 = por %p163, %p164
      %p166 = scmp.ne.s32.totalorder %s158, %s160
      %p167 = scmp.eq.s32.totalorder %s26, 1
      %p168 = por %p166, %p167
      %p169 = scmp.ne.s32.totalorder %s160, %s161
      %p170 = scmp.eq.s32.totalorder %s26, 0
      %p171 = por %p169, %p170
      %p172 = scmp.ne.s32.totalorder %s160, %s161
      %p173 = scmp.eq.s32.totalorder %s27, 1
      %p174 = por %p172, %p173
      %p176 = scmp.ne.s32.totalorder %s161, %s175
      %p177 = scmp.eq.s32.totalorder %s27, 0
      %p178 = por %p176, %p177
      %s180 = sadd.s32 %s179, 1
      %p183 = scmp.eq.s32.totalorder %s21, 1
      %p184 = scmp.ne.s32.totalorder %s179, %s181
      %p185 = scmp.eq.s32.totalorder %s21, 0
      %p186 = por %p184, %p185
      %p187 = scmp.ne.s32.totalorder %s179, %s181
      %p188 = scmp.eq.s32.totalorder %s26, 1
      %p189 = por %p187, %p188
      %p190 = scmp.ne.s32.totalorder %s181, %s182
      %p191 = scmp.eq.s32.totalorder %s26, 0
      %p192 = por %p190, %p191
      %p193 = scmp.ne.s32.totalorder %s181, %s182
      %p194 = scmp.eq.s32.totalorder %s27, 1
      %p195 = por %p193, %p194
      %p197 = scmp.ne.s32.totalorder %s182, %s196
      %p198 = scmp.eq.s32.totalorder %s27, 0
      %p199 = por %p197, %p198
      %s201 = sadd.s32 %s200, 1
      %p204 = scmp.eq.s32.totalorder %s21, 1
      %p205 = scmp.ne.s32.totalorder %s200, %s202
      %p206 = scmp.eq.s32.totalorder %s21, 0
      %p207 = por %p205, %p206
      %p208 = scmp.ne.s32.totalorder %s200, %s202
      %p209 = scmp.eq.s32.totalorder %s26, 1
      %p210 = por %p208, %p209
      %p211 = scmp.ne.s32.totalorder %s202, %s203
      %p212 = scmp.eq.s32.totalorder %s26, 0
      %p213 = por %p211, %p212
      %p214 = scmp.ne.s32.totalorder %s202, %s203
      %p215 = scmp.eq.s32.totalorder %s27, 1
      %p216 = por %p214, %p215
      %p218 = scmp.ne.s32.totalorder %s203, %s217
      %p219 = scmp.eq.s32.totalorder %s27, 0
      %p220 = por %p218, %p219
      %s222 = sadd.s32 %s221, 1
      %p225 = scmp.eq.s32.totalorder %s21, 1
      %p226 = scmp.ne.s32.totalorder %s221, %s223
      %p227 = scmp.eq.s32.totalorder %s21, 0
      %p228 = por %p226, %p227
      %p229 = scmp.ne.s32.totalorder %s221, %s223
      %p230 = scmp.eq.s32.totalorder %s26, 1
      %p231 = por %p229, %p230
      %p232 = scmp.ne.s32.totalorder %s223, %s224
      %p233 = scmp.eq.s32.totalorder %s26, 0
      %p234 = por %p232, %p233
      %p235 = scmp.ne.s32.totalorder %s223, %s224
      %p236 = scmp.eq.s32.totalorder %s27, 1
      %p237 = por %p235, %p236
      %p239 = scmp.ne.s32.totalorder %s224, %s238
      %p240 = scmp.eq.s32.totalorder %s27, 0
      %p241 = por %p239, %p240
      %s243 = sadd.s32 %s242, 1
      %p246 = scmp.eq.s32.totalorder %s21, 1
      %p247 = scmp.ne.s32.totalorder %s242, %s244
      %p248 = scmp.eq.s32.totalorder %s21, 0
      %p249 = por %p247, %p248
      %p250 = scmp.ne.s32.totalorder %s242, %s244
      %p251 = scmp.eq.s32.totalorder %s26, 1
      %p252 = por %p250, %p251
      %p253 = scmp.ne.s32.totalorder %s244, %s245
      %p254 = scmp.eq.s32.totalorder %s26, 0
      %p255 = por %p253, %p254
      %p256 = scmp.ne.s32.totalorder %s244, %s245
      %p257 = scmp.eq.s32.totalorder %s27, 1
      %p258 = por %p256, %p257
      %p260 = scmp.ne.s32.totalorder %s245, %s259
      %p261 = scmp.eq.s32.totalorder %s27, 0
      %p262 = por %p260, %p261
      %s263 = ssub.s32 %s28, %s40
      %s264 = ssub.s32 %s29, %s36
      %s265 = sor.u32 %s263, %s264
      %p266 = scmp.eq.s32.totalorder %s265, 0
      %s268 = sadd.s32 %s267, 1
      %s269 = scalar_select %p266, %s267, %s268
      %p272 = pneg %p266
      %p273 = scmp.eq.s32.totalorder %s21, 1
      %p274 = por %p272, %p273
      %p275 = scmp.ne.s32.totalorder %s267, %s270
      %p276 = scmp.eq.s32.totalorder %s21, 0
      %p277 = por %p275, %p276
      %p278 = scmp.ne.s32.totalorder %s267, %s270
      %p279 = scmp.eq.s32.totalorder %s26, 1
      %p280 = por %p278, %p279
      %p281 = scmp.ne.s32.totalorder %s270, %s271
      %p282 = scmp.eq.s32.totalorder %s26, 0
      %p283 = por %p281, %p282
      %p284 = scmp.ne.s32.totalorder %s270, %s271
      %p285 = scmp.eq.s32.totalorder %s27, 1
      %p286 = por %p284, %p285
      %p288 = scmp.ne.s32.totalorder %s271, %s287
      %p289 = scmp.eq.s32.totalorder %s27, 0
      %p290 = por %p288, %p289
      %p291 = scmp.le.s32.totalorder 1, %s21
      %p292 = scmp.lt.s32.totalorder %s21, 3
      %p293 = pnand %p291, %p292
      %p294 = pneg %p293
      // Predicated region
      $region9: #{decoder_layer.4} parent=5 // pred_check
        _
      $region10: #{decoder_layer.4} parent=5 // pred_check_branch
        %296 = sbr.rel (%p293) target = $region12
      $region11: #{decoder_layer.4} parent=5 // pred_region
        %s297 = ssub.s32 %s21, 1
        // Predicated region
        $region13: #{decoder_layer.4} parent=11 // pred_check
          %p298 = pneg %p108
        $region14: #{decoder_layer.4} parent=11 // pred_check_branch
          %300 = sbr.rel (%p298) target = $region16
        $region15: #{decoder_layer.4} parent=11 // pred_region
          %302 = vsyncadd [#allocation7], 0
          %s303 = sshll.u32 %s2, 4
          %s304 = int_to_ptr.hbm [resolvable:$true] %s303
          %s305 = sshll.u32 [#allocation6], 4
          %s306 = int_to_ptr.vmem [resolvable:$true] %s305
          %311 = dma.hbm_to_vmem [thread:$0]  %s304, 512, %s306, [#allocation7], 128, 128, 8
        $region16: #{decoder_layer.4} parent=11 // pred_fallthru
          _
        // Predicated region
        $region17: #{decoder_layer.4} parent=11 // pred_check
          %p312 = pneg %p129
        $region18: #{decoder_layer.4} parent=11 // pred_check_branch
          %314 = sbr.rel (%p312) target = $region20
        $region19: #{decoder_layer.4} parent=11 // pred_region
          _
        $region20: #{decoder_layer.4} parent=11 // pred_fallthru
          _
        // Predicated region
        $region21: #{decoder_layer.4} parent=11 // pred_check
          %p315 = pneg %p150
        $region22: #{decoder_layer.4} parent=11 // pred_check_branch
          %317 = sbr.rel (%p315) target = $region24
        $region23: #{decoder_layer.4} parent=11 // pred_region
          %319 = vsyncadd [#allocation7], 0
          %s320 = sshll.u32 %s4, 4
          %s321 = int_to_ptr.hbm [resolvable:$true] %s320
          %s322 = sshll.u32 [#allocation8], 4
          %s323 = int_to_ptr.vmem [resolvable:$true] %s322
          %328 = dma.hbm_to_vmem [thread:$0]  %s321, 512, %s323, [#allocation7], 128, 128, 8
        $region24: #{decoder_layer.4} parent=11 // pred_fallthru
          _
        // Predicated region
        $region25: #{decoder_layer.4} parent=11 // pred_check
          %p329 = pneg %p171
        $region26: #{decoder_layer.4} parent=11 // pred_check_branch
          %331 = sbr.rel (%p329) target = $region28
        $region27: #{decoder_layer.4} parent=11 // pred_region
          _
        $region28: #{decoder_layer.4} parent=11 // pred_fallthru
          _
        // Predicated region
        $region29: #{decoder_layer.4} parent=11 // pred_check
          %p332 = pneg %p192
        $region30: #{decoder_layer.4} parent=11 // pred_check_branch
          %334 = sbr.rel (%p332) target = $region32
        $region31: #{decoder_layer.4} parent=11 // pred_region
          %336 = vsyncadd [#allocation10], 0
          %s337 = sshll.u32 %s6, 4
          %s338 = int_to_ptr.hbm [resolvable:$true] %s337
          %s339 = sshll.u32 [#allocation9], 4
          %s340 = int_to_ptr.vmem [resolvable:$true] %s339
          %345 = dma.hbm_to_vmem [thread:$0]  %s338, 512, %s340, [#allocation10], 128, 128, 8
        $region32: #{decoder_layer.4} parent=11 // pred_fallthru
          _
        // Predicated region
        $region33: #{decoder_layer.4} parent=11 // pred_check
          %p346 = pneg %p213
        $region34: #{decoder_layer.4} parent=11 // pred_check_branch
          %348 = sbr.rel (%p346) target = $region36
        $region35: #{decoder_layer.4} parent=11 // pred_region
          _
        $region36: #{decoder_layer.4} parent=11 // pred_fallthru
          _
        // Predicated region
        $region37: #{decoder_layer.4} parent=11 // pred_check
          %p349 = pneg %p234
        $region38: #{decoder_layer.4} parent=11 // pred_check_branch
          %351 = sbr.rel (%p349) target = $region40
        $region39: #{decoder_layer.4} parent=11 // pred_region
          _
        $region40: #{decoder_layer.4} parent=11 // pred_fallthru
          _
        // Predicated region
        $region41: #{decoder_layer.4} parent=11 // pred_check
          %p352 = pneg %p255
        $region42: #{decoder_layer.4} parent=11 // pred_check_branch
          %354 = sbr.rel (%p352) target = $region44
        $region43: #{decoder_layer.4} parent=11 // pred_region
          _
        $region44: #{decoder_layer.4} parent=11 // pred_fallthru
          _
      $region12: #{decoder_layer.4} parent=5 // pred_fallthru
        _
      %p355 = scmp.lt.s32.totalorder %s21, 2
      // Predicated region
      $region45: #{decoder_layer.4} parent=5 // pred_check
        %p356 = pneg %p355
      $region46: #{decoder_layer.4} parent=5 // pred_check_branch
        %358 = sbr.rel (%p356) target = $region48
      $region47: #{decoder_layer.4} parent=5 // pred_region
        // Predicated region
        $region49: #{decoder_layer.4} parent=47 // pred_check
          %p359 = pneg %p55
        $region50: #{decoder_layer.4} parent=47 // pred_check_branch
          %361 = sbr.rel (%p359) target = $region52
        $region51: #{decoder_layer.4} parent=47 // pred_region
          %p362 = scmp.lt.s32.totalorder %s28, 1
          %s363 = scalar_select %p362, %s28, 1
          %p364 = scmp.lt.s32.totalorder %s29, 0
          %s365 = scalar_select %p364, %s29, 0
          %s366 = sadd.s32 %s365, %s363
          %s367 = smul.addr %s366, 8
          %s368 = scalar_lea.vmem %s0, %s367
        $region52: #{decoder_layer.4} parent=47 // pred_fallthru
          _
        // Predicated region
        $region53: #{decoder_layer.4} parent=47 // pred_check
          %p369 = pneg %p81
        $region54: #{decoder_layer.4} parent=47 // pred_check_branch
          %371 = sbr.rel (%p369) target = $region56
        $region55: #{decoder_layer.4} parent=47 // pred_region
          %s372 = sand.u32 %s71, 1
          %s373 = scalar_lea.sflag [#allocation5], %s372
          %s374 = sand.u32 %s71, 1
          %s375 = smul.addr %s374, 8
          %s376 = scalar_lea.vmem [#allocation4], %s375
          %378 = vsyncadd %s373, 0
          %s379 = smul.addr %s28, 8
          %s380 = scalar_lea.hbm %s1, %s379
          %s382 = sshll.u32 %s380, 4
          %s383 = int_to_ptr.hbm [resolvable:$true] %s382
          %s384 = sshll.u32 %s376, 4
          %s385 = int_to_ptr.vmem [resolvable:$true] %s384
          %387 = dma.hbm_to_vmem [thread:$0]  %s383, 128, %s385, %s373
        $region56: #{decoder_layer.4} parent=47 // pred_fallthru
          _
      $region48: #{decoder_layer.4} parent=5 // pred_fallthru
        _
      %p388 = scmp.le.s32.totalorder 1, %s21
      %p389 = scmp.lt.s32.totalorder %s21, 3
      %p390 = pnand %p388, %p389
      %p391 = pneg %p390
      // Predicated region
      $region57: #{decoder_layer.4} parent=5 // pred_check
        _
      $region58: #{decoder_layer.4} parent=5 // pred_check_branch
        %393 = sbr.rel (%p390) target = $region60
      $region59: #{decoder_layer.4} parent=5 // pred_region
        %s394 = ssub.s32 %s21, 1
        %s395 = sand.u32 %s74, 1
        %s396 = scalar_lea.sflag [#allocation5], %s395
        %s397 = sand.u32 %s74, 1
        %s398 = smul.addr %s397, 8
        %s399 = scalar_lea.vmem [#allocation4], %s398
        // Predicated region
        $region61: #{decoder_layer.4} parent=59 // pred_check
          %p400 = pneg %p87
        $region62: #{decoder_layer.4} parent=59 // pred_check_branch
          %402 = sbr.rel (%p400) target = $region64
        $region63: #{decoder_layer.4} parent=59 // pred_region
          %404 = dma.done %s396, 128
        $region64: #{decoder_layer.4} parent=59 // pred_fallthru
          _
        // Predicated region
        $region65: #{decoder_layer.4} parent=59 // pred_check
          %p405 = pneg %p108
        $region66: #{decoder_layer.4} parent=59 // pred_check_branch
          %407 = sbr.rel (%p405) target = $region68
        $region67: #{decoder_layer.4} parent=59 // pred_region
          %409 = dma.done [#allocation7], 512
        $region68: #{decoder_layer.4} parent=59 // pred_fallthru
          _
        // Predicated region
        $region69: #{decoder_layer.4} parent=59 // pred_check
          %p410 = pneg %p150
        $region70: #{decoder_layer.4} parent=59 // pred_check_branch
          %412 = sbr.rel (%p410) target = $region72
        $region71: #{decoder_layer.4} parent=59 // pred_region
          %414 = dma.done [#allocation7], 512
        $region72: #{decoder_layer.4} parent=59 // pred_fallthru
          _
        // Predicated region
        $region73: #{decoder_layer.4} parent=59 // pred_check
          %p415 = pneg %p192
        $region74: #{decoder_layer.4} parent=59 // pred_check_branch
          %417 = sbr.rel (%p415) target = $region76
        $region75: #{decoder_layer.4} parent=59 // pred_region
          %419 = dma.done [#allocation10], 512
        $region76: #{decoder_layer.4} parent=59 // pred_fallthru
          _
        %p420 = scmp.lt.s32.totalorder %s30, 1
        %s421 = scalar_select %p420, %s30, 1
        %p422 = scmp.lt.s32.totalorder %s31, 0
        %s423 = scalar_select %p422, %s31, 0
        %s424 = sadd.s32 %s423, %s421
        %s425 = smul.addr %s424, 8
        %s426 = scalar_lea.vmem %s0, %s425
        %p427 = pneg %p61
        %p428 = pneg %p58
        %s429 = sand.u32 %s74, 1
        %s430 = scalar_lea.sflag [#allocation5], %s429
        %s431 = sand.u32 %s74, 1
        %s432 = smul.addr %s431, 8
        %s433 = scalar_lea.vmem [#allocation4], %s432
        %p434 = pneg %p87
        %p435 = pneg %p84
        %p436 = pneg %p108
        %p437 = pneg %p105
        %p438 = pneg %p129
        %p439 = pneg %p126
        %p440 = pneg %p150
        %p441 = pneg %p147
        %p442 = pneg %p171
        %p443 = pneg %p168
        %p444 = pneg %p192
        %p445 = pneg %p189
        %p446 = pneg %p213
        %p447 = pneg %p210
        %p448 = pneg %p234
        %p449 = pneg %p231
        %p450 = pneg %p255
        %p451 = pneg %p252
        %p452 = pneg %p283
        %p453 = pneg %p280
        %p454 = scmp.lt.s32.totalorder %s30, 1
        %s455 = scalar_select %p454, %s30, 1
        %p456 = scmp.lt.s32.totalorder %s31, 0
        %s457 = scalar_select %p456, %s31, 0
        %s458 = sadd.s32 %s457, %s455
        %s459 = smul.addr %s458, 8
        %s460 = scalar_lea.vmem %s10, %s459
        %p461 = scmp.lt.s32.totalorder %s30, 1
        %s462 = scalar_select %p461, %s30, 1
        %p463 = scmp.lt.s32.totalorder %s31, 0
        %s464 = scalar_select %p463, %s31, 0
        %s465 = sadd.s32 %s464, %s462
        %s466 = smul.addr %s465, 8
        %s467 = scalar_lea.vmem %s0, %s466
        %p468 = scmp.lt.s32.totalorder %s30, 1
        %s469 = scalar_select %p468, %s30, 1
        %p470 = scmp.lt.s32.totalorder %s31, 0
        %s471 = scalar_select %p470, %s31, 0
        %s472 = sadd.s32 %s471, %s469
        %s473 = smul.addr %s472, 8
        %s474 = scalar_lea.vmem %s10, %s473
        %v475 = vld [vmem:[%s467] sm:$0xff]
        %p476 = scmp.eq.s32.totalorder %s31, 0
        // Predicated region
        $region77: #{decoder_layer.4} parent=59 // pred_check
          %p477 = pneg %p476
        $region78: #{decoder_layer.4} parent=59 // pred_check_branch
          %479 = sbr.rel (%p477) target = $region80
        $region79: #{decoder_layer.4} parent=59 // pred_region
          %v480 = vld [vmem:[%s399] sm:$0xff]
          %v481 = vld [vmem:[#allocation8] sm:$0xff]
          %v482 = vld [vmem:[#allocation8 + $0x8] sm:$0xff]
          %v483 = vld [vmem:[#allocation8 + $0x10] sm:$0xff]
          %v484 = vld [vmem:[#allocation8 + $0x18] sm:$0xff]
          %v485 = vld [vmem:[%s5] sm:$0x1]
          %v487 = vperm.slane %v485, 0
          %vm489 = vcmask 261120
          %v491 = vsel %vm489, %v480, 0
          %493 = vmatpush.msra.mxu0 0.0
          %494 = vmatpush.msra.mxu0 0.0
          %495 = vmatpush.msra.mxu0 0.0
          %496 = vmatpush.msra.mxu0 0.0
          %497 = vmatpush.msra.mxu0 0.0
          %498 = vmatpush.msra.mxu0 0.0
          %499 = vmatpush.msra.mxu0 0.0
          %500 = vmatpush.msra.mxu0 0.0
          %501 = vmatpush.msra.mxu0 0.0
          %502 = vmatpush.msra.mxu0 0.0
          %503 = vmatpush.msra.mxu0 0.0
          %504 = vmatpush.msra.mxu0 0.0
          %505 = vmatpush.msra.mxu0 %v484
          %506 = vmatpush.msra.mxu0 %v483
          %507 = vmatpush.msra.mxu0 %v482
          %508 = vmatpush.msra.mxu0 %v481
          %509 = vmatmul.f32.gmra.mxu0 %v491
          %v510 = vpop.f32.mrf.mxu0
          %v511 = vadd.f32 %v487, %v510
          %512 = vdwg.mxu0
          %vm513 = vcmask 523264
          %514 = vst.msk [vmem:[#allocation2] sm:$0xff] %vm513, %v511
        $region80: #{decoder_layer.4} parent=59 // pred_fallthru
          _
        %v515 = vld [vmem:[#allocation6] sm:$0xff]
        %v516 = vld [vmem:[#allocation6 + $0x8] sm:$0xff]
        %v517 = vld [vmem:[#allocation6 + $0x10] sm:$0xff]
        %v518 = vld [vmem:[#allocation6 + $0x18] sm:$0xff]
        %v519 = vld [vmem:[%s3] sm:$0x1]
        %v521 = vperm.slane %v519, 0
        %vm523 = vcmask 261120
        %v525 = vsel %vm523, %v475, 0
        %527 = vmatpush.msra.mxu0 0.0
        %528 = vmatpush.msra.mxu0 0.0
        %529 = vmatpush.msra.mxu0 0.0
        %530 = vmatpush.msra.mxu0 0.0
        %531 = vmatpush.msra.mxu0 0.0
        %532 = vmatpush.msra.mxu0 0.0
        %533 = vmatpush.msra.mxu0 0.0
        %534 = vmatpush.msra.mxu0 0.0
        %535 = vmatpush.msra.mxu0 0.0
        %536 = vmatpush.msra.mxu0 0.0
        %537 = vmatpush.msra.mxu0 0.0
        %538 = vmatpush.msra.mxu0 0.0
        %539 = vmatpush.msra.mxu0 %v518
        %540 = vmatpush.msra.mxu0 %v517
        %541 = vmatpush.msra.mxu0 %v516
        %542 = vmatpush.msra.mxu0 %v515
        %543 = vmatmul.f32.gmra.mxu0 %v525
        %v544 = vpop.f32.mrf.mxu0
        %v545 = vadd.f32 %v521, %v544
        %546 = vdwg.mxu0
        %v547 = vmul.f32 %v545, 0.35355338
        %v548 = vld [vmem:[#allocation2] sm:$0xff]
        %vm549 = vcmask 64512
        %v551 = vsel %vm549, %v547, 0
        %v554 = vsel %vm549, %v548, 0
        %556 = vmatpush.xpose.msra.mxu0 0.0
        %557 = vmatpush.xpose.msra.mxu0 0.0
        %558 = vmatpush.xpose.msra.mxu0 0.0
        %559 = vmatpush.xpose.msra.mxu0 0.0
        %560 = vmatpush.xpose.msra.mxu0 0.0
        %561 = vmatpush.xpose.msra.mxu0 0.0
        %562 = vmatpush.xpose.msra.mxu0 0.0
        %563 = vmatpush.xpose.msra.mxu0 0.0
        %564 = vmatpush.xpose.msra.mxu0 0.0
        %565 = vmatpush.xpose.msra.mxu0 0.0
        %566 = vmatpush.xpose.msra.mxu0 0.0
        %567 = vmatpush.xpose.msra.mxu0 0.0
        %568 = vmatpush.xpose.msra.mxu0 0.0
        %569 = vmatpush.xpose.msra.mxu0 0.0
        %570 = vmatpush.xpose.msra.mxu0 0.0
        %571 = vmatpush.xpose.msra.mxu0 %v554
        %572 = vmatmul.f32.gmra.mxu0 %v551
        %v573 = vpop.f32.mrf.mxu0
        %v574 = vadd.f32 0.0, %v573
        %575 = vdwg.mxu0
        %v576 = vsel %vm549, %v574, -inf
        %577 = vmax.xlane.f32.xlu0 %v576
        %v578 = vpop.xlane.xlu0 %577
        %v579 = vsub.f32 %v574, %v578
        %v580 = vmul.f32 %v579, 1.442695
        %v581 = vpow.pop %v580
        %v582 = vsel %vm549, %v581, 0.0
        %583 = vadd.xlane.f32.xlu0 %v582
        %v584 = vpop.xlane.xlu0 %583
        %v585 = vrcp.pop %v584
        %v586 = vmul.f32 %v581, %v585
        %587 = vrot.lane.b32.xlu0 %v548, 96
        %v588 = vpop.permute.xlu0 %587
        %v591 = vsel %vm549, %v586, 0
        %593 = vmatpush.msra.mxu0 0.0
        %594 = vmatpush.msra.mxu0 0.0
        %595 = vmatpush.msra.mxu0 0.0
        %596 = vmatpush.msra.mxu0 0.0
        %597 = vmatpush.msra.mxu0 0.0
        %598 = vmatpush.msra.mxu0 0.0
        %599 = vmatpush.msra.mxu0 0.0
        %600 = vmatpush.msra.mxu0 0.0
        %601 = vmatpush.msra.mxu0 0.0
        %602 = vmatpush.msra.mxu0 0.0
        %603 = vmatpush.msra.mxu0 0.0
        %604 = vmatpush.msra.mxu0 0.0
        %605 = vmatpush.msra.mxu0 0.0
        %606 = vmatpush.msra.mxu0 0.0
        %607 = vmatpush.msra.mxu0 0.0
        %608 = vmatpush.msra.mxu0 %v588
        %609 = vmatmul.f32.gmra.mxu0 %v591
        %v610 = vpop.f32.mrf.mxu0
        %v611 = vadd.f32 0.0, %v610
        %612 = vdwg.mxu0
        %613 = vst.msk [vmem:[#allocation3] sm:$0xff] %vm549, %v611
        %614 = vrot.lane.b32.xlu0 %v547, 120
        %v615 = vpop.permute.xlu0 %614
        %616 = vrot.lane.b32.xlu0 %v548, 120
        %v617 = vpop.permute.xlu0 %616
        %v618 = vsel %vm549, %v615, 0
        %v620 = vsel %vm549, %v617, 0
        %622 = vmatpush.xpose.msra.mxu0 0.0
        %623 = vmatpush.xpose.msra.mxu0 0.0
        %624 = vmatpush.xpose.msra.mxu0 0.0
        %625 = vmatpush.xpose.msra.mxu0 0.0
        %626 = vmatpush.xpose.msra.mxu0 0.0
        %627 = vmatpush.xpose.msra.mxu0 0.0
        %628 = vmatpush.xpose.msra.mxu0 0.0
        %629 = vmatpush.xpose.msra.mxu0 0.0
        %630 = vmatpush.xpose.msra.mxu0 0.0
        %631 = vmatpush.xpose.msra.mxu0 0.0
        %632 = vmatpush.xpose.msra.mxu0 0.0
        %633 = vmatpush.xpose.msra.mxu0 0.0
        %634 = vmatpush.xpose.msra.mxu0 0.0
        %635 = vmatpush.xpose.msra.mxu0 0.0
        %636 = vmatpush.xpose.msra.mxu0 0.0
        %637 = vmatpush.xpose.msra.mxu0 %v620
        %638 = vmatmul.f32.gmra.mxu0 %v618
        %v639 = vpop.f32.mrf.mxu0
        %v640 = vadd.f32 0.0, %v639
        %641 = vdwg.mxu0
        %v642 = vsel %vm549, %v640, -inf
        %643 = vmax.xlane.f32.xlu0 %v642
        %v644 = vpop.xlane.xlu0 %643
        %v645 = vsub.f32 %v640, %v644
        %v646 = vmul.f32 %v645, 1.442695
        %v647 = vpow.pop %v646
        %v648 = vsel %vm549, %v647, 0.0
        %649 = vadd.xlane.f32.xlu0 %v648
        %v650 = vpop.xlane.xlu0 %649
        %v651 = vrcp.pop %v650
        %v652 = vmul.f32 %v647, %v651
        %653 = vrot.lane.b32.xlu0 %v548, 88
        %v654 = vpop.permute.xlu0 %653
        %v657 = vsel %vm549, %v652, 0
        %659 = vmatpush.msra.mxu0 0.0
        %660 = vmatpush.msra.mxu0 0.0
        %661 = vmatpush.msra.mxu0 0.0
        %662 = vmatpush.msra.mxu0 0.0
        %663 = vmatpush.msra.mxu0 0.0
        %664 = vmatpush.msra.mxu0 0.0
        %665 = vmatpush.msra.mxu0 0.0
        %666 = vmatpush.msra.mxu0 0.0
        %667 = vmatpush.msra.mxu0 0.0
        %668 = vmatpush.msra.mxu0 0.0
        %669 = vmatpush.msra.mxu0 0.0
        %670 = vmatpush.msra.mxu0 0.0
        %671 = vmatpush.msra.mxu0 0.0
        %672 = vmatpush.msra.mxu0 0.0
        %673 = vmatpush.msra.mxu0 0.0
        %674 = vmatpush.msra.mxu0 %v654
        %675 = vmatmul.f32.gmra.mxu0 %v657
        %v676 = vpop.f32.mrf.mxu0
        %v677 = vadd.f32 0.0, %v676
        %678 = vdwg.mxu0
        %680 = vrot.lane.b32.xlu0 %v677, 8
        %v681 = vpop.permute.xlu0 %680
        %vm683 = vcmask 130112
        %684 = vst.msk [vmem:[#allocation3] sm:$0xff] %vm683, %v681
        %685 = vrot.lane.b32.xlu0 %v547, 112
        %v686 = vpop.permute.xlu0 %685
        %687 = vrot.lane.b32.xlu0 %v548, 112
        %v688 = vpop.permute.xlu0 %687
        %v689 = vsel %vm549, %v686, 0
        %v691 = vsel %vm549, %v688, 0
        %693 = vmatpush.xpose.msra.mxu0 0.0
        %694 = vmatpush.xpose.msra.mxu0 0.0
        %695 = vmatpush.xpose.msra.mxu0 0.0
        %696 = vmatpush.xpose.msra.mxu0 0.0
        %697 = vmatpush.xpose.msra.mxu0 0.0
        %698 = vmatpush.xpose.msra.mxu0 0.0
        %699 = vmatpush.xpose.msra.mxu0 0.0
        %700 = vmatpush.xpose.msra.mxu0 0.0
        %701 = vmatpush.xpose.msra.mxu0 0.0
        %702 = vmatpush.xpose.msra.mxu0 0.0
        %703 = vmatpush.xpose.msra.mxu0 0.0
        %704 = vmatpush.xpose.msra.mxu0 0.0
        %705 = vmatpush.xpose.msra.mxu0 0.0
        %706 = vmatpush.xpose.msra.mxu0 0.0
        %707 = vmatpush.xpose.msra.mxu0 0.0
        %708 = vmatpush.xpose.msra.mxu0 %v691
        %709 = vmatmul.f32.gmra.mxu0 %v689
        %v710 = vpop.f32.mrf.mxu0
        %v711 = vadd.f32 0.0, %v710
        %712 = vdwg.mxu0
        %v713 = vsel %vm549, %v711, -inf
        %714 = vmax.xlane.f32.xlu0 %v713
        %v715 = vpop.xlane.xlu0 %714
        %v716 = vsub.f32 %v711, %v715
        %v717 = vmul.f32 %v716, 1.442695
        %v718 = vpow.pop %v717
        %v719 = vsel %vm549, %v718, 0.0
        %720 = vadd.xlane.f32.xlu0 %v719
        %v721 = vpop.xlane.xlu0 %720
        %v722 = vrcp.pop %v721
        %v723 = vmul.f32 %v718, %v722
        %724 = vrot.lane.b32.xlu0 %v548, 80
        %v725 = vpop.permute.xlu0 %724
        %v728 = vsel %vm549, %v723, 0
        %730 = vmatpush.msra.mxu0 0.0
        %731 = vmatpush.msra.mxu0 0.0
        %732 = vmatpush.msra.mxu0 0.0
        %733 = vmatpush.msra.mxu0 0.0
        %734 = vmatpush.msra.mxu0 0.0
        %735 = vmatpush.msra.mxu0 0.0
        %736 = vmatpush.msra.mxu0 0.0
        %737 = vmatpush.msra.mxu0 0.0
        %738 = vmatpush.msra.mxu0 0.0
        %739 = vmatpush.msra.mxu0 0.0
        %740 = vmatpush.msra.mxu0 0.0
        %741 = vmatpush.msra.mxu0 0.0
        %742 = vmatpush.msra.mxu0 0.0
        %743 = vmatpush.msra.mxu0 0.0
        %744 = vmatpush.msra.mxu0 0.0
        %745 = vmatpush.msra.mxu0 %v725
        %746 = vmatmul.f32.gmra.mxu0 %v728
        %v747 = vpop.f32.mrf.mxu0
        %v748 = vadd.f32 0.0, %v747
        %749 = vdwg.mxu0
        %751 = vrot.lane.b32.xlu0 %v748, 16
        %v752 = vpop.permute.xlu0 %751
        %vm754 = vcmask 195712
        %755 = vst.msk [vmem:[#allocation3] sm:$0xff] %vm754, %v752
        %756 = vrot.lane.b32.xlu0 %v547, 104
        %v757 = vpop.permute.xlu0 %756
        %758 = vrot.lane.b32.xlu0 %v548, 104
        %v759 = vpop.permute.xlu0 %758
        %v760 = vsel %vm549, %v757, 0
        %v762 = vsel %vm549, %v759, 0
        %764 = vmatpush.xpose.msra.mxu0 0.0
        %765 = vmatpush.xpose.msra.mxu0 0.0
        %766 = vmatpush.xpose.msra.mxu0 0.0
        %767 = vmatpush.xpose.msra.mxu0 0.0
        %768 = vmatpush.xpose.msra.mxu0 0.0
        %769 = vmatpush.xpose.msra.mxu0 0.0
        %770 = vmatpush.xpose.msra.mxu0 0.0
        %771 = vmatpush.xpose.msra.mxu0 0.0
        %772 = vmatpush.xpose.msra.mxu0 0.0
        %773 = vmatpush.xpose.msra.mxu0 0.0
        %774 = vmatpush.xpose.msra.mxu0 0.0
        %775 = vmatpush.xpose.msra.mxu0 0.0
        %776 = vmatpush.xpose.msra.mxu0 0.0
        %777 = vmatpush.xpose.msra.mxu0 0.0
        %778 = vmatpush.xpose.msra.mxu0 0.0
        %779 = vmatpush.xpose.msra.mxu0 %v762
        %780 = vmatmul.f32.gmra.mxu0 %v760
        %v781 = vpop.f32.mrf.mxu0
        %v782 = vadd.f32 0.0, %v781
        %783 = vdwg.mxu0
        %v784 = vsel %vm549, %v782, -inf
        %785 = vmax.xlane.f32.xlu0 %v784
        %v786 = vpop.xlane.xlu0 %785
        %v787 = vsub.f32 %v782, %v786
        %v788 = vmul.f32 %v787, 1.442695
        %v789 = vpow.pop %v788
        %v790 = vsel %vm549, %v789, 0.0
        %791 = vadd.xlane.f32.xlu0 %v790
        %v792 = vpop.xlane.xlu0 %791
        %v793 = vrcp.pop %v792
        %v794 = vmul.f32 %v789, %v793
        %795 = vrot.lane.b32.xlu0 %v548, 72
        %v796 = vpop.permute.xlu0 %795
        %v799 = vsel %vm549, %v794, 0
        %801 = vmatpush.msra.mxu0 0.0
        %802 = vmatpush.msra.mxu0 0.0
        %803 = vmatpush.msra.mxu0 0.0
        %804 = vmatpush.msra.mxu0 0.0
        %805 = vmatpush.msra.mxu0 0.0
        %806 = vmatpush.msra.mxu0 0.0
        %807 = vmatpush.msra.mxu0 0.0
        %808 = vmatpush.msra.mxu0 0.0
        %809 = vmatpush.msra.mxu0 0.0
        %810 = vmatpush.msra.mxu0 0.0
        %811 = vmatpush.msra.mxu0 0.0
        %812 = vmatpush.msra.mxu0 0.0
        %813 = vmatpush.msra.mxu0 0.0
        %814 = vmatpush.msra.mxu0 0.0
        %815 = vmatpush.msra.mxu0 0.0
        %816 = vmatpush.msra.mxu0 %v796
        %817 = vmatmul.f32.gmra.mxu0 %v799
        %v818 = vpop.f32.mrf.mxu0
        %v819 = vadd.f32 0.0, %v818
        %820 = vdwg.mxu0
        %822 = vrot.lane.b32.xlu0 %v819, 24
        %v823 = vpop.permute.xlu0 %822
        %vm825 = vcmask 261312
        %826 = vst.msk [vmem:[#allocation3] sm:$0xff] %vm825, %v823
        %v827 = vld [vmem:[#allocation3] sm:$0xff]
        %v828 = vld [vmem:[#allocation9] sm:$0xff]
        %v829 = vld [vmem:[#allocation9 + $0x8] sm:$0xff]
        %v830 = vld [vmem:[#allocation9 + $0x10] sm:$0xff]
        %v831 = vld [vmem:[#allocation9 + $0x18] sm:$0xff]
        %v832 = vld [vmem:[%s7] sm:$0x1]
        %v834 = vperm.slane %v832, 0
        %v837 = vsel %vm523, %v827, 0
        %839 = vmatpush.msra.mxu0 0.0
        %840 = vmatpush.msra.mxu0 0.0
        %841 = vmatpush.msra.mxu0 0.0
        %842 = vmatpush.msra.mxu0 0.0
        %843 = vmatpush.msra.mxu0 0.0
        %844 = vmatpush.msra.mxu0 0.0
        %845 = vmatpush.msra.mxu0 0.0
        %846 = vmatpush.msra.mxu0 0.0
        %847 = vmatpush.msra.mxu0 0.0
        %848 = vmatpush.msra.mxu0 0.0
        %849 = vmatpush.msra.mxu0 0.0
        %850 = vmatpush.msra.mxu0 0.0
        %851 = vmatpush.msra.mxu0 %v831
        %852 = vmatpush.msra.mxu0 %v830
        %853 = vmatpush.msra.mxu0 %v829
        %854 = vmatpush.msra.mxu0 %v828
        %855 = vmatmul.f32.gmra.mxu0 %v837
        %v856 = vpop.f32.mrf.mxu0
        %v857 = vadd.f32 %v834, %v856
        %858 = vdwg.mxu0
        %v859 = vadd.f32 %v475, %v857
        %v860 = vsel %vm523, %v859, 0.0
        %861 = vadd.xlane.f32.xlu0 %v860
        %v862 = vpop.xlane.xlu0 %861
        %v863 = vrcp.pop 32.0
        %v864 = vmul.f32 32.0, %v863
        %v865 = vsub.f32 1.0, %v864
        %v866 = vmul.f32 %v863, %v865
        %v867 = vadd.f32 %v863, %v866
        %vm868 = vweird.f32 %v863
        %v869 = vsel %vm868, %v863, %v867
        %v870 = vmul.f32 %v862, %v869
        %v871 = vsub.f32 %v859, %v870
        %v872 = vmul.f32 %v871, %v871
        %v873 = vsel %vm523, %v872, 0.0
        %874 = vadd.xlane.f32.xlu0 %v873
        %v875 = vpop.xlane.xlu0 %874
        %v876 = vmul.f32 %v875, %v869
        %v877 = vadd.f32 %v876, 1e-05
        %v878 = vrsqrt.pop %v877
        %v879 = vmul.f32 %v878, %v877
        %v880 = vmul.f32 %v879, %v878
        %v881 = vmul.f32 0.5, %v880
        %v882 = vsub.f32 1.5, %v881
        %v883 = vmul.f32 %v878, %v882
        %vm884 = vweird.f32 %v877
        %vm885 = vweird.f32 %v878
        %vm886 = vmor %vm884, %vm885
        %v887 = vsel %vm886, %v878, %v883
        %v888 = vmul.f32 %v871, %v887
        %v889 = vld [vmem:[%s8] sm:$0x1]
        %v891 = vperm.slane %v889, 0
        %v893 = vmul.f32 %v888, %v891
        %v894 = vld [vmem:[%s9] sm:$0x1]
        %v896 = vperm.slane %v894, 0
        %v898 = vadd.f32 %v893, %v896
        %899 = vst.msk [vmem:[%s474] sm:$0xff] %vm523, %v898
        %p900 = scmp.lt.s32.totalorder %s30, 1
        %s901 = scalar_select %p900, %s30, 1
        %p902 = scmp.lt.s32.totalorder %s31, 0
        %s903 = scalar_select %p902, %s31, 0
        %s904 = sadd.s32 %s903, %s901
        %s905 = smul.addr %s904, 8
        %s906 = scalar_lea.vmem %s10, %s905
        // Predicated region
        $region81: #{decoder_layer.4} parent=59 // pred_check
          %p907 = pneg %p280
        $region82: #{decoder_layer.4} parent=59 // pred_check_branch
          %909 = sbr.rel (%p907) target = $region84
        $region83: #{decoder_layer.4} parent=59 // pred_region
          _
        $region84: #{decoder_layer.4} parent=59 // pred_fallthru
          _
      $region60: #{decoder_layer.4} parent=5 // pred_fallthru
        _
      %p910 = scmp.le.s32.totalorder 2, %s21
      // Predicated region
      $region85: #{decoder_layer.4} parent=5 // pred_check
        %p911 = pneg %p910
      $region86: #{decoder_layer.4} parent=5 // pred_check_branch
        %913 = sbr.rel (%p911) target = $region88
      $region87: #{decoder_layer.4} parent=5 // pred_region
        %s914 = ssub.s32 %s21, 2
        // Predicated region
        $region89: #{decoder_layer.4} parent=87 // pred_check
          %p915 = pneg %p286
        $region90: #{decoder_layer.4} parent=87 // pred_check_branch
          %917 = sbr.rel (%p915) target = $region92
        $region91: #{decoder_layer.4} parent=87 // pred_region
          %p918 = scmp.lt.s32.totalorder %s32, 1
          %s919 = scalar_select %p918, %s32, 1
          %p920 = scmp.lt.s32.totalorder %s33, 0
          %s921 = scalar_select %p920, %s33, 0
          %s922 = sadd.s32 %s921, %s919
          %s923 = smul.addr %s922, 8
          %s924 = scalar_lea.vmem %s10, %s923
        $region92: #{decoder_layer.4} parent=87 // pred_fallthru
          _
      $region88: #{decoder_layer.4} parent=5 // pred_fallthru
        _
    $region6: #{decoder_layer.4} parent=1 // loop_footer
      %s25 = sadd.s32 1, %s21
    $region7: #{decoder_layer.4} parent=1 // loop_footer_branch
      %20 = sbr.rel target = $region3
    $region8: #{decoder_layer.4} parent=1 // loop_exit
      _
    %925 = vsyncpa [#allocation5], 1
    %s926 = scalar_lea.sflag [#allocation5], 1
    %927 = vsyncpa %s926, 1
    %928 = vsyncpa [#allocation7], 1
    %929 = vsyncpa [#allocation10], 1

</llo_original>
